<compile_context>
chip_gen: v6e
topology: v6e:2x2x1
jax: 0.10.0
libtpu: 0.0.40
codegen_flags: <defaults>
</compile_context>

<pallas_src>
import jax
import jax.numpy as jnp
from jax.experimental import pallas as pl
from jax.experimental.pallas import tpu as pltpu

EPS = 1e-5
_P = 1  # Conv1d padding used by all three cnn blocks in GRUModel


# ----------------------------------------------------------------------------
# Fused forward kernel (one grid step == one batch element)
# ----------------------------------------------------------------------------
def _fused_forward_kernel(
    x_ref,
    s1_ref, t1_ref, w1_ref, b1_ref,        # cnn1: BN scale/shift, conv W (K,Cin,Cout), bias
    s2_ref, t2_ref, w2_ref, b2_ref,        # cnn2
    s3_ref, t3_ref, w3_ref, b3_ref,        # cnn3
    wt_ref, bt_ref, wp_ref, bp_ref,        # non-local: theta, phi
    wg_ref, bg_ref, ww_ref, bw_ref,        # non-local: g, W
    wih_ref, whh_ref, bih_ref, bhh_ref,    # GRU
    wf1_ref, bf1_ref, wf2_ref, bf2_ref, sc_ref,   # fc1, fc2 (lane-padded), self.weight
    o_ref,                                 # (1, 1, O_pad) lane-dense output
    xpad_scr, y_scr,                       # VMEM scratch (shared by the 3 conv blocks)
):
    def conv_block(x, scale_ref, shift_ref, w_ref, b_ref, K, dil):
        # BatchNorm1d (eval stats, prefolded) + dilated Conv1d + ReLU + MaxPool1d(2,2)
        L, C_in = x.shape
        C_out = w_ref.shape[-1]
        L_conv = L + 2 * _P - dil * (K - 1)
        L_pool = L_conv // 2

        x_bn = x * scale_ref[...] + shift_ref[...]

        # Zero only the 2*P pad rows; payload goes in with one contiguous store.
        zrow = jnp.zeros((_P, xpad_scr.shape[1]), jnp.float32)
        xpad_scr[0:_P, :] = zrow
        xpad_scr[_P + L:_P + L + _P, :] = zrow
        xpad_scr[_P:_P + L, 0:C_in] = x_bn

        # Dilated conv as K shifted matmuls accumulated in registers (MXU);
        # bias broadcast is applied once, outside the tap loop.
        acc = jnp.dot(xpad_scr[0:L_conv, 0:C_in], w_ref[0],
                      preferred_element_type=jnp.float32)
        for k in range(1, K):
            acc = acc + jnp.dot(xpad_scr[k * dil:k * dil + L_conv, 0:C_in], w_ref[k],
                                preferred_element_type=jnp.float32)
        y = jnp.maximum(acc + b_ref[...], 0.0)

        # MaxPool1d(kernel=2, stride=2) via stride-2 sublane reads of a VMEM scratch.
        # TODO(synk): a pure value-space reshape((L//2,2,C)).max(1) would avoid this
        # scratch, but is kept out for Mosaic reshape-lowering robustness here.
        y_scr[0:L_conv, :] = y
        return jnp.maximum(y_scr[pl.ds(0, L_pool, 2), :],
                           y_scr[pl.ds(1, L_pool, 2), :])

    x = x_ref[0]                                                    # (L, C_in)
    h = conv_block(x, s1_ref, t1_ref, w1_ref, b1_ref, K=7, dil=1)
    h = conv_block(h, s2_ref, t2_ref, w2_ref, b2_ref, K=7, dil=2)
    h = conv_block(h, s3_ref, t3_ref, w3_ref, b3_ref, K=3, dil=4)   # (T, H)

    # --- NonLocalBlock1D (embedded Gaussian: theta/phi/g 1x1 convs -> softmax ---
    # --- attention -> W 1x1 conv -> residual; class not defined in the source) ---
    theta = jnp.dot(h, wt_ref[...], preferred_element_type=jnp.float32) + bt_ref[...]
    phi = jnp.dot(h, wp_ref[...], preferred_element_type=jnp.float32) + bp_ref[...]
    g = jnp.dot(h, wg_ref[...], preferred_element_type=jnp.float32) + bg_ref[...]
    f = jax.lax.dot_general(theta, phi, (((1,), (1,)), ((), ())),
                            preferred_element_type=jnp.float32)     # (T, T)
    f = f - jnp.max(f, axis=-1, keepdims=True)
    e = jnp.exp(f)
    attn = e * pl.reciprocal(jnp.sum(e, axis=-1, keepdims=True), approx=True)
    y_att = jnp.dot(attn, g, preferred_element_type=jnp.float32)    # (T, Ci)
    z = jnp.dot(y_att, ww_ref[...], preferred_element_type=jnp.float32) + bw_ref[...] + h

    # --- GRU (batch_first, h0 = 0), final hidden state only. -------------------
    # Input projection hoisted out of the recurrence: one (T,H)@(H,3H) matmul.
    T, H = z.shape
    gi_all = jnp.dot(z, wih_ref[...], preferred_element_type=jnp.float32) + bih_ref[...]
    bhh = bhh_ref[...]                                              # hoisted broadcast
    hstate = jnp.zeros((1, H), jnp.float32)
    for t in range(T):                                              # static unroll, T small
        gi = gi_all[t:t + 1, :]                                     # (1, 3H)
        gh = jnp.dot(hstate, whh_ref[...], preferred_element_type=jnp.float32) + bhh
        r = jax.nn.sigmoid(gi[:, 0:H] + gh[:, 0:H])
        zg = jax.nn.sigmoid(gi[:, H:2 * H] + gh[:, H:2 * H])
        n = jnp.tanh(gi[:, 2 * H:3 * H] + r * gh[:, 2 * H:3 * H])
        hstate = (1.0 - zg) * n + zg * hstate

    # --- fc1 -> ReLU -> (dropout = identity in eval) -> fc2 -> * self.weight ----
    hid = jnp.maximum(
        jnp.dot(hstate, wf1_ref[...], preferred_element_type=jnp.float32) + bf1_ref[...],
        0.0)
    # TODO(synk): nn.Dropout is the identity in eval mode; training-mode dropout omitted.
    out = (jnp.dot(hid, wf2_ref[...], preferred_element_type=jnp.float32)
           + bf2_ref[...]) * sc_ref[...]
    o_ref[0] = out                                                  # (1, O_pad) lane-dense


# ----------------------------------------------------------------------------
# Wrapper: BN folding, weight lane-padding, single pallas_call
# ----------------------------------------------------------------------------
def gru_model_forward(x, params):
    B, L, C_in = x.shape
    g1, be1, m1, v1, w1, b1 = params["cnn1"]
    g2, be2, m2, v2, w2, b2 = params["cnn2"]
    g3, be3, m3, v3, w3, b3 = params["cnn3"]
    nl = params["nonlocal"]
    gru = params["gru"]
    w_fc1, b_fc1, w_fc2, b_fc2, scale = params["head"]

    H = b1.shape[-1]
    O = w_fc2.shape[-1]
    O_pad = ((O + 127) // 128) * 128     # lane-dense HBM writeback, sliced below

    # Fold eval-mode BatchNorm running stats into per-channel scale/shift.
    def fold_bn(g, b, m, v):
        s = g * jax.lax.rsqrt(v + EPS)
        return s, b - m * s

    s1, t1 = fold_bn(g1, be1, m1, v1)
    s2, t2 = fold_bn(g2, be2, m2, v2)
    s3, t3 = fold_bn(g3, be3, m3, v3)

    # Zero-pad fc2 to a 128-lane output (padded columns are exactly zero).
    w_fc2p = jnp.zeros((H, O_pad), jnp.float32).at[:, :O].set(w_fc2)
    b_fc2p = jnp.zeros((1, O_pad), jnp.float32).at[:, :O].set(b_fc2)

    L_pad = L + 2 * _P                   # rows of the shared conv padding scratch
    L_conv1 = L + 2 * _P - 1 * (7 - 1)   # largest conv output length (block 1)

    def rep(a):                          # parameter spec: same block for every grid step
        n = a.ndim
        return pl.BlockSpec(a.shape, lambda i, _n=n: (0,) * _n)

    args = (x,
            s1, t1, w1, b1,
            s2, t2, w2, b2,
            s3, t3, w3, b3,
            *nl, *gru,
            w_fc1, b_fc1, w_fc2p, b_fc2p, scale)

    in_specs = [pl.BlockSpec((1, L, C_in), lambda i: (i, 0, 0))]
    in_specs += [rep(a) for a in args[1:]]

    out = pl.pallas_call(
        _fused_forward_kernel,
        out_shape=jax.ShapeDtypeStruct((B, 1, O_pad), jnp.float32),
        grid=(B,),
        in_specs=in_specs,
        out_specs=pl.BlockSpec((1, 1, O_pad), lambda i: (i, 0, 0)),
        scratch_shapes=[
            pltpu.VMEM((L_pad, max(C_in, H)), jnp.float32),   # shared padded-input buffer
            pltpu.VMEM((L_conv1, H), jnp.float32),            # shared pre-pool buffer
        ],
        compiler_params=pltpu.CompilerParams(dimension_semantics=("parallel",)),
    )(*args)
    return out[:, 0, :O]


# ----------------------------------------------------------------------------
# Deterministic synthetic parameters
# ----------------------------------------------------------------------------
def init_params(key, input_size, hidden_size, output_size):
    keys = iter(jax.random.split(key, 48))

    def nrm(shape, scale=0.1):
        return scale * jax.random.normal(next(keys), shape, dtype=jnp.float32)

    def bn(c):
        gamma = 1.0 + nrm((1, c))
        beta = nrm((1, c))
        mean = nrm((1, c))
        var = 1.0 + 0.1 * jnp.abs(jax.random.normal(next(keys), (1, c), dtype=jnp.float32))
        return gamma, beta, mean, var

    def conv(cin, cout, k):
        # weight stored as (K, C_in, C_out) == torch Conv1d weight (C_out, C_in, K) transposed
        return nrm((k, cin, cout)), nrm((1, cout))

    params = {}
    g, b, m, v = bn(input_size)
    w, bb = conv(input_size, hidden_size, 7)
    params["cnn1"] = (g, b, m, v, w, bb)
    g, b, m, v = bn(hidden_size)
    w, bb = conv(hidden_size, hidden_size, 7)
    params["cnn2"] = (g, b, m, v, w, bb)
    g, b, m, v = bn(hidden_size)
    w, bb = conv(hidden_size, hidden_size, 3)
    params["cnn3"] = (g, b, m, v, w, bb)

    ci = hidden_size // 2
    params["nonlocal"] = (
        nrm((hidden_size, ci)), nrm((1, ci)),           # theta
        nrm((hidden_size, ci)), nrm((1, ci)),           # phi
        nrm((hidden_size, ci)), nrm((1, ci)),           # g
        nrm((ci, hidden_size)), nrm((1, hidden_size)),  # W
    )
    params["gru"] = (
        nrm((hidden_size, 3 * hidden_size)),  # W_ih^T, gate order [r, z, n]
        nrm((hidden_size, 3 * hidden_size)),  # W_hh^T
        nrm((1, 3 * hidden_size)),            # b_ih
        nrm((1, 3 * hidden_size)),            # b_hh
    )
    params["head"] = (
        nrm((hidden_size, hidden_size)), nrm((1, hidden_size)),    # fc1 (W^T, b)
        nrm((hidden_size, output_size)), nrm((1, output_size)),    # fc2 (W^T, b)
        jnp.array([[0.8]], dtype=jnp.float32),                     # self.weight
    )
    return params


if __name__ == "__main__":
    B, L, input_size, hidden_size, output_size = 2, 64, 4, 32, 3
    key = jax.random.PRNGKey(0)
    k_x, k_p = jax.random.split(key)
    x = jax.random.normal(k_x, (B, L, input_size), dtype=jnp.float32)
    params = init_params(k_p, input_size, hidden_size, output_size)

    fwd = jax.jit(lambda inp: gru_model_forward(inp, params))
    out = fwd(x)
    jax.block_until_ready(out)
    assert out.shape == (B, output_size), out.shape
    print("KERNEL_OK")
</pallas_src>

<mosaic_0001>
module attributes {stable_mosaic.version = 11 : i64} {
  func.func @_fused_forward_kernel(%arg0: i32, %arg1: memref<1x64x4xf32, #tpu.memory_space<vmem>>, %arg2: memref<1x4xf32, #tpu.memory_space<vmem>>, %arg3: memref<1x4xf32, #tpu.memory_space<vmem>>, %arg4: memref<7x4x32xf32, #tpu.memory_space<vmem>>, %arg5: memref<1x32xf32, #tpu.memory_space<vmem>>, %arg6: memref<1x32xf32, #tpu.memory_space<vmem>>, %arg7: memref<1x32xf32, #tpu.memory_space<vmem>>, %arg8: memref<7x32x32xf32, #tpu.memory_space<vmem>>, %arg9: memref<1x32xf32, #tpu.memory_space<vmem>>, %arg10: memref<1x32xf32, #tpu.memory_space<vmem>>, %arg11: memref<1x32xf32, #tpu.memory_space<vmem>>, %arg12: memref<3x32x32xf32, #tpu.memory_space<vmem>>, %arg13: memref<1x32xf32, #tpu.memory_space<vmem>>, %arg14: memref<32x16xf32, #tpu.memory_space<vmem>>, %arg15: memref<1x16xf32, #tpu.memory_space<vmem>>, %arg16: memref<32x16xf32, #tpu.memory_space<vmem>>, %arg17: memref<1x16xf32, #tpu.memory_space<vmem>>, %arg18: memref<32x16xf32, #tpu.memory_space<vmem>>, %arg19: memref<1x16xf32, #tpu.memory_space<vmem>>, %arg20: memref<16x32xf32, #tpu.memory_space<vmem>>, %arg21: memref<1x32xf32, #tpu.memory_space<vmem>>, %arg22: memref<32x96xf32, #tpu.memory_space<vmem>>, %arg23: memref<32x96xf32, #tpu.memory_space<vmem>>, %arg24: memref<1x96xf32, #tpu.memory_space<vmem>>, %arg25: memref<1x96xf32, #tpu.memory_space<vmem>>, %arg26: memref<32x32xf32, #tpu.memory_space<vmem>>, %arg27: memref<1x32xf32, #tpu.memory_space<vmem>>, %arg28: memref<32x128xf32, #tpu.memory_space<vmem>>, %arg29: memref<1x128xf32, #tpu.memory_space<vmem>>, %arg30: memref<1x1xf32, #tpu.memory_space<vmem>>, %arg31: memref<1x1x128xf32, #tpu.memory_space<vmem>>, %arg32: memref<66x32xf32, #tpu.memory_space<vmem>>, %arg33: memref<60x32xf32, #tpu.memory_space<vmem>>) attributes {dimension_semantics = [#tpu.dimension_semantics<parallel>], iteration_bounds = array<i64: 2>, scalar_prefetch = 0 : i64, scratch_operands = 2 : i64, tpu.core_type = #tpu.core_type<tc>, window_params = [{transform_indices = @transform_0, window_bounds = array<i64: 1, 64, 4>}, {pipeline_mode = #tpu.pipeline_mode<synchronous>, transform_indices = @transform_1, window_bounds = array<i64: 1, 4>}, {pipeline_mode = #tpu.pipeline_mode<synchronous>, transform_indices = @transform_2, window_bounds = array<i64: 1, 4>}, {pipeline_mode = #tpu.pipeline_mode<synchronous>, transform_indices = @transform_3, window_bounds = array<i64: 7, 4, 32>}, {pipeline_mode = #tpu.pipeline_mode<synchronous>, transform_indices = @transform_4, window_bounds = array<i64: 1, 32>}, {pipeline_mode = #tpu.pipeline_mode<synchronous>, transform_indices = @transform_5, window_bounds = array<i64: 1, 32>}, {pipeline_mode = #tpu.pipeline_mode<synchronous>, transform_indices = @transform_6, window_bounds = array<i64: 1, 32>}, {pipeline_mode = #tpu.pipeline_mode<synchronous>, transform_indices = @transform_7, window_bounds = array<i64: 7, 32, 32>}, {pipeline_mode = #tpu.pipeline_mode<synchronous>, transform_indices = @transform_8, window_bounds = array<i64: 1, 32>}, {pipeline_mode = #tpu.pipeline_mode<synchronous>, transform_indices = @transform_9, window_bounds = array<i64: 1, 32>}, {pipeline_mode = #tpu.pipeline_mode<synchronous>, transform_indices = @transform_10, window_bounds = array<i64: 1, 32>}, {pipeline_mode = #tpu.pipeline_mode<synchronous>, transform_indices = @transform_11, window_bounds = array<i64: 3, 32, 32>}, {pipeline_mode = #tpu.pipeline_mode<synchronous>, transform_indices = @transform_12, window_bounds = array<i64: 1, 32>}, {pipeline_mode = #tpu.pipeline_mode<synchronous>, transform_indices = @transform_13, window_bounds = array<i64: 32, 16>}, {pipeline_mode = #tpu.pipeline_mode<synchronous>, transform_indices = @transform_14, window_bounds = array<i64: 1, 16>}, {pipeline_mode = #tpu.pipeline_mode<synchronous>, transform_indices = @transform_15, window_bounds = array<i64: 32, 16>}, {pipeline_mode = #tpu.pipeline_mode<synchronous>, transform_indices = @transform_16, window_bounds = array<i64: 1, 16>}, {pipeline_mode = #tpu.pipeline_mode<synchronous>, transform_indices = @transform_17, window_bounds = array<i64: 32, 16>}, {pipeline_mode = #tpu.pipeline_mode<synchronous>, transform_indices = @transform_18, window_bounds = array<i64: 1, 16>}, {pipeline_mode = #tpu.pipeline_mode<synchronous>, transform_indices = @transform_19, window_bounds = array<i64: 16, 32>}, {pipeline_mode = #tpu.pipeline_mode<synchronous>, transform_indices = @transform_20, window_bounds = array<i64: 1, 32>}, {pipeline_mode = #tpu.pipeline_mode<synchronous>, transform_indices = @transform_21, window_bounds = array<i64: 32, 96>}, {pipeline_mode = #tpu.pipeline_mode<synchronous>, transform_indices = @transform_22, window_bounds = array<i64: 32, 96>}, {pipeline_mode = #tpu.pipeline_mode<synchronous>, transform_indices = @transform_23, window_bounds = array<i64: 1, 96>}, {pipeline_mode = #tpu.pipeline_mode<synchronous>, transform_indices = @transform_24, window_bounds = array<i64: 1, 96>}, {pipeline_mode = #tpu.pipeline_mode<synchronous>, transform_indices = @transform_25, window_bounds = array<i64: 32, 32>}, {pipeline_mode = #tpu.pipeline_mode<synchronous>, transform_indices = @transform_26, window_bounds = array<i64: 1, 32>}, {pipeline_mode = #tpu.pipeline_mode<synchronous>, transform_indices = @transform_27, window_bounds = array<i64: 32, 128>}, {pipeline_mode = #tpu.pipeline_mode<synchronous>, transform_indices = @transform_28, window_bounds = array<i64: 1, 128>}, {pipeline_mode = #tpu.pipeline_mode<synchronous>, transform_indices = @transform_29, window_bounds = array<i64: 1, 1>}, {transform_indices = @transform_30, window_bounds = array<i64: 1, 1, 128>}]} {
    %c0 = arith.constant 0 : index
    %c0_0 = arith.constant 0 : index
    %c0_1 = arith.constant 0 : index
    %0 = vector.load %arg1[%c0, %c0_0, %c0_1] : memref<1x64x4xf32, #tpu.memory_space<vmem>>, vector<1x64x4xf32>
    %1 = vector.shape_cast %0 : vector<1x64x4xf32> to vector<64x4xf32>
    %c0_2 = arith.constant 0 : index
    %c0_3 = arith.constant 0 : index
    %2 = vector.load %arg2[%c0_2, %c0_3] : memref<1x4xf32, #tpu.memory_space<vmem>>, vector<1x4xf32>
    %3 = vector.broadcast %2 : vector<1x4xf32> to vector<64x4xf32>
    %4 = arith.mulf %1, %3 : vector<64x4xf32>
    %c0_4 = arith.constant 0 : index
    %c0_5 = arith.constant 0 : index
    %5 = vector.load %arg3[%c0_4, %c0_5] : memref<1x4xf32, #tpu.memory_space<vmem>>, vector<1x4xf32>
    %6 = vector.broadcast %5 : vector<1x4xf32> to vector<64x4xf32>
    %7 = arith.addf %4, %6 : vector<64x4xf32>
    %cst = arith.constant 0.000000e+00 : f32
    %8 = vector.broadcast %cst : f32 to vector<1x32xf32>
    %c0_6 = arith.constant 0 : index
    %c0_7 = arith.constant 0 : index
    %9 = vector.load %arg32[%c0_6, %c0_7] : memref<66x32xf32, #tpu.memory_space<vmem>>, vector<1x32xf32>
    tpu.vector_store %arg32[%c0_6, %c0_7], %8 {strides = array<i32>} : memref<66x32xf32, #tpu.memory_space<vmem>>, vector<1x32xf32>,
    %c65 = arith.constant 65 : index
    %c0_8 = arith.constant 0 : index
    %10 = vector.load %arg32[%c65, %c0_8] : memref<66x32xf32, #tpu.memory_space<vmem>>, vector<1x32xf32>
    tpu.vector_store %arg32[%c65, %c0_8], %8 {strides = array<i32>} : memref<66x32xf32, #tpu.memory_space<vmem>>, vector<1x32xf32>,
    %c1 = arith.constant 1 : index
    %c0_9 = arith.constant 0 : index
    %11 = vector.load %arg32[%c1, %c0_9] : memref<66x32xf32, #tpu.memory_space<vmem>>, vector<64x4xf32>
    tpu.vector_store %arg32[%c1, %c0_9], %7 {strides = array<i32>} : memref<66x32xf32, #tpu.memory_space<vmem>>, vector<64x4xf32>,
    %c0_10 = arith.constant 0 : index
    %c0_11 = arith.constant 0 : index
    %12 = vector.load %arg32[%c0_10, %c0_11] : memref<66x32xf32, #tpu.memory_space<vmem>>, vector<60x4xf32>
    %c0_12 = arith.constant 0 : index
    %c0_13 = arith.constant 0 : index
    %c0_14 = arith.constant 0 : index
    %13 = vector.load %arg4[%c0_12, %c0_13, %c0_14] : memref<7x4x32xf32, #tpu.memory_space<vmem>>, vector<1x4x32xf32>
    %14 = vector.shape_cast %13 : vector<1x4x32xf32> to vector<4x32xf32>
    %cst_15 = arith.constant dense<0.000000e+00> : vector<60x32xf32>
    %15 = tpu.matmul %12, %14, %cst_15 {dimension_numbers = #tpu.dot_dimension_numbers<[1], [0], [0], [1], [0, 0, 1, 1], [], []>} : vector<60x4xf32>, vector<4x32xf32>, vector<60x32xf32> -> vector<60x32xf32>
    %c1_16 = arith.constant 1 : index
    %c0_17 = arith.constant 0 : index
    %16 = vector.load %arg32[%c1_16, %c0_17] : memref<66x32xf32, #tpu.memory_space<vmem>>, vector<60x4xf32>
    %c1_18 = arith.constant 1 : index
    %c0_19 = arith.constant 0 : index
    %c0_20 = arith.constant 0 : index
    %17 = vector.load %arg4[%c1_18, %c0_19, %c0_20] : memref<7x4x32xf32, #tpu.memory_space<vmem>>, vector<1x4x32xf32>
    %18 = vector.shape_cast %17 : vector<1x4x32xf32> to vector<4x32xf32>
    %cst_21 = arith.constant dense<0.000000e+00> : vector<60x32xf32>
    %19 = tpu.matmul %16, %18, %cst_21 {dimension_numbers = #tpu.dot_dimension_numbers<[1], [0], [0], [1], [0, 0, 1, 1], [], []>} : vector<60x4xf32>, vector<4x32xf32>, vector<60x32xf32> -> vector<60x32xf32>
    %20 = arith.addf %15, %19 : vector<60x32xf32>
    %c2 = arith.constant 2 : index
    %c0_22 = arith.constant 0 : index
    %21 = vector.load %arg32[%c2, %c0_22] : memref<66x32xf32, #tpu.memory_space<vmem>>, vector<60x4xf32>
    %c2_23 = arith.constant 2 : index
    %c0_24 = arith.constant 0 : index
    %c0_25 = arith.constant 0 : index
    %22 = vector.load %arg4[%c2_23, %c0_24, %c0_25] : memref<7x4x32xf32, #tpu.memory_space<vmem>>, vector<1x4x32xf32>
    %23 = vector.shape_cast %22 : vector<1x4x32xf32> to vector<4x32xf32>
    %cst_26 = arith.constant dense<0.000000e+00> : vector<60x32xf32>
    %24 = tpu.matmul %21, %23, %cst_26 {dimension_numbers = #tpu.dot_dimension_numbers<[1], [0], [0], [1], [0, 0, 1, 1], [], []>} : vector<60x4xf32>, vector<4x32xf32>, vector<60x32xf32> -> vector<60x32xf32>
    %25 = arith.addf %20, %24 : vector<60x32xf32>
    %c3 = arith.constant 3 : index
    %c0_27 = arith.constant 0 : index
    %26 = vector.load %arg32[%c3, %c0_27] : memref<66x32xf32, #tpu.memory_space<vmem>>, vector<60x4xf32>
    %c3_28 = arith.constant 3 : index
    %c0_29 = arith.constant 0 : index
    %c0_30 = arith.constant 0 : index
    %27 = vector.load %arg4[%c3_28, %c0_29, %c0_30] : memref<7x4x32xf32, #tpu.memory_space<vmem>>, vector<1x4x32xf32>
    %28 = vector.shape_cast %27 : vector<1x4x32xf32> to vector<4x32xf32>
    %cst_31 = arith.constant dense<0.000000e+00> : vector<60x32xf32>
    %29 = tpu.matmul %26, %28, %cst_31 {dimension_numbers = #tpu.dot_dimension_numbers<[1], [0], [0], [1], [0, 0, 1, 1], [], []>} : vector<60x4xf32>, vector<4x32xf32>, vector<60x32xf32> -> vector<60x32xf32>
    %30 = arith.addf %25, %29 : vector<60x32xf32>
    %c4 = arith.constant 4 : index
    %c0_32 = arith.constant 0 : index
    %31 = vector.load %arg32[%c4, %c0_32] : memref<66x32xf32, #tpu.memory_space<vmem>>, vector<60x4xf32>
    %c4_33 = arith.constant 4 : index
    %c0_34 = arith.constant 0 : index
    %c0_35 = arith.constant 0 : index
    %32 = vector.load %arg4[%c4_33, %c0_34, %c0_35] : memref<7x4x32xf32, #tpu.memory_space<vmem>>, vector<1x4x32xf32>
    %33 = vector.shape_cast %32 : vector<1x4x32xf32> to vector<4x32xf32>
    %cst_36 = arith.constant dense<0.000000e+00> : vector<60x32xf32>
    %34 = tpu.matmul %31, %33, %cst_36 {dimension_numbers = #tpu.dot_dimension_numbers<[1], [0], [0], [1], [0, 0, 1, 1], [], []>} : vector<60x4xf32>, vector<4x32xf32>, vector<60x32xf32> -> vector<60x32xf32>
    %35 = arith.addf %30, %34 : vector<60x32xf32>
    %c5 = arith.constant 5 : index
    %c0_37 = arith.constant 0 : index
    %36 = vector.load %arg32[%c5, %c0_37] : memref<66x32xf32, #tpu.memory_space<vmem>>, vector<60x4xf32>
    %c5_38 = arith.constant 5 : index
    %c0_39 = arith.constant 0 : index
    %c0_40 = arith.constant 0 : index
    %37 = vector.load %arg4[%c5_38, %c0_39, %c0_40] : memref<7x4x32xf32, #tpu.memory_space<vmem>>, vector<1x4x32xf32>
    %38 = vector.shape_cast %37 : vector<1x4x32xf32> to vector<4x32xf32>
    %cst_41 = arith.constant dense<0.000000e+00> : vector<60x32xf32>
    %39 = tpu.matmul %36, %38, %cst_41 {dimension_numbers = #tpu.dot_dimension_numbers<[1], [0], [0], [1], [0, 0, 1, 1], [], []>} : vector<60x4xf32>, vector<4x32xf32>, vector<60x32xf32> -> vector<60x32xf32>
    %40 = arith.addf %35, %39 : vector<60x32xf32>
    %c6 = arith.constant 6 : index
    %c0_42 = arith.constant 0 : index
    %41 = vector.load %arg32[%c6, %c0_42] : memref<66x32xf32, #tpu.memory_space<vmem>>, vector<60x4xf32>
    %c6_43 = arith.constant 6 : index
    %c0_44 = arith.constant 0 : index
    %c0_45 = arith.constant 0 : index
    %42 = vector.load %arg4[%c6_43, %c0_44, %c0_45] : memref<7x4x32xf32, #tpu.memory_space<vmem>>, vector<1x4x32xf32>
    %43 = vector.shape_cast %42 : vector<1x4x32xf32> to vector<4x32xf32>
    %cst_46 = arith.constant dense<0.000000e+00> : vector<60x32xf32>
    %44 = tpu.matmul %41, %43, %cst_46 {dimension_numbers = #tpu.dot_dimension_numbers<[1], [0], [0], [1], [0, 0, 1, 1], [], []>} : vector<60x4xf32>, vector<4x32xf32>, vector<60x32xf32> -> vector<60x32xf32>
    %45 = arith.addf %40, %44 : vector<60x32xf32>
    %c0_47 = arith.constant 0 : index
    %c0_48 = arith.constant 0 : index
    %46 = vector.load %arg5[%c0_47, %c0_48] : memref<1x32xf32, #tpu.memory_space<vmem>>, vector<1x32xf32>
    %47 = vector.broadcast %46 : vector<1x32xf32> to vector<60x32xf32>
    %48 = arith.addf %45, %47 : vector<60x32xf32>
    %cst_49 = arith.constant 0.000000e+00 : f32
    %49 = vector.broadcast %cst_49 : f32 to vector<60x32xf32>
    %50 = arith.maximumf %48, %49 : vector<60x32xf32>
    %c0_50 = arith.constant 0 : index
    %c0_51 = arith.constant 0 : index
    %51 = vector.load %arg33[%c0_50, %c0_51] : memref<60x32xf32, #tpu.memory_space<vmem>>, vector<60x32xf32>
    tpu.vector_store %arg33[%c0_50, %c0_51], %50 {strides = array<i32>} : memref<60x32xf32, #tpu.memory_space<vmem>>, vector<60x32xf32>,
    %c0_52 = arith.constant 0 : index
    %c0_53 = arith.constant 0 : index
    %52 = tpu.strided_load %arg33[%c0_52, %c0_53] {strides = array<i32: 2, 1>} : memref<60x32xf32, #tpu.memory_space<vmem>>, vector<30x32xf32>
    %c1_54 = arith.constant 1 : index
    %c0_55 = arith.constant 0 : index
    %53 = tpu.strided_load %arg33[%c1_54, %c0_55] {strides = array<i32: 2, 1>} : memref<60x32xf32, #tpu.memory_space<vmem>>, vector<30x32xf32>
    %54 = arith.maximumf %52, %53 : vector<30x32xf32>
    %c0_56 = arith.constant 0 : index
    %c0_57 = arith.constant 0 : index
    %55 = vector.load %arg6[%c0_56, %c0_57] : memref<1x32xf32, #tpu.memory_space<vmem>>, vector<1x32xf32>
    %56 = vector.broadcast %55 : vector<1x32xf32> to vector<30x32xf32>
    %57 = arith.mulf %54, %56 : vector<30x32xf32>
    %c0_58 = arith.constant 0 : index
    %c0_59 = arith.constant 0 : index
    %58 = vector.load %arg7[%c0_58, %c0_59] : memref<1x32xf32, #tpu.memory_space<vmem>>, vector<1x32xf32>
    %59 = vector.broadcast %58 : vector<1x32xf32> to vector<30x32xf32>
    %60 = arith.addf %57, %59 : vector<30x32xf32>
    %cst_60 = arith.constant 0.000000e+00 : f32
    %61 = vector.broadcast %cst_60 : f32 to vector<1x32xf32>
    %c0_61 = arith.constant 0 : index
    %c0_62 = arith.constant 0 : index
    %62 = vector.load %arg32[%c0_61, %c0_62] : memref<66x32xf32, #tpu.memory_space<vmem>>, vector<1x32xf32>
    tpu.vector_store %arg32[%c0_61, %c0_62], %61 {strides = array<i32>} : memref<66x32xf32, #tpu.memory_space<vmem>>, vector<1x32xf32>,
    %c31 = arith.constant 31 : index
    %c0_63 = arith.constant 0 : index
    %63 = vector.load %arg32[%c31, %c0_63] : memref<66x32xf32, #tpu.memory_space<vmem>>, vector<1x32xf32>
    tpu.vector_store %arg32[%c31, %c0_63], %61 {strides = array<i32>} : memref<66x32xf32, #tpu.memory_space<vmem>>, vector<1x32xf32>,
    %c1_64 = arith.constant 1 : index
    %c0_65 = arith.constant 0 : index
    %64 = vector.load %arg32[%c1_64, %c0_65] : memref<66x32xf32, #tpu.memory_space<vmem>>, vector<30x32xf32>
    tpu.vector_store %arg32[%c1_64, %c0_65], %60 {strides = array<i32>} : memref<66x32xf32, #tpu.memory_space<vmem>>, vector<30x32xf32>,
    %c0_66 = arith.constant 0 : index
    %c0_67 = arith.constant 0 : index
    %65 = vector.load %arg32[%c0_66, %c0_67] : memref<66x32xf32, #tpu.memory_space<vmem>>, vector<20x32xf32>
    %c0_68 = arith.constant 0 : index
    %c0_69 = arith.constant 0 : index
    %c0_70 = arith.constant 0 : index
    %66 = vector.load %arg8[%c0_68, %c0_69, %c0_70] : memref<7x32x32xf32, #tpu.memory_space<vmem>>, vector<1x32x32xf32>
    %67 = vector.shape_cast %66 : vector<1x32x32xf32> to vector<32x32xf32>
    %cst_71 = arith.constant dense<0.000000e+00> : vector<20x32xf32>
    %68 = tpu.matmul %65, %67, %cst_71 {dimension_numbers = #tpu.dot_dimension_numbers<[1], [0], [0], [1], [0, 0, 1, 1], [], []>} : vector<20x32xf32>, vector<32x32xf32>, vector<20x32xf32> -> vector<20x32xf32>
    %c2_72 = arith.constant 2 : index
    %c0_73 = arith.constant 0 : index
    %69 = vector.load %arg32[%c2_72, %c0_73] : memref<66x32xf32, #tpu.memory_space<vmem>>, vector<20x32xf32>
    %c1_74 = arith.constant 1 : index
    %c0_75 = arith.constant 0 : index
    %c0_76 = arith.constant 0 : index
    %70 = vector.load %arg8[%c1_74, %c0_75, %c0_76] : memref<7x32x32xf32, #tpu.memory_space<vmem>>, vector<1x32x32xf32>
    %71 = vector.shape_cast %70 : vector<1x32x32xf32> to vector<32x32xf32>
    %cst_77 = arith.constant dense<0.000000e+00> : vector<20x32xf32>
    %72 = tpu.matmul %69, %71, %cst_77 {dimension_numbers = #tpu.dot_dimension_numbers<[1], [0], [0], [1], [0, 0, 1, 1], [], []>} : vector<20x32xf32>, vector<32x32xf32>, vector<20x32xf32> -> vector<20x32xf32>
    %73 = arith.addf %68, %72 : vector<20x32xf32>
    %c4_78 = arith.constant 4 : index
    %c0_79 = arith.constant 0 : index
    %74 = vector.load %arg32[%c4_78, %c0_79] : memref<66x32xf32, #tpu.memory_space<vmem>>, vector<20x32xf32>
    %c2_80 = arith.constant 2 : index
    %c0_81 = arith.constant 0 : index
    %c0_82 = arith.constant 0 : index
    %75 = vector.load %arg8[%c2_80, %c0_81, %c0_82] : memref<7x32x32xf32, #tpu.memory_space<vmem>>, vector<1x32x32xf32>
    %76 = vector.shape_cast %75 : vector<1x32x32xf32> to vector<32x32xf32>
    %cst_83 = arith.constant dense<0.000000e+00> : vector<20x32xf32>
    %77 = tpu.matmul %74, %76, %cst_83 {dimension_numbers = #tpu.dot_dimension_numbers<[1], [0], [0], [1], [0, 0, 1, 1], [], []>} : vector<20x32xf32>, vector<32x32xf32>, vector<20x32xf32> -> vector<20x32xf32>
    %78 = arith.addf %73, %77 : vector<20x32xf32>
    %c6_84 = arith.constant 6 : index
    %c0_85 = arith.constant 0 : index
    %79 = vector.load %arg32[%c6_84, %c0_85] : memref<66x32xf32, #tpu.memory_space<vmem>>, vector<20x32xf32>
    %c3_86 = arith.constant 3 : index
    %c0_87 = arith.constant 0 : index
    %c0_88 = arith.constant 0 : index
    %80 = vector.load %arg8[%c3_86, %c0_87, %c0_88] : memref<7x32x32xf32, #tpu.memory_space<vmem>>, vector<1x32x32xf32>
    %81 = vector.shape_cast %80 : vector<1x32x32xf32> to vector<32x32xf32>
    %cst_89 = arith.constant dense<0.000000e+00> : vector<20x32xf32>
    %82 = tpu.matmul %79, %81, %cst_89 {dimension_numbers = #tpu.dot_dimension_numbers<[1], [0], [0], [1], [0, 0, 1, 1], [], []>} : vector<20x32xf32>, vector<32x32xf32>, vector<20x32xf32> -> vector<20x32xf32>
    %83 = arith.addf %78, %82 : vector<20x32xf32>
    %c8 = arith.constant 8 : index
    %c0_90 = arith.constant 0 : index
    %84 = vector.load %arg32[%c8, %c0_90] : memref<66x32xf32, #tpu.memory_space<vmem>>, vector<20x32xf32>
    %c4_91 = arith.constant 4 : index
    %c0_92 = arith.constant 0 : index
    %c0_93 = arith.constant 0 : index
    %85 = vector.load %arg8[%c4_91, %c0_92, %c0_93] : memref<7x32x32xf32, #tpu.memory_space<vmem>>, vector<1x32x32xf32>
    %86 = vector.shape_cast %85 : vector<1x32x32xf32> to vector<32x32xf32>
    %cst_94 = arith.constant dense<0.000000e+00> : vector<20x32xf32>
    %87 = tpu.matmul %84, %86, %cst_94 {dimension_numbers = #tpu.dot_dimension_numbers<[1], [0], [0], [1], [0, 0, 1, 1], [], []>} : vector<20x32xf32>, vector<32x32xf32>, vector<20x32xf32> -> vector<20x32xf32>
    %88 = arith.addf %83, %87 : vector<20x32xf32>
    %c10 = arith.constant 10 : index
    %c0_95 = arith.constant 0 : index
    %89 = vector.load %arg32[%c10, %c0_95] : memref<66x32xf32, #tpu.memory_space<vmem>>, vector<20x32xf32>
    %c5_96 = arith.constant 5 : index
    %c0_97 = arith.constant 0 : index
    %c0_98 = arith.constant 0 : index
    %90 = vector.load %arg8[%c5_96, %c0_97, %c0_98] : memref<7x32x32xf32, #tpu.memory_space<vmem>>, vector<1x32x32xf32>
    %91 = vector.shape_cast %90 : vector<1x32x32xf32> to vector<32x32xf32>
    %cst_99 = arith.constant dense<0.000000e+00> : vector<20x32xf32>
    %92 = tpu.matmul %89, %91, %cst_99 {dimension_numbers = #tpu.dot_dimension_numbers<[1], [0], [0], [1], [0, 0, 1, 1], [], []>} : vector<20x32xf32>, vector<32x32xf32>, vector<20x32xf32> -> vector<20x32xf32>
    %93 = arith.addf %88, %92 : vector<20x32xf32>
    %c12 = arith.constant 12 : index
    %c0_100 = arith.constant 0 : index
    %94 = vector.load %arg32[%c12, %c0_100] : memref<66x32xf32, #tpu.memory_space<vmem>>, vector<20x32xf32>
    %c6_101 = arith.constant 6 : index
    %c0_102 = arith.constant 0 : index
    %c0_103 = arith.constant 0 : index
    %95 = vector.load %arg8[%c6_101, %c0_102, %c0_103] : memref<7x32x32xf32, #tpu.memory_space<vmem>>, vector<1x32x32xf32>
    %96 = vector.shape_cast %95 : vector<1x32x32xf32> to vector<32x32xf32>
    %cst_104 = arith.constant dense<0.000000e+00> : vector<20x32xf32>
    %97 = tpu.matmul %94, %96, %cst_104 {dimension_numbers = #tpu.dot_dimension_numbers<[1], [0], [0], [1], [0, 0, 1, 1], [], []>} : vector<20x32xf32>, vector<32x32xf32>, vector<20x32xf32> -> vector<20x32xf32>
    %98 = arith.addf %93, %97 : vector<20x32xf32>
    %c0_105 = arith.constant 0 : index
    %c0_106 = arith.constant 0 : index
    %99 = vector.load %arg9[%c0_105, %c0_106] : memref<1x32xf32, #tpu.memory_space<vmem>>, vector<1x32xf32>
    %100 = vector.broadcast %99 : vector<1x32xf32> to vector<20x32xf32>
    %101 = arith.addf %98, %100 : vector<20x32xf32>
    %cst_107 = arith.constant 0.000000e+00 : f32
    %102 = vector.broadcast %cst_107 : f32 to vector<20x32xf32>
    %103 = arith.maximumf %101, %102 : vector<20x32xf32>
    %c0_108 = arith.constant 0 : index
    %c0_109 = arith.constant 0 : index
    %104 = vector.load %arg33[%c0_108, %c0_109] : memref<60x32xf32, #tpu.memory_space<vmem>>, vector<20x32xf32>
    tpu.vector_store %arg33[%c0_108, %c0_109], %103 {strides = array<i32>} : memref<60x32xf32, #tpu.memory_space<vmem>>, vector<20x32xf32>,
    %c0_110 = arith.constant 0 : index
    %c0_111 = arith.constant 0 : index
    %105 = tpu.strided_load %arg33[%c0_110, %c0_111] {strides = array<i32: 2, 1>} : memref<60x32xf32, #tpu.memory_space<vmem>>, vector<10x32xf32>
    %c1_112 = arith.constant 1 : index
    %c0_113 = arith.constant 0 : index
    %106 = tpu.strided_load %arg33[%c1_112, %c0_113] {strides = array<i32: 2, 1>} : memref<60x32xf32, #tpu.memory_space<vmem>>, vector<10x32xf32>
    %107 = arith.maximumf %105, %106 : vector<10x32xf32>
    %c0_114 = arith.constant 0 : index
    %c0_115 = arith.constant 0 : index
    %108 = vector.load %arg10[%c0_114, %c0_115] : memref<1x32xf32, #tpu.memory_space<vmem>>, vector<1x32xf32>
    %109 = vector.broadcast %108 : vector<1x32xf32> to vector<10x32xf32>
    %110 = arith.mulf %107, %109 : vector<10x32xf32>
    %c0_116 = arith.constant 0 : index
    %c0_117 = arith.constant 0 : index
    %111 = vector.load %arg11[%c0_116, %c0_117] : memref<1x32xf32, #tpu.memory_space<vmem>>, vector<1x32xf32>
    %112 = vector.broadcast %111 : vector<1x32xf32> to vector<10x32xf32>
    %113 = arith.addf %110, %112 : vector<10x32xf32>
    %cst_118 = arith.constant 0.000000e+00 : f32
    %114 = vector.broadcast %cst_118 : f32 to vector<1x32xf32>
    %c0_119 = arith.constant 0 : index
    %c0_120 = arith.constant 0 : index
    %115 = vector.load %arg32[%c0_119, %c0_120] : memref<66x32xf32, #tpu.memory_space<vmem>>, vector<1x32xf32>
    tpu.vector_store %arg32[%c0_119, %c0_120], %114 {strides = array<i32>} : memref<66x32xf32, #tpu.memory_space<vmem>>, vector<1x32xf32>,
    %c11 = arith.constant 11 : index
    %c0_121 = arith.constant 0 : index
    %116 = vector.load %arg32[%c11, %c0_121] : memref<66x32xf32, #tpu.memory_space<vmem>>, vector<1x32xf32>
    tpu.vector_store %arg32[%c11, %c0_121], %114 {strides = array<i32>} : memref<66x32xf32, #tpu.memory_space<vmem>>, vector<1x32xf32>,
    %c1_122 = arith.constant 1 : index
    %c0_123 = arith.constant 0 : index
    %117 = vector.load %arg32[%c1_122, %c0_123] : memref<66x32xf32, #tpu.memory_space<vmem>>, vector<10x32xf32>
    tpu.vector_store %arg32[%c1_122, %c0_123], %113 {strides = array<i32>} : memref<66x32xf32, #tpu.memory_space<vmem>>, vector<10x32xf32>,
    %c0_124 = arith.constant 0 : index
    %c0_125 = arith.constant 0 : index
    %118 = vector.load %arg32[%c0_124, %c0_125] : memref<66x32xf32, #tpu.memory_space<vmem>>, vector<4x32xf32>
    %c0_126 = arith.constant 0 : index
    %c0_127 = arith.constant 0 : index
    %c0_128 = arith.constant 0 : index
    %119 = vector.load %arg12[%c0_126, %c0_127, %c0_128] : memref<3x32x32xf32, #tpu.memory_space<vmem>>, vector<1x32x32xf32>
    %120 = vector.shape_cast %119 : vector<1x32x32xf32> to vector<32x32xf32>
    %cst_129 = arith.constant dense<0.000000e+00> : vector<4x32xf32>
    %121 = tpu.matmul %118, %120, %cst_129 {dimension_numbers = #tpu.dot_dimension_numbers<[1], [0], [0], [1], [0, 0, 1, 1], [], []>} : vector<4x32xf32>, vector<32x32xf32>, vector<4x32xf32> -> vector<4x32xf32>
    %c4_130 = arith.constant 4 : index
    %c0_131 = arith.constant 0 : index
    %122 = vector.load %arg32[%c4_130, %c0_131] : memref<66x32xf32, #tpu.memory_space<vmem>>, vector<4x32xf32>
    %c1_132 = arith.constant 1 : index
    %c0_133 = arith.constant 0 : index
    %c0_134 = arith.constant 0 : index
    %123 = vector.load %arg12[%c1_132, %c0_133, %c0_134] : memref<3x32x32xf32, #tpu.memory_space<vmem>>, vector<1x32x32xf32>
    %124 = vector.shape_cast %123 : vector<1x32x32xf32> to vector<32x32xf32>
    %cst_135 = arith.constant dense<0.000000e+00> : vector<4x32xf32>
    %125 = tpu.matmul %122, %124, %cst_135 {dimension_numbers = #tpu.dot_dimension_numbers<[1], [0], [0], [1], [0, 0, 1, 1], [], []>} : vector<4x32xf32>, vector<32x32xf32>, vector<4x32xf32> -> vector<4x32xf32>
    %126 = arith.addf %121, %125 : vector<4x32xf32>
    %c8_136 = arith.constant 8 : index
    %c0_137 = arith.constant 0 : index
    %127 = vector.load %arg32[%c8_136, %c0_137] : memref<66x32xf32, #tpu.memory_space<vmem>>, vector<4x32xf32>
    %c2_138 = arith.constant 2 : index
    %c0_139 = arith.constant 0 : index
    %c0_140 = arith.constant 0 : index
    %128 = vector.load %arg12[%c2_138, %c0_139, %c0_140] : memref<3x32x32xf32, #tpu.memory_space<vmem>>, vector<1x32x32xf32>
    %129 = vector.shape_cast %128 : vector<1x32x32xf32> to vector<32x32xf32>
    %cst_141 = arith.constant dense<0.000000e+00> : vector<4x32xf32>
    %130 = tpu.matmul %127, %129, %cst_141 {dimension_numbers = #tpu.dot_dimension_numbers<[1], [0], [0], [1], [0, 0, 1, 1], [], []>} : vector<4x32xf32>, vector<32x32xf32>, vector<4x32xf32> -> vector<4x32xf32>
    %131 = arith.addf %126, %130 : vector<4x32xf32>
    %c0_142 = arith.constant 0 : index
    %c0_143 = arith.constant 0 : index
    %132 = vector.load %arg13[%c0_142, %c0_143] : memref<1x32xf32, #tpu.memory_space<vmem>>, vector<1x32xf32>
    %133 = vector.broadcast %132 : vector<1x32xf32> to vector<4x32xf32>
    %134 = arith.addf %131, %133 : vector<4x32xf32>
    %cst_144 = arith.constant 0.000000e+00 : f32
    %135 = vector.broadcast %cst_144 : f32 to vector<4x32xf32>
    %136 = arith.maximumf %134, %135 : vector<4x32xf32>
    %c0_145 = arith.constant 0 : index
    %c0_146 = arith.constant 0 : index
    %137 = vector.load %arg33[%c0_145, %c0_146] : memref<60x32xf32, #tpu.memory_space<vmem>>, vector<4x32xf32>
    tpu.vector_store %arg33[%c0_145, %c0_146], %136 {strides = array<i32>} : memref<60x32xf32, #tpu.memory_space<vmem>>, vector<4x32xf32>,
    %c0_147 = arith.constant 0 : index
    %c0_148 = arith.constant 0 : index
    %138 = tpu.strided_load %arg33[%c0_147, %c0_148] {strides = array<i32: 2, 1>} : memref<60x32xf32, #tpu.memory_space<vmem>>, vector<2x32xf32>
    %c1_149 = arith.constant 1 : index
    %c0_150 = arith.constant 0 : index
    %139 = tpu.strided_load %arg33[%c1_149, %c0_150] {strides = array<i32: 2, 1>} : memref<60x32xf32, #tpu.memory_space<vmem>>, vector<2x32xf32>
    %140 = arith.maximumf %138, %139 : vector<2x32xf32>
    %c0_151 = arith.constant 0 : index
    %c0_152 = arith.constant 0 : index
    %141 = vector.load %arg14[%c0_151, %c0_152] : memref<32x16xf32, #tpu.memory_space<vmem>>, vector<32x16xf32>
    %cst_153 = arith.constant dense<0.000000e+00> : vector<2x16xf32>
    %142 = tpu.matmul %140, %141, %cst_153 {dimension_numbers = #tpu.dot_dimension_numbers<[1], [0], [0], [1], [0, 0, 1, 1], [], []>} : vector<2x32xf32>, vector<32x16xf32>, vector<2x16xf32> -> vector<2x16xf32>
    %c0_154 = arith.constant 0 : index
    %c0_155 = arith.constant 0 : index
    %143 = vector.load %arg15[%c0_154, %c0_155] : memref<1x16xf32, #tpu.memory_space<vmem>>, vector<1x16xf32>
    %144 = vector.broadcast %143 : vector<1x16xf32> to vector<2x16xf32>
    %145 = arith.addf %142, %144 : vector<2x16xf32>
    %c0_156 = arith.constant 0 : index
    %c0_157 = arith.constant 0 : index
    %146 = vector.load %arg16[%c0_156, %c0_157] : memref<32x16xf32, #tpu.memory_space<vmem>>, vector<32x16xf32>
    %cst_158 = arith.constant dense<0.000000e+00> : vector<2x16xf32>
    %147 = tpu.matmul %140, %146, %cst_158 {dimension_numbers = #tpu.dot_dimension_numbers<[1], [0], [0], [1], [0, 0, 1, 1], [], []>} : vector<2x32xf32>, vector<32x16xf32>, vector<2x16xf32> -> vector<2x16xf32>
    %c0_159 = arith.constant 0 : index
    %c0_160 = arith.constant 0 : index
    %148 = vector.load %arg17[%c0_159, %c0_160] : memref<1x16xf32, #tpu.memory_space<vmem>>, vector<1x16xf32>
    %149 = vector.broadcast %148 : vector<1x16xf32> to vector<2x16xf32>
    %150 = arith.addf %147, %149 : vector<2x16xf32>
    %c0_161 = arith.constant 0 : index
    %c0_162 = arith.constant 0 : index
    %151 = vector.load %arg18[%c0_161, %c0_162] : memref<32x16xf32, #tpu.memory_space<vmem>>, vector<32x16xf32>
    %cst_163 = arith.constant dense<0.000000e+00> : vector<2x16xf32>
    %152 = tpu.matmul %140, %151, %cst_163 {dimension_numbers = #tpu.dot_dimension_numbers<[1], [0], [0], [1], [0, 0, 1, 1], [], []>} : vector<2x32xf32>, vector<32x16xf32>, vector<2x16xf32> -> vector<2x16xf32>
    %c0_164 = arith.constant 0 : index
    %c0_165 = arith.constant 0 : index
    %153 = vector.load %arg19[%c0_164, %c0_165] : memref<1x16xf32, #tpu.memory_space<vmem>>, vector<1x16xf32>
    %154 = vector.broadcast %153 : vector<1x16xf32> to vector<2x16xf32>
    %155 = arith.addf %152, %154 : vector<2x16xf32>
    %cst_166 = arith.constant dense<0.000000e+00> : vector<2x2xf32>
    %156 = tpu.matmul %145, %150, %cst_166 {dimension_numbers = #tpu.dot_dimension_numbers<[1], [1], [0], [0], [0, 0, 1, 0], [], []>} : vector<2x16xf32>, vector<2x16xf32>, vector<2x2xf32> -> vector<2x2xf32>
    %cst_167 = arith.constant dense<0xFF800000> : vector<2xf32>
    %157 = vector.multi_reduction <maximumf>, %156, %cst_167 [1] : vector<2x2xf32> to vector<2xf32>
    %158 = vector.shape_cast %157 : vector<2xf32> to vector<2x1xf32>
    %159 = vector.broadcast %158 : vector<2x1xf32> to vector<2x2xf32>
    %160 = arith.subf %156, %159 : vector<2x2xf32>
    %161 = math.exp %160 : vector<2x2xf32>
    %cst_168 = arith.constant dense<0.000000e+00> : vector<2xf32>
    %162 = vector.multi_reduction <add>, %161, %cst_168 [1] : vector<2x2xf32> to vector<2xf32>
    %163 = vector.shape_cast %162 : vector<2xf32> to vector<2x1xf32>
    %164 = tpu.reciprocal %163 {approx = true} : vector<2x1xf32> -> vector<2x1xf32>
    %165 = vector.broadcast %164 : vector<2x1xf32> to vector<2x2xf32>
    %166 = arith.mulf %161, %165 : vector<2x2xf32>
    %cst_169 = arith.constant dense<0.000000e+00> : vector<2x16xf32>
    %167 = tpu.matmul %166, %155, %cst_169 {dimension_numbers = #tpu.dot_dimension_numbers<[1], [0], [0], [1], [0, 0, 1, 1], [], []>} : vector<2x2xf32>, vector<2x16xf32>, vector<2x16xf32> -> vector<2x16xf32>
    %c0_170 = arith.constant 0 : index
    %c0_171 = arith.constant 0 : index
    %168 = vector.load %arg20[%c0_170, %c0_171] : memref<16x32xf32, #tpu.memory_space<vmem>>, vector<16x32xf32>
    %cst_172 = arith.constant dense<0.000000e+00> : vector<2x32xf32>
    %169 = tpu.matmul %167, %168, %cst_172 {dimension_numbers = #tpu.dot_dimension_numbers<[1], [0], [0], [1], [0, 0, 1, 1], [], []>} : vector<2x16xf32>, vector<16x32xf32>, vector<2x32xf32> -> vector<2x32xf32>
    %c0_173 = arith.constant 0 : index
    %c0_174 = arith.constant 0 : index
    %170 = vector.load %arg21[%c0_173, %c0_174] : memref<1x32xf32, #tpu.memory_space<vmem>>, vector<1x32xf32>
    %171 = vector.broadcast %170 : vector<1x32xf32> to vector<2x32xf32>
    %172 = arith.addf %169, %171 : vector<2x32xf32>
    %173 = arith.addf %172, %140 : vector<2x32xf32>
    %c0_175 = arith.constant 0 : index
    %c0_176 = arith.constant 0 : index
    %174 = vector.load %arg22[%c0_175, %c0_176] : memref<32x96xf32, #tpu.memory_space<vmem>>, vector<32x96xf32>
    %cst_177 = arith.constant dense<0.000000e+00> : vector<2x96xf32>
    %175 = tpu.matmul %173, %174, %cst_177 {dimension_numbers = #tpu.dot_dimension_numbers<[1], [0], [0], [1], [0, 0, 1, 1], [], []>} : vector<2x32xf32>, vector<32x96xf32>, vector<2x96xf32> -> vector<2x96xf32>
    %c0_178 = arith.constant 0 : index
    %c0_179 = arith.constant 0 : index
    %176 = vector.load %arg24[%c0_178, %c0_179] : memref<1x96xf32, #tpu.memory_space<vmem>>, vector<1x96xf32>
    %177 = vector.broadcast %176 : vector<1x96xf32> to vector<2x96xf32>
    %178 = arith.addf %175, %177 : vector<2x96xf32>
    %c0_180 = arith.constant 0 : index
    %c0_181 = arith.constant 0 : index
    %179 = vector.load %arg25[%c0_180, %c0_181] : memref<1x96xf32, #tpu.memory_space<vmem>>, vector<1x96xf32>
    %cst_182 = arith.constant 0.000000e+00 : f32
    %180 = vector.broadcast %cst_182 : f32 to vector<1x32xf32>
    %181 = vector.extract_strided_slice %178 {offsets = [0, 0], sizes = [1, 96], strides = [1, 1]} : vector<2x96xf32> to vector<1x96xf32>
    %c0_183 = arith.constant 0 : index
    %c0_184 = arith.constant 0 : index
    %182 = vector.load %arg23[%c0_183, %c0_184] : memref<32x96xf32, #tpu.memory_space<vmem>>, vector<32x96xf32>
    %cst_185 = arith.constant dense<0.000000e+00> : vector<1x96xf32>
    %183 = tpu.matmul %180, %182, %cst_185 {dimension_numbers = #tpu.dot_dimension_numbers<[1], [0], [0], [1], [0, 0, 1, 1], [], []>} : vector<1x32xf32>, vector<32x96xf32>, vector<1x96xf32> -> vector<1x96xf32>
    %184 = arith.addf %183, %179 : vector<1x96xf32>
    %185 = vector.extract_strided_slice %181 {offsets = [0, 0], sizes = [1, 32], strides = [1, 1]} : vector<1x96xf32> to vector<1x32xf32>
    %186 = vector.extract_strided_slice %184 {offsets = [0, 0], sizes = [1, 32], strides = [1, 1]} : vector<1x96xf32> to vector<1x32xf32>
    %187 = arith.addf %185, %186 : vector<1x32xf32>
    %188 = arith.negf %187 : vector<1x32xf32>
    %189 = math.exp %188 : vector<1x32xf32>
    %cst_186 = arith.constant 1.000000e+00 : f32
    %190 = vector.broadcast %cst_186 : f32 to vector<1x32xf32>
    %191 = arith.addf %190, %189 : vector<1x32xf32>
    %192 = arith.divf %190, %191 : vector<1x32xf32>
    %193 = vector.extract_strided_slice %181 {offsets = [0, 32], sizes = [1, 32], strides = [1, 1]} : vector<1x96xf32> to vector<1x32xf32>
    %194 = vector.extract_strided_slice %184 {offsets = [0, 32], sizes = [1, 32], strides = [1, 1]} : vector<1x96xf32> to vector<1x32xf32>
    %195 = arith.addf %193, %194 : vector<1x32xf32>
    %196 = arith.negf %195 : vector<1x32xf32>
    %197 = math.exp %196 : vector<1x32xf32>
    %cst_187 = arith.constant 1.000000e+00 : f32
    %198 = vector.broadcast %cst_187 : f32 to vector<1x32xf32>
    %199 = arith.addf %198, %197 : vector<1x32xf32>
    %200 = arith.divf %198, %199 : vector<1x32xf32>
    %201 = vector.extract_strided_slice %181 {offsets = [0, 64], sizes = [1, 32], strides = [1, 1]} : vector<1x96xf32> to vector<1x32xf32>
    %202 = vector.extract_strided_slice %184 {offsets = [0, 64], sizes = [1, 32], strides = [1, 1]} : vector<1x96xf32> to vector<1x32xf32>
    %203 = arith.mulf %192, %202 : vector<1x32xf32>
    %204 = arith.addf %201, %203 : vector<1x32xf32>
    %205 = math.tanh %204 : vector<1x32xf32>
    %cst_188 = arith.constant 1.000000e+00 : f32
    %206 = vector.broadcast %cst_188 : f32 to vector<1x32xf32>
    %207 = arith.subf %206, %200 : vector<1x32xf32>
    %208 = arith.mulf %207, %205 : vector<1x32xf32>
    %209 = arith.mulf %200, %180 : vector<1x32xf32>
    %210 = arith.addf %208, %209 : vector<1x32xf32>
    %211 = vector.extract_strided_slice %178 {offsets = [1, 0], sizes = [1, 96], strides = [1, 1]} : vector<2x96xf32> to vector<1x96xf32>
    %c0_189 = arith.constant 0 : index
    %c0_190 = arith.constant 0 : index
    %212 = vector.load %arg23[%c0_189, %c0_190] : memref<32x96xf32, #tpu.memory_space<vmem>>, vector<32x96xf32>
    %cst_191 = arith.constant dense<0.000000e+00> : vector<1x96xf32>
    %213 = tpu.matmul %210, %212, %cst_191 {dimension_numbers = #tpu.dot_dimension_numbers<[1], [0], [0], [1], [0, 0, 1, 1], [], []>} : vector<1x32xf32>, vector<32x96xf32>, vector<1x96xf32> -> vector<1x96xf32>
    %214 = arith.addf %213, %179 : vector<1x96xf32>
    %215 = vector.extract_strided_slice %211 {offsets = [0, 0], sizes = [1, 32], strides = [1, 1]} : vector<1x96xf32> to vector<1x32xf32>
    %216 = vector.extract_strided_slice %214 {offsets = [0, 0], sizes = [1, 32], strides = [1, 1]} : vector<1x96xf32> to vector<1x32xf32>
    %217 = arith.addf %215, %216 : vector<1x32xf32>
    %218 = arith.negf %217 : vector<1x32xf32>
    %219 = math.exp %218 : vector<1x32xf32>
    %cst_192 = arith.constant 1.000000e+00 : f32
    %220 = vector.broadcast %cst_192 : f32 to vector<1x32xf32>
    %221 = arith.addf %220, %219 : vector<1x32xf32>
    %222 = arith.divf %220, %221 : vector<1x32xf32>
    %223 = vector.extract_strided_slice %211 {offsets = [0, 32], sizes = [1, 32], strides = [1, 1]} : vector<1x96xf32> to vector<1x32xf32>
    %224 = vector.extract_strided_slice %214 {offsets = [0, 32], sizes = [1, 32], strides = [1, 1]} : vector<1x96xf32> to vector<1x32xf32>
    %225 = arith.addf %223, %224 : vector<1x32xf32>
    %226 = arith.negf %225 : vector<1x32xf32>
    %227 = math.exp %226 : vector<1x32xf32>
    %cst_193 = arith.constant 1.000000e+00 : f32
    %228 = vector.broadcast %cst_193 : f32 to vector<1x32xf32>
    %229 = arith.addf %228, %227 : vector<1x32xf32>
    %230 = arith.divf %228, %229 : vector<1x32xf32>
    %231 = vector.extract_strided_slice %211 {offsets = [0, 64], sizes = [1, 32], strides = [1, 1]} : vector<1x96xf32> to vector<1x32xf32>
    %232 = vector.extract_strided_slice %214 {offsets = [0, 64], sizes = [1, 32], strides = [1, 1]} : vector<1x96xf32> to vector<1x32xf32>
    %233 = arith.mulf %222, %232 : vector<1x32xf32>
    %234 = arith.addf %231, %233 : vector<1x32xf32>
    %235 = math.tanh %234 : vector<1x32xf32>
    %cst_194 = arith.constant 1.000000e+00 : f32
    %236 = vector.broadcast %cst_194 : f32 to vector<1x32xf32>
    %237 = arith.subf %236, %230 : vector<1x32xf32>
    %238 = arith.mulf %237, %235 : vector<1x32xf32>
    %239 = arith.mulf %230, %210 : vector<1x32xf32>
    %240 = arith.addf %238, %239 : vector<1x32xf32>
    %c0_195 = arith.constant 0 : index
    %c0_196 = arith.constant 0 : index
    %241 = vector.load %arg26[%c0_195, %c0_196] : memref<32x32xf32, #tpu.memory_space<vmem>>, vector<32x32xf32>
    %cst_197 = arith.constant dense<0.000000e+00> : vector<1x32xf32>
    %242 = tpu.matmul %240, %241, %cst_197 {dimension_numbers = #tpu.dot_dimension_numbers<[1], [0], [0], [1], [0, 0, 1, 1], [], []>} : vector<1x32xf32>, vector<32x32xf32>, vector<1x32xf32> -> vector<1x32xf32>
    %c0_198 = arith.constant 0 : index
    %c0_199 = arith.constant 0 : index
    %243 = vector.load %arg27[%c0_198, %c0_199] : memref<1x32xf32, #tpu.memory_space<vmem>>, vector<1x32xf32>
    %244 = arith.addf %242, %243 : vector<1x32xf32>
    %cst_200 = arith.constant 0.000000e+00 : f32
    %245 = vector.broadcast %cst_200 : f32 to vector<1x32xf32>
    %246 = arith.maximumf %244, %245 : vector<1x32xf32>
    %c0_201 = arith.constant 0 : index
    %c0_202 = arith.constant 0 : index
    %247 = vector.load %arg28[%c0_201, %c0_202] : memref<32x128xf32, #tpu.memory_space<vmem>>, vector<32x128xf32>
    %cst_203 = arith.constant dense<0.000000e+00> : vector<1x128xf32>
    %248 = tpu.matmul %246, %247, %cst_203 {dimension_numbers = #tpu.dot_dimension_numbers<[1], [0], [0], [1], [0, 0, 1, 1], [], []>} : vector<1x32xf32>, vector<32x128xf32>, vector<1x128xf32> -> vector<1x128xf32>
    %c0_204 = arith.constant 0 : index
    %c0_205 = arith.constant 0 : index
    %249 = vector.load %arg29[%c0_204, %c0_205] : memref<1x128xf32, #tpu.memory_space<vmem>>, vector<1x128xf32>
    %250 = arith.addf %248, %249 : vector<1x128xf32>
    %c0_206 = arith.constant 0 : index
    %c0_207 = arith.constant 0 : index
    %251 = vector.load %arg30[%c0_206, %c0_207] : memref<1x1xf32, #tpu.memory_space<vmem>>, vector<1x1xf32>
    %252 = vector.broadcast %251 : vector<1x1xf32> to vector<1x128xf32>
    %253 = arith.mulf %250, %252 : vector<1x128xf32>
    %c0_208 = arith.constant 0 : index
    %c0_209 = arith.constant 0 : index
    %c0_210 = arith.constant 0 : index
    %254 = vector.load %arg31[%c0_208, %c0_209, %c0_210] : memref<1x1x128xf32, #tpu.memory_space<vmem>>, vector<1x1x128xf32>
    %255 = vector.shape_cast %254 : vector<1x1x128xf32> to vector<1x128xf32>
    %256 = vector.shape_cast %253 : vector<1x128xf32> to vector<1x1x128xf32>
    tpu.vector_store %arg31[%c0_208, %c0_209, %c0_210], %256 {strides = array<i32>} : memref<1x1x128xf32, #tpu.memory_space<vmem>>, vector<1x1x128xf32>,
    return
  }
  func.func @transform_0(%arg0: i32) -> (i32, i32, i32) {
    %c0_i32 = arith.constant 0 : i32
    %c0_i32_0 = arith.constant 0 : i32
    %c0_i32_1 = arith.constant 0 : i32
    return %arg0, %c0_i32, %c0_i32_0 : i32, i32, i32
  }
  func.func @transform_1(%arg0: i32) -> (i32, i32) {
    %c0_i32 = arith.constant 0 : i32
    %c0_i32_0 = arith.constant 0 : i32
    %c0_i32_1 = arith.constant 0 : i32
    return %c0_i32, %c0_i32_0 : i32, i32
  }
  func.func @transform_2(%arg0: i32) -> (i32, i32) {
    %c0_i32 = arith.constant 0 : i32
    %c0_i32_0 = arith.constant 0 : i32
    %c0_i32_1 = arith.constant 0 : i32
    return %c0_i32, %c0_i32_0 : i32, i32
  }
  func.func @transform_3(%arg0: i32) -> (i32, i32, i32) {
    %c0_i32 = arith.constant 0 : i32
    %c0_i32_0 = arith.constant 0 : i32
    %c0_i32_1 = arith.constant 0 : i32
    %c0_i32_2 = arith.constant 0 : i32
    return %c0_i32, %c0_i32_0, %c0_i32_1 : i32, i32, i32
  }
  func.func @transform_4(%arg0: i32) -> (i32, i32) {
    %c0_i32 = arith.constant 0 : i32
    %c0_i32_0 = arith.constant 0 : i32
    %c0_i32_1 = arith.constant 0 : i32
    return %c0_i32, %c0_i32_0 : i32, i32
  }
  func.func @transform_5(%arg0: i32) -> (i32, i32) {
    %c0_i32 = arith.constant 0 : i32
    %c0_i32_0 = arith.constant 0 : i32
    %c0_i32_1 = arith.constant 0 : i32
    return %c0_i32, %c0_i32_0 : i32, i32
  }
  func.func @transform_6(%arg0: i32) -> (i32, i32) {
    %c0_i32 = arith.constant 0 : i32
    %c0_i32_0 = arith.constant 0 : i32
    %c0_i32_1 = arith.constant 0 : i32
    return %c0_i32, %c0_i32_0 : i32, i32
  }
  func.func @transform_7(%arg0: i32) -> (i32, i32, i32) {
    %c0_i32 = arith.constant 0 : i32
    %c0_i32_0 = arith.constant 0 : i32
    %c0_i32_1 = arith.constant 0 : i32
    %c0_i32_2 = arith.constant 0 : i32
    return %c0_i32, %c0_i32_0, %c0_i32_1 : i32, i32, i32
  }
  func.func @transform_8(%arg0: i32) -> (i32, i32) {
    %c0_i32 = arith.constant 0 : i32
    %c0_i32_0 = arith.constant 0 : i32
    %c0_i32_1 = arith.constant 0 : i32
    return %c0_i32, %c0_i32_0 : i32, i32
  }
  func.func @transform_9(%arg0: i32) -> (i32, i32) {
    %c0_i32 = arith.constant 0 : i32
    %c0_i32_0 = arith.constant 0 : i32
    %c0_i32_1 = arith.constant 0 : i32
    return %c0_i32, %c0_i32_0 : i32, i32
  }
  func.func @transform_10(%arg0: i32) -> (i32, i32) {
    %c0_i32 = arith.constant 0 : i32
    %c0_i32_0 = arith.constant 0 : i32
    %c0_i32_1 = arith.constant 0 : i32
    return %c0_i32, %c0_i32_0 : i32, i32
  }
  func.func @transform_11(%arg0: i32) -> (i32, i32, i32) {
    %c0_i32 = arith.constant 0 : i32
    %c0_i32_0 = arith.constant 0 : i32
    %c0_i32_1 = arith.constant 0 : i32
    %c0_i32_2 = arith.constant 0 : i32
    return %c0_i32, %c0_i32_0, %c0_i32_1 : i32, i32, i32
  }
  func.func @transform_12(%arg0: i32) -> (i32, i32) {
    %c0_i32 = arith.constant 0 : i32
    %c0_i32_0 = arith.constant 0 : i32
    %c0_i32_1 = arith.constant 0 : i32
    return %c0_i32, %c0_i32_0 : i32, i32
  }
  func.func @transform_13(%arg0: i32) -> (i32, i32) {
    %c0_i32 = arith.constant 0 : i32
    %c0_i32_0 = arith.constant 0 : i32
    %c0_i32_1 = arith.constant 0 : i32
    return %c0_i32, %c0_i32_0 : i32, i32
  }
  func.func @transform_14(%arg0: i32) -> (i32, i32) {
    %c0_i32 = arith.constant 0 : i32
    %c0_i32_0 = arith.constant 0 : i32
    %c0_i32_1 = arith.constant 0 : i32
    return %c0_i32, %c0_i32_0 : i32, i32
  }
  func.func @transform_15(%arg0: i32) -> (i32, i32) {
    %c0_i32 = arith.constant 0 : i32
    %c0_i32_0 = arith.constant 0 : i32
    %c0_i32_1 = arith.constant 0 : i32
    return %c0_i32, %c0_i32_0 : i32, i32
  }
  func.func @transform_16(%arg0: i32) -> (i32, i32) {
    %c0_i32 = arith.constant 0 : i32
    %c0_i32_0 = arith.constant 0 : i32
    %c0_i32_1 = arith.constant 0 : i32
    return %c0_i32, %c0_i32_0 : i32, i32
  }
  func.func @transform_17(%arg0: i32) -> (i32, i32) {
    %c0_i32 = arith.constant 0 : i32
    %c0_i32_0 = arith.constant 0 : i32
    %c0_i32_1 = arith.constant 0 : i32
    return %c0_i32, %c0_i32_0 : i32, i32
  }
  func.func @transform_18(%arg0: i32) -> (i32, i32) {
    %c0_i32 = arith.constant 0 : i32
    %c0_i32_0 = arith.constant 0 : i32
    %c0_i32_1 = arith.constant 0 : i32
    return %c0_i32, %c0_i32_0 : i32, i32
  }
  func.func @transform_19(%arg0: i32) -> (i32, i32) {
    %c0_i32 = arith.constant 0 : i32
    %c0_i32_0 = arith.constant 0 : i32
    %c0_i32_1 = arith.constant 0 : i32
    return %c0_i32, %c0_i32_0 : i32, i32
  }
  func.func @transform_20(%arg0: i32) -> (i32, i32) {
    %c0_i32 = arith.constant 0 : i32
    %c0_i32_0 = arith.constant 0 : i32
    %c0_i32_1 = arith.constant 0 : i32
    return %c0_i32, %c0_i32_0 : i32, i32
  }
  func.func @transform_21(%arg0: i32) -> (i32, i32) {
    %c0_i32 = arith.constant 0 : i32
    %c0_i32_0 = arith.constant 0 : i32
    %c0_i32_1 = arith.constant 0 : i32
    return %c0_i32, %c0_i32_0 : i32, i32
  }
  func.func @transform_22(%arg0: i32) -> (i32, i32) {
    %c0_i32 = arith.constant 0 : i32
    %c0_i32_0 = arith.constant 0 : i32
    %c0_i32_1 = arith.constant 0 : i32
    return %c0_i32, %c0_i32_0 : i32, i32
  }
  func.func @transform_23(%arg0: i32) -> (i32, i32) {
    %c0_i32 = arith.constant 0 : i32
    %c0_i32_0 = arith.constant 0 : i32
    %c0_i32_1 = arith.constant 0 : i32
    return %c0_i32, %c0_i32_0 : i32, i32
  }
  func.func @transform_24(%arg0: i32) -> (i32, i32) {
    %c0_i32 = arith.constant 0 : i32
    %c0_i32_0 = arith.constant 0 : i32
    %c0_i32_1 = arith.constant 0 : i32
    return %c0_i32, %c0_i32_0 : i32, i32
  }
  func.func @transform_25(%arg0: i32) -> (i32, i32) {
    %c0_i32 = arith.constant 0 : i32
    %c0_i32_0 = arith.constant 0 : i32
    %c0_i32_1 = arith.constant 0 : i32
    return %c0_i32, %c0_i32_0 : i32, i32
  }
  func.func @transform_26(%arg0: i32) -> (i32, i32) {
    %c0_i32 = arith.constant 0 : i32
    %c0_i32_0 = arith.constant 0 : i32
    %c0_i32_1 = arith.constant 0 : i32
    return %c0_i32, %c0_i32_0 : i32, i32
  }
  func.func @transform_27(%arg0: i32) -> (i32, i32) {
    %c0_i32 = arith.constant 0 : i32
    %c0_i32_0 = arith.constant 0 : i32
    %c0_i32_1 = arith.constant 0 : i32
    return %c0_i32, %c0_i32_0 : i32, i32
  }
  func.func @transform_28(%arg0: i32) -> (i32, i32) {
    %c0_i32 = arith.constant 0 : i32
    %c0_i32_0 = arith.constant 0 : i32
    %c0_i32_1 = arith.constant 0 : i32
    return %c0_i32, %c0_i32_0 : i32, i32
  }
  func.func @transform_29(%arg0: i32) -> (i32, i32) {
    %c0_i32 = arith.constant 0 : i32
    %c0_i32_0 = arith.constant 0 : i32
    %c0_i32_1 = arith.constant 0 : i32
    return %c0_i32, %c0_i32_0 : i32, i32
  }
  func.func @transform_30(%arg0: i32) -> (i32, i32, i32) {
    %c0_i32 = arith.constant 0 : i32
    %c0_i32_0 = arith.constant 0 : i32
    %c0_i32_1 = arith.constant 0 : i32
    return %arg0, %c0_i32, %c0_i32_0 : i32, i32, i32
  }
}

</mosaic_0001>

<llo_original>
// kernel: _lambda_.1
$region0: #{_lambda_.1}
  #allocation0 [shape = 'u32[]', space=smem, size = 0x4, offset = 0x4, fixed_abs, tag = 'smem constant byte address 0x4 - core index']
  #allocation1 [shape = 'u32[144,128]{1,0:T(1,128)}', space=vmem, size = 0x12000, scoped, tag = 'internal scratch']
  #allocation2 [shape = 'f32[66,32]{1,0:T(8,128)}', space=vmem, size = 0x9000, scoped, tag = 'scratch operand']
  #allocation3 [shape = 'f32[60,32]{1,0:T(8,128)}', space=vmem, size = 0x8000, scoped, tag = 'scratch operand']
  #allocation4 [shape = 'f32[1,1]{1,0:T(1,128)S(1)}', space=vmem, size = 0x200, scoped, tag = 'scoped memory for _lambda_.1']
  %s0 = inlined_call_operand.smem [shape: u32[31], index: -1, kind: input, shape index: {}]
  %s1 = sld [smem:[%s0]]
  %s2 = scalar_lea.smem %s0, 1
  %s3 = sld [smem:[%s2]]
  %s4 = scalar_lea.smem %s0, 2
  %s5 = sld [smem:[%s4]]
  %s6 = scalar_lea.smem %s0, 3
  %s7 = sld [smem:[%s6]]
  %s8 = scalar_lea.smem %s0, 4
  %s9 = sld [smem:[%s8]]
  %s10 = scalar_lea.smem %s0, 5
  %s11 = sld [smem:[%s10]]
  %s12 = scalar_lea.smem %s0, 6
  %s13 = sld [smem:[%s12]]
  %s14 = scalar_lea.smem %s0, 7
  %s15 = sld [smem:[%s14]]
  %s16 = scalar_lea.smem %s0, 8
  %s17 = sld [smem:[%s16]]
  %s18 = scalar_lea.smem %s0, 9
  %s19 = sld [smem:[%s18]]
  %s20 = scalar_lea.smem %s0, 10
  %s21 = sld [smem:[%s20]]
  %s22 = scalar_lea.smem %s0, 11
  %s23 = sld [smem:[%s22]]
  %s24 = scalar_lea.smem %s0, 12
  %s25 = sld [smem:[%s24]]
  %s26 = scalar_lea.smem %s0, 13
  %s27 = sld [smem:[%s26]]
  %s28 = scalar_lea.smem %s0, 14
  %s29 = sld [smem:[%s28]]
  %s30 = scalar_lea.smem %s0, 15
  %s31 = sld [smem:[%s30]]
  %s32 = scalar_lea.smem %s0, 16
  %s33 = sld [smem:[%s32]]
  %s34 = scalar_lea.smem %s0, 17
  %s35 = sld [smem:[%s34]]
  %s36 = scalar_lea.smem %s0, 18
  %s37 = sld [smem:[%s36]]
  %s38 = scalar_lea.smem %s0, 19
  %s39 = sld [smem:[%s38]]
  %s40 = scalar_lea.smem %s0, 20
  %s41 = sld [smem:[%s40]]
  %s42 = scalar_lea.smem %s0, 21
  %s43 = sld [smem:[%s42]]
  %s44 = scalar_lea.smem %s0, 22
  %s45 = sld [smem:[%s44]]
  %s46 = scalar_lea.smem %s0, 23
  %s47 = sld [smem:[%s46]]
  %s48 = scalar_lea.smem %s0, 24
  %s49 = sld [smem:[%s48]]
  %s50 = scalar_lea.smem %s0, 25
  %s51 = sld [smem:[%s50]]
  %s52 = scalar_lea.smem %s0, 26
  %s53 = sld [smem:[%s52]]
  %s54 = scalar_lea.smem %s0, 27
  %s55 = sld [smem:[%s54]]
  %s56 = scalar_lea.smem %s0, 28
  %s57 = sld [smem:[%s56]]
  %s58 = scalar_lea.smem %s0, 29
  %s59 = sld [smem:[%s58]]
  %s60 = scalar_lea.smem %s0, 30
  %s61 = sld [smem:[%s60]]
  %s62 = sld [smem:[#allocation0]]
  $region229: #{_lambda_.1} parent=0
    _
  %s64 = ssub.s32 1, %s62
  %s65 = scalar_select 0, %s64, %s62
  %v66 = vstv %s59
  %67 = vst [vmem:[#allocation4] sm:$0x1] %v66
  $region1: #{_lambda_.1} parent=0
    #allocation5 [shape = 'u8[512]{0}', space=vmem, size = 0x400, scoped, tag = 'input window, operand 1, single buffered']
    #allocation6 [shape = 's32[2]{0}', space=sflag, size = 0x8, scoped, tag = 'scoped memory for _lambda_.1']
    #allocation7 [shape = 's32[2]{0}', space=sflag, size = 0x8, scoped, tag = 'scoped memory for _lambda_.1']
    #allocation8 [shape = 'u8[512]{0}', space=vmem, size = 0x400, scoped, tag = 'input window, operand 2, single buffered']
    #allocation9 [shape = 's32[1]{0}', space=sflag, size = 0x4, scoped, tag = 'scoped memory for _lambda_.1']
    #allocation10 [shape = 'u8[14336]{0}', space=vmem, size = 0x3800, scoped, tag = 'input window, operand 3, single buffered']
    #allocation11 [shape = 'u8[512]{0}', space=vmem, size = 0x400, scoped, tag = 'input window, operand 4, single buffered']
    #allocation12 [shape = 's32[1]{0}', space=sflag, size = 0x4, scoped, tag = 'scoped memory for _lambda_.1']
    #allocation13 [shape = 'u8[512]{0}', space=vmem, size = 0x400, scoped, tag = 'input window, operand 8, single buffered']
    #allocation14 [shape = 'u8[49152]{0}', space=vmem, size = 0xc000, scoped, tag = 'input window, operand 11, single buffered']
    #allocation15 [shape = 's32[1]{0}', space=sflag, size = 0x4, scoped, tag = 'scoped memory for _lambda_.1']
    #allocation16 [shape = 'u8[512]{0}', space=vmem, size = 0x400, scoped, tag = 'input window, operand 12, single buffered']
    #allocation17 [shape = 'u8[16384]{0}', space=vmem, size = 0x4000, scoped, tag = 'input window, operand 13, single buffered']
    #allocation18 [shape = 's32[1]{0}', space=sflag, size = 0x4, scoped, tag = 'scoped memory for _lambda_.1']
    #allocation19 [shape = 'u8[512]{0}', space=vmem, size = 0x400, scoped, tag = 'input window, operand 14, single buffered']
    #allocation20 [shape = 'u8[16384]{0}', space=vmem, size = 0x4000, scoped, tag = 'input window, operand 15, single buffered']
    #allocation21 [shape = 's32[1]{0}', space=sflag, size = 0x4, scoped, tag = 'scoped memory for _lambda_.1']
    #allocation22 [shape = 'u8[512]{0}', space=vmem, size = 0x400, scoped, tag = 'input window, operand 16, single buffered']
    #allocation23 [shape = 'u8[16384]{0}', space=vmem, size = 0x4000, scoped, tag = 'input window, operand 17, single buffered']
    #allocation24 [shape = 's32[1]{0}', space=sflag, size = 0x4, scoped, tag = 'scoped memory for _lambda_.1']
    #allocation25 [shape = 'u8[512]{0}', space=vmem, size = 0x400, scoped, tag = 'input window, operand 18, single buffered']
    #allocation26 [shape = 'u8[8192]{0}', space=vmem, size = 0x2000, scoped, tag = 'input window, operand 19, single buffered']
    #allocation27 [shape = 's32[1]{0}', space=sflag, size = 0x4, scoped, tag = 'scoped memory for _lambda_.1']
    #allocation28 [shape = 'u8[512]{0}', space=vmem, size = 0x400, scoped, tag = 'input window, operand 20, single buffered']
    #allocation29 [shape = 'u8[16384]{0}', space=vmem, size = 0x4000, scoped, tag = 'input window, operand 21, single buffered']
    #allocation30 [shape = 's32[1]{0}', space=sflag, size = 0x4, scoped, tag = 'scoped memory for _lambda_.1']
    #allocation31 [shape = 'u8[512]{0}', space=vmem, size = 0x400, scoped, tag = 'input window, operand 23, single buffered']
    #allocation32 [shape = 'u8[512]{0}', space=vmem, size = 0x400, scoped, tag = 'input window, operand 24, single buffered']
    #allocation33 [shape = 's32[1]{0}', space=sflag, size = 0x4, scoped, tag = 'scoped memory for _lambda_.1']
    #allocation34 [shape = 'u8[512]{0}', space=vmem, size = 0x400, scoped, tag = 'input window, operand 26, single buffered']
    #allocation35 [shape = 'u8[1024]{0}', space=vmem, size = 0x400, scoped, tag = 'output window, operand 0']
    %68 = vsyncpa [#allocation6], 0
    %69 = vsyncpa [#allocation9], 0
    %70 = vsyncpa [#allocation12], 0
    %71 = vsyncpa [#allocation15], 0
    %72 = vsyncpa [#allocation18], 0
    %73 = vsyncpa [#allocation21], 0
    %74 = vsyncpa [#allocation24], 0
    %75 = vsyncpa [#allocation27], 0
    %76 = vsyncpa [#allocation30], 0
    %77 = vsyncpa [#allocation33], 0
    %78 = vsyncpa [#allocation7], 0
    %s79 = scalar_lea.sflag [#allocation7], 1
    %80 = vsyncpa %s79, 0
    loop: start=0, step=1, limit=4
    $region2: #{_lambda_.1} parent=1 // loop_pre_header
      _
    $region3: #{_lambda_.1} parent=1 // loop_header
      %s82 = sphi 0, %s86
      %p83 = scmp.ge.s32.totalorder %s82, 4
      %s92 = sphi 0, %s94
      %s95 = sphi 0, %s92
      %s96 = sphi 0, %s95
      %s112 = sphi 0, %s96
      %s116 = sphi 0, %s116
      %s118 = sphi 0, %s116
      %s119 = sphi 0, %s118
      %s133 = sphi 0, %s119
      %s137 = sphi 0, %s137
      %s139 = sphi 0, %s137
      %s140 = sphi 0, %s139
      %s154 = sphi 0, %s140
      %s158 = sphi 0, %s158
      %s160 = sphi 0, %s158
      %s161 = sphi 0, %s160
      %s175 = sphi 0, %s161
      %s179 = sphi 0, %s179
      %s181 = sphi 0, %s179
      %s182 = sphi 0, %s181
      %s196 = sphi 0, %s182
      %s200 = sphi 0, %s200
      %s202 = sphi 0, %s200
      %s203 = sphi 0, %s202
      %s217 = sphi 0, %s203
      %s221 = sphi 0, %s221
      %s223 = sphi 0, %s221
      %s224 = sphi 0, %s223
      %s238 = sphi 0, %s224
      %s242 = sphi 0, %s242
      %s244 = sphi 0, %s242
      %s245 = sphi 0, %s244
      %s259 = sphi 0, %s245
      %s263 = sphi 0, %s263
      %s265 = sphi 0, %s263
      %s266 = sphi 0, %s265
      %s280 = sphi 0, %s266
      %s284 = sphi 0, %s284
      %s286 = sphi 0, %s284
      %s287 = sphi 0, %s286
      %s301 = sphi 0, %s287
      %s305 = sphi 0, %s305
      %s307 = sphi 0, %s305
      %s308 = sphi 0, %s307
      %s322 = sphi 0, %s308
      %s326 = sphi 0, %s326
      %s328 = sphi 0, %s326
      %s329 = sphi 0, %s328
      %s343 = sphi 0, %s329
      %s347 = sphi 0, %s347
      %s349 = sphi 0, %s347
      %s350 = sphi 0, %s349
      %s364 = sphi 0, %s350
      %s368 = sphi 0, %s368
      %s370 = sphi 0, %s368
      %s371 = sphi 0, %s370
      %s385 = sphi 0, %s371
      %s389 = sphi 0, %s389
      %s391 = sphi 0, %s389
      %s392 = sphi 0, %s391
      %s406 = sphi 0, %s392
      %s410 = sphi 0, %s410
      %s412 = sphi 0, %s410
      %s413 = sphi 0, %s412
      %s427 = sphi 0, %s413
      %s431 = sphi 0, %s431
      %s433 = sphi 0, %s431
      %s434 = sphi 0, %s433
      %s448 = sphi 0, %s434
      %s452 = sphi 0, %s452
      %s454 = sphi 0, %s452
      %s455 = sphi 0, %s454
      %s469 = sphi 0, %s455
      %s473 = sphi 0, %s473
      %s475 = sphi 0, %s473
      %s476 = sphi 0, %s475
      %s490 = sphi 0, %s476
      %s494 = sphi 0, %s494
      %s496 = sphi 0, %s494
      %s497 = sphi 0, %s496
      %s511 = sphi 0, %s497
      %s515 = sphi 0, %s515
      %s517 = sphi 0, %s515
      %s518 = sphi 0, %s517
      %s532 = sphi 0, %s518
      %s536 = sphi 0, %s536
      %s538 = sphi 0, %s536
      %s539 = sphi 0, %s538
      %s553 = sphi 0, %s539
      %s557 = sphi 0, %s557
      %s559 = sphi 0, %s557
      %s560 = sphi 0, %s559
      %s574 = sphi 0, %s560
      %s578 = sphi 0, %s578
      %s580 = sphi 0, %s578
      %s581 = sphi 0, %s580
      %s595 = sphi 0, %s581
      %s599 = sphi 0, %s599
      %s601 = sphi 0, %s599
      %s602 = sphi 0, %s601
      %s616 = sphi 0, %s602
      %s620 = sphi 0, %s620
      %s622 = sphi 0, %s620
      %s623 = sphi 0, %s622
      %s637 = sphi 0, %s623
      %s641 = sphi 0, %s641
      %s643 = sphi 0, %s641
      %s644 = sphi 0, %s643
      %s658 = sphi 0, %s644
      %s662 = sphi 0, %s662
      %s664 = sphi 0, %s662
      %s665 = sphi 0, %s664
      %s679 = sphi 0, %s665
      %s683 = sphi 0, %s683
      %s685 = sphi 0, %s683
      %s686 = sphi 0, %s685
      %s700 = sphi 0, %s686
      %s704 = sphi 0, %s704
      %s706 = sphi 0, %s704
      %s707 = sphi 0, %s706
      %s721 = sphi 0, %s707
      %s727 = sphi 0, %s729
      %s730 = sphi 0, %s727
      %s731 = sphi 0, %s730
      %s747 = sphi 0, %s731
    $region4: #{_lambda_.1} parent=1 // loop_header_branch
      %85 = sbr.rel (%p83) target = $region8
    $region5: #{_lambda_.1} parent=1 // loop_body
      %s87 = ssub.s32 %s82, 1
      %s88 = ssub.s32 %s82, 2
      %s89 = sadd.s32 %s82, 1
      %s90 = ssub.s32 %s82, %s89
      %p91 = scmp.eq.s32.totalorder %s90, 0
      %s93 = sadd.s32 %s92, 1
      %s94 = scalar_select %p91, %s92, %s93
      %p97 = pneg %p91
      %p98 = scmp.eq.s32.totalorder %s82, 1
      %p99 = por %p97, %p98
      %p100 = scmp.ne.s32.totalorder %s92, %s95
      %p101 = scmp.eq.s32.totalorder %s82, 0
      %p102 = por %p100, %p101
      %p103 = scmp.ne.s32.totalorder %s92, %s95
      %p104 = scmp.eq.s32.totalorder %s87, 1
      %p105 = por %p103, %p104
      %p106 = scmp.ne.s32.totalorder %s95, %s96
      %p107 = scmp.eq.s32.totalorder %s87, 0
      %p108 = por %p106, %p107
      %p109 = scmp.ne.s32.totalorder %s95, %s96
      %p110 = scmp.eq.s32.totalorder %s88, 1
      %p111 = por %p109, %p110
      %p113 = scmp.ne.s32.totalorder %s96, %s112
      %p114 = scmp.eq.s32.totalorder %s88, 0
      %p115 = por %p113, %p114
      %s117 = sadd.s32 %s116, 1
      %p120 = scmp.eq.s32.totalorder %s82, 1
      %p121 = scmp.ne.s32.totalorder %s116, %s118
      %p122 = scmp.eq.s32.totalorder %s82, 0
      %p123 = por %p121, %p122
      %p124 = scmp.ne.s32.totalorder %s116, %s118
      %p125 = scmp.eq.s32.totalorder %s87, 1
      %p126 = por %p124, %p125
      %p127 = scmp.ne.s32.totalorder %s118, %s119
      %p128 = scmp.eq.s32.totalorder %s87, 0
      %p129 = por %p127, %p128
      %p130 = scmp.ne.s32.totalorder %s118, %s119
      %p131 = scmp.eq.s32.totalorder %s88, 1
      %p132 = por %p130, %p131
      %p134 = scmp.ne.s32.totalorder %s119, %s133
      %p135 = scmp.eq.s32.totalorder %s88, 0
      %p136 = por %p134, %p135
      %s138 = sadd.s32 %s137, 1
      %p141 = scmp.eq.s32.totalorder %s82, 1
      %p142 = scmp.ne.s32.totalorder %s137, %s139
      %p143 = scmp.eq.s32.totalorder %s82, 0
      %p144 = por %p142, %p143
      %p145 = scmp.ne.s32.totalorder %s137, %s139
      %p146 = scmp.eq.s32.totalorder %s87, 1
      %p147 = por %p145, %p146
      %p148 = scmp.ne.s32.totalorder %s139, %s140
      %p149 = scmp.eq.s32.totalorder %s87, 0
      %p150 = por %p148, %p149
      %p151 = scmp.ne.s32.totalorder %s139, %s140
      %p152 = scmp.eq.s32.totalorder %s88, 1
      %p153 = por %p151, %p152
      %p155 = scmp.ne.s32.totalorder %s140, %s154
      %p156 = scmp.eq.s32.totalorder %s88, 0
      %p157 = por %p155, %p156
      %s159 = sadd.s32 %s158, 1
      %p162 = scmp.eq.s32.totalorder %s82, 1
      %p163 = scmp.ne.s32.totalorder %s158, %s160
      %p164 = scmp.eq.s32.totalorder %s82, 0
      %p165 = por %p163, %p164
      %p166 = scmp.ne.s32.totalorder %s158, %s160
      %p167 = scmp.eq.s32.totalorder %s87, 1
      %p168 = por %p166, %p167
      %p169 = scmp.ne.s32.totalorder %s160, %s161
      %p170 = scmp.eq.s32.totalorder %s87, 0
      %p171 = por %p169, %p170
      %p172 = scmp.ne.s32.totalorder %s160, %s161
      %p173 = scmp.eq.s32.totalorder %s88, 1
      %p174 = por %p172, %p173
      %p176 = scmp.ne.s32.totalorder %s161, %s175
      %p177 = scmp.eq.s32.totalorder %s88, 0
      %p178 = por %p176, %p177
      %s180 = sadd.s32 %s179, 1
      %p183 = scmp.eq.s32.totalorder %s82, 1
      %p184 = scmp.ne.s32.totalorder %s179, %s181
      %p185 = scmp.eq.s32.totalorder %s82, 0
      %p186 = por %p184, %p185
      %p187 = scmp.ne.s32.totalorder %s179, %s181
      %p188 = scmp.eq.s32.totalorder %s87, 1
      %p189 = por %p187, %p188
      %p190 = scmp.ne.s32.totalorder %s181, %s182
      %p191 = scmp.eq.s32.totalorder %s87, 0
      %p192 = por %p190, %p191
      %p193 = scmp.ne.s32.totalorder %s181, %s182
      %p194 = scmp.eq.s32.totalorder %s88, 1
      %p195 = por %p193, %p194
      %p197 = scmp.ne.s32.totalorder %s182, %s196
      %p198 = scmp.eq.s32.totalorder %s88, 0
      %p199 = por %p197, %p198
      %s201 = sadd.s32 %s200, 1
      %p204 = scmp.eq.s32.totalorder %s82, 1
      %p205 = scmp.ne.s32.totalorder %s200, %s202
      %p206 = scmp.eq.s32.totalorder %s82, 0
      %p207 = por %p205, %p206
      %p208 = scmp.ne.s32.totalorder %s200, %s202
      %p209 = scmp.eq.s32.totalorder %s87, 1
      %p210 = por %p208, %p209
      %p211 = scmp.ne.s32.totalorder %s202, %s203
      %p212 = scmp.eq.s32.totalorder %s87, 0
      %p213 = por %p211, %p212
      %p214 = scmp.ne.s32.totalorder %s202, %s203
      %p215 = scmp.eq.s32.totalorder %s88, 1
      %p216 = por %p214, %p215
      %p218 = scmp.ne.s32.totalorder %s203, %s217
      %p219 = scmp.eq.s32.totalorder %s88, 0
      %p220 = por %p218, %p219
      %s222 = sadd.s32 %s221, 1
      %p225 = scmp.eq.s32.totalorder %s82, 1
      %p226 = scmp.ne.s32.totalorder %s221, %s223
      %p227 = scmp.eq.s32.totalorder %s82, 0
      %p228 = por %p226, %p227
      %p229 = scmp.ne.s32.totalorder %s221, %s223
      %p230 = scmp.eq.s32.totalorder %s87, 1
      %p231 = por %p229, %p230
      %p232 = scmp.ne.s32.totalorder %s223, %s224
      %p233 = scmp.eq.s32.totalorder %s87, 0
      %p234 = por %p232, %p233
      %p235 = scmp.ne.s32.totalorder %s223, %s224
      %p236 = scmp.eq.s32.totalorder %s88, 1
      %p237 = por %p235, %p236
      %p239 = scmp.ne.s32.totalorder %s224, %s238
      %p240 = scmp.eq.s32.totalorder %s88, 0
      %p241 = por %p239, %p240
      %s243 = sadd.s32 %s242, 1
      %p246 = scmp.eq.s32.totalorder %s82, 1
      %p247 = scmp.ne.s32.totalorder %s242, %s244
      %p248 = scmp.eq.s32.totalorder %s82, 0
      %p249 = por %p247, %p248
      %p250 = scmp.ne.s32.totalorder %s242, %s244
      %p251 = scmp.eq.s32.totalorder %s87, 1
      %p252 = por %p250, %p251
      %p253 = scmp.ne.s32.totalorder %s244, %s245
      %p254 = scmp.eq.s32.totalorder %s87, 0
      %p255 = por %p253, %p254
      %p256 = scmp.ne.s32.totalorder %s244, %s245
      %p257 = scmp.eq.s32.totalorder %s88, 1
      %p258 = por %p256, %p257
      %p260 = scmp.ne.s32.totalorder %s245, %s259
      %p261 = scmp.eq.s32.totalorder %s88, 0
      %p262 = por %p260, %p261
      %s264 = sadd.s32 %s263, 1
      %p267 = scmp.eq.s32.totalorder %s82, 1
      %p268 = scmp.ne.s32.totalorder %s263, %s265
      %p269 = scmp.eq.s32.totalorder %s82, 0
      %p270 = por %p268, %p269
      %p271 = scmp.ne.s32.totalorder %s263, %s265
      %p272 = scmp.eq.s32.totalorder %s87, 1
      %p273 = por %p271, %p272
      %p274 = scmp.ne.s32.totalorder %s265, %s266
      %p275 = scmp.eq.s32.totalorder %s87, 0
      %p276 = por %p274, %p275
      %p277 = scmp.ne.s32.totalorder %s265, %s266
      %p278 = scmp.eq.s32.totalorder %s88, 1
      %p279 = por %p277, %p278
      %p281 = scmp.ne.s32.totalorder %s266, %s280
      %p282 = scmp.eq.s32.totalorder %s88, 0
      %p283 = por %p281, %p282
      %s285 = sadd.s32 %s284, 1
      %p288 = scmp.eq.s32.totalorder %s82, 1
      %p289 = scmp.ne.s32.totalorder %s284, %s286
      %p290 = scmp.eq.s32.totalorder %s82, 0
      %p291 = por %p289, %p290
      %p292 = scmp.ne.s32.totalorder %s284, %s286
      %p293 = scmp.eq.s32.totalorder %s87, 1
      %p294 = por %p292, %p293
      %p295 = scmp.ne.s32.totalorder %s286, %s287
      %p296 = scmp.eq.s32.totalorder %s87, 0
      %p297 = por %p295, %p296
      %p298 = scmp.ne.s32.totalorder %s286, %s287
      %p299 = scmp.eq.s32.totalorder %s88, 1
      %p300 = por %p298, %p299
      %p302 = scmp.ne.s32.totalorder %s287, %s301
      %p303 = scmp.eq.s32.totalorder %s88, 0
      %p304 = por %p302, %p303
      %s306 = sadd.s32 %s305, 1
      %p309 = scmp.eq.s32.totalorder %s82, 1
      %p310 = scmp.ne.s32.totalorder %s305, %s307
      %p311 = scmp.eq.s32.totalorder %s82, 0
      %p312 = por %p310, %p311
      %p313 = scmp.ne.s32.totalorder %s305, %s307
      %p314 = scmp.eq.s32.totalorder %s87, 1
      %p315 = por %p313, %p314
      %p316 = scmp.ne.s32.totalorder %s307, %s308
      %p317 = scmp.eq.s32.totalorder %s87, 0
      %p318 = por %p316, %p317
      %p319 = scmp.ne.s32.totalorder %s307, %s308
      %p320 = scmp.eq.s32.totalorder %s88, 1
      %p321 = por %p319, %p320
      %p323 = scmp.ne.s32.totalorder %s308, %s322
      %p324 = scmp.eq.s32.totalorder %s88, 0
      %p325 = por %p323, %p324
      %s327 = sadd.s32 %s326, 1
      %p330 = scmp.eq.s32.totalorder %s82, 1
      %p331 = scmp.ne.s32.totalorder %s326, %s328
      %p332 = scmp.eq.s32.totalorder %s82, 0
      %p333 = por %p331, %p332
      %p334 = scmp.ne.s32.totalorder %s326, %s328
      %p335 = scmp.eq.s32.totalorder %s87, 1
      %p336 = por %p334, %p335
      %p337 = scmp.ne.s32.totalorder %s328, %s329
      %p338 = scmp.eq.s32.totalorder %s87, 0
      %p339 = por %p337, %p338
      %p340 = scmp.ne.s32.totalorder %s328, %s329
      %p341 = scmp.eq.s32.totalorder %s88, 1
      %p342 = por %p340, %p341
      %p344 = scmp.ne.s32.totalorder %s329, %s343
      %p345 = scmp.eq.s32.totalorder %s88, 0
      %p346 = por %p344, %p345
      %s348 = sadd.s32 %s347, 1
      %p351 = scmp.eq.s32.totalorder %s82, 1
      %p352 = scmp.ne.s32.totalorder %s347, %s349
      %p353 = scmp.eq.s32.totalorder %s82, 0
      %p354 = por %p352, %p353
      %p355 = scmp.ne.s32.totalorder %s347, %s349
      %p356 = scmp.eq.s32.totalorder %s87, 1
      %p357 = por %p355, %p356
      %p358 = scmp.ne.s32.totalorder %s349, %s350
      %p359 = scmp.eq.s32.totalorder %s87, 0
      %p360 = por %p358, %p359
      %p361 = scmp.ne.s32.totalorder %s349, %s350
      %p362 = scmp.eq.s32.totalorder %s88, 1
      %p363 = por %p361, %p362
      %p365 = scmp.ne.s32.totalorder %s350, %s364
      %p366 = scmp.eq.s32.totalorder %s88, 0
      %p367 = por %p365, %p366
      %s369 = sadd.s32 %s368, 1
      %p372 = scmp.eq.s32.totalorder %s82, 1
      %p373 = scmp.ne.s32.totalorder %s368, %s370
      %p374 = scmp.eq.s32.totalorder %s82, 0
      %p375 = por %p373, %p374
      %p376 = scmp.ne.s32.totalorder %s368, %s370
      %p377 = scmp.eq.s32.totalorder %s87, 1
      %p378 = por %p376, %p377
      %p379 = scmp.ne.s32.totalorder %s370, %s371
      %p380 = scmp.eq.s32.totalorder %s87, 0
      %p381 = por %p379, %p380
      %p382 = scmp.ne.s32.totalorder %s370, %s371
      %p383 = scmp.eq.s32.totalorder %s88, 1
      %p384 = por %p382, %p383
      %p386 = scmp.ne.s32.totalorder %s371, %s385
      %p387 = scmp.eq.s32.totalorder %s88, 0
      %p388 = por %p386, %p387
      %s390 = sadd.s32 %s389, 1
      %p393 = scmp.eq.s32.totalorder %s82, 1
      %p394 = scmp.ne.s32.totalorder %s389, %s391
      %p395 = scmp.eq.s32.totalorder %s82, 0
      %p396 = por %p394, %p395
      %p397 = scmp.ne.s32.totalorder %s389, %s391
      %p398 = scmp.eq.s32.totalorder %s87, 1
      %p399 = por %p397, %p398
      %p400 = scmp.ne.s32.totalorder %s391, %s392
      %p401 = scmp.eq.s32.totalorder %s87, 0
      %p402 = por %p400, %p401
      %p403 = scmp.ne.s32.totalorder %s391, %s392
      %p404 = scmp.eq.s32.totalorder %s88, 1
      %p405 = por %p403, %p404
      %p407 = scmp.ne.s32.totalorder %s392, %s406
      %p408 = scmp.eq.s32.totalorder %s88, 0
      %p409 = por %p407, %p408
      %s411 = sadd.s32 %s410, 1
      %p414 = scmp.eq.s32.totalorder %s82, 1
      %p415 = scmp.ne.s32.totalorder %s410, %s412
      %p416 = scmp.eq.s32.totalorder %s82, 0
      %p417 = por %p415, %p416
      %p418 = scmp.ne.s32.totalorder %s410, %s412
      %p419 = scmp.eq.s32.totalorder %s87, 1
      %p420 = por %p418, %p419
      %p421 = scmp.ne.s32.totalorder %s412, %s413
      %p422 = scmp.eq.s32.totalorder %s87, 0
      %p423 = por %p421, %p422
      %p424 = scmp.ne.s32.totalorder %s412, %s413
      %p425 = scmp.eq.s32.totalorder %s88, 1
      %p426 = por %p424, %p425
      %p428 = scmp.ne.s32.totalorder %s413, %s427
      %p429 = scmp.eq.s32.totalorder %s88, 0
      %p430 = por %p428, %p429
      %s432 = sadd.s32 %s431, 1
      %p435 = scmp.eq.s32.totalorder %s82, 1
      %p436 = scmp.ne.s32.totalorder %s431, %s433
      %p437 = scmp.eq.s32.totalorder %s82, 0
      %p438 = por %p436, %p437
      %p439 = scmp.ne.s32.totalorder %s431, %s433
      %p440 = scmp.eq.s32.totalorder %s87, 1
      %p441 = por %p439, %p440
      %p442 = scmp.ne.s32.totalorder %s433, %s434
      %p443 = scmp.eq.s32.totalorder %s87, 0
      %p444 = por %p442, %p443
      %p445 = scmp.ne.s32.totalorder %s433, %s434
      %p446 = scmp.eq.s32.totalorder %s88, 1
      %p447 = por %p445, %p446
      %p449 = scmp.ne.s32.totalorder %s434, %s448
      %p450 = scmp.eq.s32.totalorder %s88, 0
      %p451 = por %p449, %p450
      %s453 = sadd.s32 %s452, 1
      %p456 = scmp.eq.s32.totalorder %s82, 1
      %p457 = scmp.ne.s32.totalorder %s452, %s454
      %p458 = scmp.eq.s32.totalorder %s82, 0
      %p459 = por %p457, %p458
      %p460 = scmp.ne.s32.totalorder %s452, %s454
      %p461 = scmp.eq.s32.totalorder %s87, 1
      %p462 = por %p460, %p461
      %p463 = scmp.ne.s32.totalorder %s454, %s455
      %p464 = scmp.eq.s32.totalorder %s87, 0
      %p465 = por %p463, %p464
      %p466 = scmp.ne.s32.totalorder %s454, %s455
      %p467 = scmp.eq.s32.totalorder %s88, 1
      %p468 = por %p466, %p467
      %p470 = scmp.ne.s32.totalorder %s455, %s469
      %p471 = scmp.eq.s32.totalorder %s88, 0
      %p472 = por %p470, %p471
      %s474 = sadd.s32 %s473, 1
      %p477 = scmp.eq.s32.totalorder %s82, 1
      %p478 = scmp.ne.s32.totalorder %s473, %s475
      %p479 = scmp.eq.s32.totalorder %s82, 0
      %p480 = por %p478, %p479
      %p481 = scmp.ne.s32.totalorder %s473, %s475
      %p482 = scmp.eq.s32.totalorder %s87, 1
      %p483 = por %p481, %p482
      %p484 = scmp.ne.s32.totalorder %s475, %s476
      %p485 = scmp.eq.s32.totalorder %s87, 0
      %p486 = por %p484, %p485
      %p487 = scmp.ne.s32.totalorder %s475, %s476
      %p488 = scmp.eq.s32.totalorder %s88, 1
      %p489 = por %p487, %p488
      %p491 = scmp.ne.s32.totalorder %s476, %s490
      %p492 = scmp.eq.s32.totalorder %s88, 0
      %p493 = por %p491, %p492
      %s495 = sadd.s32 %s494, 1
      %p498 = scmp.eq.s32.totalorder %s82, 1
      %p499 = scmp.ne.s32.totalorder %s494, %s496
      %p500 = scmp.eq.s32.totalorder %s82, 0
      %p501 = por %p499, %p500
      %p502 = scmp.ne.s32.totalorder %s494, %s496
      %p503 = scmp.eq.s32.totalorder %s87, 1
      %p504 = por %p502, %p503
      %p505 = scmp.ne.s32.totalorder %s496, %s497
      %p506 = scmp.eq.s32.totalorder %s87, 0
      %p507 = por %p505, %p506
      %p508 = scmp.ne.s32.totalorder %s496, %s497
      %p509 = scmp.eq.s32.totalorder %s88, 1
      %p510 = por %p508, %p509
      %p512 = scmp.ne.s32.totalorder %s497, %s511
      %p513 = scmp.eq.s32.totalorder %s88, 0
      %p514 = por %p512, %p513
      %s516 = sadd.s32 %s515, 1
      %p519 = scmp.eq.s32.totalorder %s82, 1
      %p520 = scmp.ne.s32.totalorder %s515, %s517
      %p521 = scmp.eq.s32.totalorder %s82, 0
      %p522 = por %p520, %p521
      %p523 = scmp.ne.s32.totalorder %s515, %s517
      %p524 = scmp.eq.s32.totalorder %s87, 1
      %p525 = por %p523, %p524
      %p526 = scmp.ne.s32.totalorder %s517, %s518
      %p527 = scmp.eq.s32.totalorder %s87, 0
      %p528 = por %p526, %p527
      %p529 = scmp.ne.s32.totalorder %s517, %s518
      %p530 = scmp.eq.s32.totalorder %s88, 1
      %p531 = por %p529, %p530
      %p533 = scmp.ne.s32.totalorder %s518, %s532
      %p534 = scmp.eq.s32.totalorder %s88, 0
      %p535 = por %p533, %p534
      %s537 = sadd.s32 %s536, 1
      %p540 = scmp.eq.s32.totalorder %s82, 1
      %p541 = scmp.ne.s32.totalorder %s536, %s538
      %p542 = scmp.eq.s32.totalorder %s82, 0
      %p543 = por %p541, %p542
      %p544 = scmp.ne.s32.totalorder %s536, %s538
      %p545 = scmp.eq.s32.totalorder %s87, 1
      %p546 = por %p544, %p545
      %p547 = scmp.ne.s32.totalorder %s538, %s539
      %p548 = scmp.eq.s32.totalorder %s87, 0
      %p549 = por %p547, %p548
      %p550 = scmp.ne.s32.totalorder %s538, %s539
      %p551 = scmp.eq.s32.totalorder %s88, 1
      %p552 = por %p550, %p551
      %p554 = scmp.ne.s32.totalorder %s539, %s553
      %p555 = scmp.eq.s32.totalorder %s88, 0
      %p556 = por %p554, %p555
      %s558 = sadd.s32 %s557, 1
      %p561 = scmp.eq.s32.totalorder %s82, 1
      %p562 = scmp.ne.s32.totalorder %s557, %s559
      %p563 = scmp.eq.s32.totalorder %s82, 0
      %p564 = por %p562, %p563
      %p565 = scmp.ne.s32.totalorder %s557, %s559
      %p566 = scmp.eq.s32.totalorder %s87, 1
      %p567 = por %p565, %p566
      %p568 = scmp.ne.s32.totalorder %s559, %s560
      %p569 = scmp.eq.s32.totalorder %s87, 0
      %p570 = por %p568, %p569
      %p571 = scmp.ne.s32.totalorder %s559, %s560
      %p572 = scmp.eq.s32.totalorder %s88, 1
      %p573 = por %p571, %p572
      %p575 = scmp.ne.s32.totalorder %s560, %s574
      %p576 = scmp.eq.s32.totalorder %s88, 0
      %p577 = por %p575, %p576
      %s579 = sadd.s32 %s578, 1
      %p582 = scmp.eq.s32.totalorder %s82, 1
      %p583 = scmp.ne.s32.totalorder %s578, %s580
      %p584 = scmp.eq.s32.totalorder %s82, 0
      %p585 = por %p583, %p584
      %p586 = scmp.ne.s32.totalorder %s578, %s580
      %p587 = scmp.eq.s32.totalorder %s87, 1
      %p588 = por %p586, %p587
      %p589 = scmp.ne.s32.totalorder %s580, %s581
      %p590 = scmp.eq.s32.totalorder %s87, 0
      %p591 = por %p589, %p590
      %p592 = scmp.ne.s32.totalorder %s580, %s581
      %p593 = scmp.eq.s32.totalorder %s88, 1
      %p594 = por %p592, %p593
      %p596 = scmp.ne.s32.totalorder %s581, %s595
      %p597 = scmp.eq.s32.totalorder %s88, 0
      %p598 = por %p596, %p597
      %s600 = sadd.s32 %s599, 1
      %p603 = scmp.eq.s32.totalorder %s82, 1
      %p604 = scmp.ne.s32.totalorder %s599, %s601
      %p605 = scmp.eq.s32.totalorder %s82, 0
      %p606 = por %p604, %p605
      %p607 = scmp.ne.s32.totalorder %s599, %s601
      %p608 = scmp.eq.s32.totalorder %s87, 1
      %p609 = por %p607, %p608
      %p610 = scmp.ne.s32.totalorder %s601, %s602
      %p611 = scmp.eq.s32.totalorder %s87, 0
      %p612 = por %p610, %p611
      %p613 = scmp.ne.s32.totalorder %s601, %s602
      %p614 = scmp.eq.s32.totalorder %s88, 1
      %p615 = por %p613, %p614
      %p617 = scmp.ne.s32.totalorder %s602, %s616
      %p618 = scmp.eq.s32.totalorder %s88, 0
      %p619 = por %p617, %p618
      %s621 = sadd.s32 %s620, 1
      %p624 = scmp.eq.s32.totalorder %s82, 1
      %p625 = scmp.ne.s32.totalorder %s620, %s622
      %p626 = scmp.eq.s32.totalorder %s82, 0
      %p627 = por %p625, %p626
      %p628 = scmp.ne.s32.totalorder %s620, %s622
      %p629 = scmp.eq.s32.totalorder %s87, 1
      %p630 = por %p628, %p629
      %p631 = scmp.ne.s32.totalorder %s622, %s623
      %p632 = scmp.eq.s32.totalorder %s87, 0
      %p633 = por %p631, %p632
      %p634 = scmp.ne.s32.totalorder %s622, %s623
      %p635 = scmp.eq.s32.totalorder %s88, 1
      %p636 = por %p634, %p635
      %p638 = scmp.ne.s32.totalorder %s623, %s637
      %p639 = scmp.eq.s32.totalorder %s88, 0
      %p640 = por %p638, %p639
      %s642 = sadd.s32 %s641, 1
      %p645 = scmp.eq.s32.totalorder %s82, 1
      %p646 = scmp.ne.s32.totalorder %s641, %s643
      %p647 = scmp.eq.s32.totalorder %s82, 0
      %p648 = por %p646, %p647
      %p649 = scmp.ne.s32.totalorder %s641, %s643
      %p650 = scmp.eq.s32.totalorder %s87, 1
      %p651 = por %p649, %p650
      %p652 = scmp.ne.s32.totalorder %s643, %s644
      %p653 = scmp.eq.s32.totalorder %s87, 0
      %p654 = por %p652, %p653
      %p655 = scmp.ne.s32.totalorder %s643, %s644
      %p656 = scmp.eq.s32.totalorder %s88, 1
      %p657 = por %p655, %p656
      %p659 = scmp.ne.s32.totalorder %s644, %s658
      %p660 = scmp.eq.s32.totalorder %s88, 0
      %p661 = por %p659, %p660
      %s663 = sadd.s32 %s662, 1
      %p666 = scmp.eq.s32.totalorder %s82, 1
      %p667 = scmp.ne.s32.totalorder %s662, %s664
      %p668 = scmp.eq.s32.totalorder %s82, 0
      %p669 = por %p667, %p668
      %p670 = scmp.ne.s32.totalorder %s662, %s664
      %p671 = scmp.eq.s32.totalorder %s87, 1
      %p672 = por %p670, %p671
      %p673 = scmp.ne.s32.totalorder %s664, %s665
      %p674 = scmp.eq.s32.totalorder %s87, 0
      %p675 = por %p673, %p674
      %p676 = scmp.ne.s32.totalorder %s664, %s665
      %p677 = scmp.eq.s32.totalorder %s88, 1
      %p678 = por %p676, %p677
      %p680 = scmp.ne.s32.totalorder %s665, %s679
      %p681 = scmp.eq.s32.totalorder %s88, 0
      %p682 = por %p680, %p681
      %s684 = sadd.s32 %s683, 1
      %p687 = scmp.eq.s32.totalorder %s82, 1
      %p688 = scmp.ne.s32.totalorder %s683, %s685
      %p689 = scmp.eq.s32.totalorder %s82, 0
      %p690 = por %p688, %p689
      %p691 = scmp.ne.s32.totalorder %s683, %s685
      %p692 = scmp.eq.s32.totalorder %s87, 1
      %p693 = por %p691, %p692
      %p694 = scmp.ne.s32.totalorder %s685, %s686
      %p695 = scmp.eq.s32.totalorder %s87, 0
      %p696 = por %p694, %p695
      %p697 = scmp.ne.s32.totalorder %s685, %s686
      %p698 = scmp.eq.s32.totalorder %s88, 1
      %p699 = por %p697, %p698
      %p701 = scmp.ne.s32.totalorder %s686, %s700
      %p702 = scmp.eq.s32.totalorder %s88, 0
      %p703 = por %p701, %p702
      %s705 = sadd.s32 %s704, 1
      %p708 = scmp.eq.s32.totalorder %s82, 1
      %p709 = scmp.ne.s32.totalorder %s704, %s706
      %p710 = scmp.eq.s32.totalorder %s82, 0
      %p711 = por %p709, %p710
      %p712 = scmp.ne.s32.totalorder %s704, %s706
      %p713 = scmp.eq.s32.totalorder %s87, 1
      %p714 = por %p712, %p713
      %p715 = scmp.ne.s32.totalorder %s706, %s707
      %p716 = scmp.eq.s32.totalorder %s87, 0
      %p717 = por %p715, %p716
      %p718 = scmp.ne.s32.totalorder %s706, %s707
      %p719 = scmp.eq.s32.totalorder %s88, 1
      %p720 = por %p718, %p719
      %p722 = scmp.ne.s32.totalorder %s707, %s721
      %p723 = scmp.eq.s32.totalorder %s88, 0
      %p724 = por %p722, %p723
      %s725 = ssub.s32 %s82, %s89
      %p726 = scmp.eq.s32.totalorder %s725, 0
      %s728 = sadd.s32 %s727, 1
      %s729 = scalar_select %p726, %s727, %s728
      %p732 = pneg %p726
      %p733 = scmp.eq.s32.totalorder %s82, 1
      %p734 = por %p732, %p733
      %p735 = scmp.ne.s32.totalorder %s727, %s730
      %p736 = scmp.eq.s32.totalorder %s82, 0
      %p737 = por %p735, %p736
      %p738 = scmp.ne.s32.totalorder %s727, %s730
      %p739 = scmp.eq.s32.totalorder %s87, 1
      %p740 = por %p738, %p739
      %p741 = scmp.ne.s32.totalorder %s730, %s731
      %p742 = scmp.eq.s32.totalorder %s87, 0
      %p743 = por %p741, %p742
      %p744 = scmp.ne.s32.totalorder %s730, %s731
      %p745 = scmp.eq.s32.totalorder %s88, 1
      %p746 = por %p744, %p745
      %p748 = scmp.ne.s32.totalorder %s731, %s747
      %p749 = scmp.eq.s32.totalorder %s88, 0
      %p750 = por %p748, %p749
      %p751 = scmp.le.s32.totalorder 1, %s82
      %p752 = scmp.lt.s32.totalorder %s82, 3
      %p753 = pnand %p751, %p752
      %p754 = pneg %p753
      // Predicated region
      $region9: #{_lambda_.1} parent=5 // pred_check
        _
      $region10: #{_lambda_.1} parent=5 // pred_check_branch
        %756 = sbr.rel (%p753) target = $region12
      $region11: #{_lambda_.1} parent=5 // pred_region
        %s757 = ssub.s32 %s82, 1
        // Predicated region
        $region13: #{_lambda_.1} parent=11 // pred_check
          %p758 = pneg %p129
        $region14: #{_lambda_.1} parent=11 // pred_check_branch
          %760 = sbr.rel (%p758) target = $region16
        $region15: #{_lambda_.1} parent=11 // pred_region
          %s762 = ssub.s32 16, 16
          %763 = vsyncadd [#allocation6], %s762
          %s765 = sshll.u32 [#allocation5], 4
          %s766 = int_to_ptr.vmem [resolvable:$true] %s765
          %768 = dma.hbm_to_vmem [thread:$0]  %s3, 16, %s766, [#allocation6]
        $region16: #{_lambda_.1} parent=11 // pred_fallthru
          _
        // Predicated region
        $region17: #{_lambda_.1} parent=11 // pred_check
          %p769 = pneg %p150
        $region18: #{_lambda_.1} parent=11 // pred_check_branch
          %771 = sbr.rel (%p769) target = $region20
        $region19: #{_lambda_.1} parent=11 // pred_region
          %s773 = ssub.s32 16, 16
          %774 = vsyncadd [#allocation9], %s773
          %s776 = sshll.u32 [#allocation8], 4
          %s777 = int_to_ptr.vmem [resolvable:$true] %s776
          %779 = dma.hbm_to_vmem [thread:$0]  %s5, 16, %s777, [#allocation9]
        $region20: #{_lambda_.1} parent=11 // pred_fallthru
          _
        // Predicated region
        $region21: #{_lambda_.1} parent=11 // pred_check
          %p780 = pneg %p171
        $region22: #{_lambda_.1} parent=11 // pred_check_branch
          %782 = sbr.rel (%p780) target = $region24
        $region23: #{_lambda_.1} parent=11 // pred_region
          %s784 = ssub.s32 448, 448
          %785 = vsyncadd [#allocation9], %s784
          %s786 = sshll.u32 [#allocation10], 4
          %s787 = int_to_ptr.vmem [resolvable:$true] %s786
          %792 = dma.hbm_to_vmem [thread:$0]  %s7, 448, %s787, [#allocation9], 64, 64, 4
        $region24: #{_lambda_.1} parent=11 // pred_fallthru
          _
        // Predicated region
        $region25: #{_lambda_.1} parent=11 // pred_check
          %p793 = pneg %p192
        $region26: #{_lambda_.1} parent=11 // pred_check_branch
          %795 = sbr.rel (%p793) target = $region28
        $region27: #{_lambda_.1} parent=11 // pred_region
          %s797 = ssub.s32 16, 16
          %798 = vsyncadd [#allocation12], %s797
          %s800 = sshll.u32 [#allocation11], 4
          %s801 = int_to_ptr.vmem [resolvable:$true] %s800
          %803 = dma.hbm_to_vmem [thread:$0]  %s9, 16, %s801, [#allocation12]
        $region28: #{_lambda_.1} parent=11 // pred_fallthru
          _
        // Predicated region
        $region29: #{_lambda_.1} parent=11 // pred_check
          %p804 = pneg %p213
        $region30: #{_lambda_.1} parent=11 // pred_check_branch
          %806 = sbr.rel (%p804) target = $region32
        $region31: #{_lambda_.1} parent=11 // pred_region
          _
        $region32: #{_lambda_.1} parent=11 // pred_fallthru
          _
        // Predicated region
        $region33: #{_lambda_.1} parent=11 // pred_check
          %p807 = pneg %p234
        $region34: #{_lambda_.1} parent=11 // pred_check_branch
          %809 = sbr.rel (%p807) target = $region36
        $region35: #{_lambda_.1} parent=11 // pred_region
          _
        $region36: #{_lambda_.1} parent=11 // pred_fallthru
          _
        // Predicated region
        $region37: #{_lambda_.1} parent=11 // pred_check
          %p810 = pneg %p255
        $region38: #{_lambda_.1} parent=11 // pred_check_branch
          %812 = sbr.rel (%p810) target = $region40
        $region39: #{_lambda_.1} parent=11 // pred_region
          _
        $region40: #{_lambda_.1} parent=11 // pred_fallthru
          _
        // Predicated region
        $region41: #{_lambda_.1} parent=11 // pred_check
          %p813 = pneg %p276
        $region42: #{_lambda_.1} parent=11 // pred_check_branch
          %815 = sbr.rel (%p813) target = $region44
        $region43: #{_lambda_.1} parent=11 // pred_region
          %s817 = ssub.s32 16, 16
          %818 = vsyncadd [#allocation12], %s817
          %s820 = sshll.u32 [#allocation13], 4
          %s821 = int_to_ptr.vmem [resolvable:$true] %s820
          %823 = dma.hbm_to_vmem [thread:$0]  %s17, 16, %s821, [#allocation12]
        $region44: #{_lambda_.1} parent=11 // pred_fallthru
          _
        // Predicated region
        $region45: #{_lambda_.1} parent=11 // pred_check
          %p824 = pneg %p297
        $region46: #{_lambda_.1} parent=11 // pred_check_branch
          %826 = sbr.rel (%p824) target = $region48
        $region47: #{_lambda_.1} parent=11 // pred_region
          _
        $region48: #{_lambda_.1} parent=11 // pred_fallthru
          _
        // Predicated region
        $region49: #{_lambda_.1} parent=11 // pred_check
          %p827 = pneg %p318
        $region50: #{_lambda_.1} parent=11 // pred_check_branch
          %829 = sbr.rel (%p827) target = $region52
        $region51: #{_lambda_.1} parent=11 // pred_region
          _
        $region52: #{_lambda_.1} parent=11 // pred_fallthru
          _
        // Predicated region
        $region53: #{_lambda_.1} parent=11 // pred_check
          %p830 = pneg %p339
        $region54: #{_lambda_.1} parent=11 // pred_check_branch
          %832 = sbr.rel (%p830) target = $region56
        $region55: #{_lambda_.1} parent=11 // pred_region
          %s834 = ssub.s32 1536, 1536
          %835 = vsyncadd [#allocation15], %s834
          %s836 = sshll.u32 [#allocation14], 4
          %s837 = int_to_ptr.vmem [resolvable:$true] %s836
          %842 = dma.hbm_to_vmem [thread:$0]  %s23, 1536, %s837, [#allocation15], 128, 128, 8
        $region56: #{_lambda_.1} parent=11 // pred_fallthru
          _
        // Predicated region
        $region57: #{_lambda_.1} parent=11 // pred_check
          %p843 = pneg %p360
        $region58: #{_lambda_.1} parent=11 // pred_check_branch
          %845 = sbr.rel (%p843) target = $region60
        $region59: #{_lambda_.1} parent=11 // pred_region
          %s847 = ssub.s32 16, 16
          %848 = vsyncadd [#allocation15], %s847
          %s850 = sshll.u32 [#allocation16], 4
          %s851 = int_to_ptr.vmem [resolvable:$true] %s850
          %853 = dma.hbm_to_vmem [thread:$0]  %s25, 16, %s851, [#allocation15]
        $region60: #{_lambda_.1} parent=11 // pred_fallthru
          _
        // Predicated region
        $region61: #{_lambda_.1} parent=11 // pred_check
          %p854 = pneg %p381
        $region62: #{_lambda_.1} parent=11 // pred_check_branch
          %856 = sbr.rel (%p854) target = $region64
        $region63: #{_lambda_.1} parent=11 // pred_region
          %s858 = ssub.s32 512, 512
          %859 = vsyncadd [#allocation18], %s858
          %s860 = sshll.u32 [#allocation17], 4
          %s861 = int_to_ptr.vmem [resolvable:$true] %s860
          %866 = dma.hbm_to_vmem [thread:$0]  %s27, 512, %s861, [#allocation18], 128, 128, 8
        $region64: #{_lambda_.1} parent=11 // pred_fallthru
          _
        // Predicated region
        $region65: #{_lambda_.1} parent=11 // pred_check
          %p867 = pneg %p402
        $region66: #{_lambda_.1} parent=11 // pred_check_branch
          %869 = sbr.rel (%p867) target = $region68
        $region67: #{_lambda_.1} parent=11 // pred_region
          %s871 = ssub.s32 16, 16
          %872 = vsyncadd [#allocation18], %s871
          %s874 = sshll.u32 [#allocation19], 4
          %s875 = int_to_ptr.vmem [resolvable:$true] %s874
          %877 = dma.hbm_to_vmem [thread:$0]  %s29, 16, %s875, [#allocation18]
        $region68: #{_lambda_.1} parent=11 // pred_fallthru
          _
        // Predicated region
        $region69: #{_lambda_.1} parent=11 // pred_check
          %p878 = pneg %p423
        $region70: #{_lambda_.1} parent=11 // pred_check_branch
          %880 = sbr.rel (%p878) target = $region72
        $region71: #{_lambda_.1} parent=11 // pred_region
          %s882 = ssub.s32 512, 512
          %883 = vsyncadd [#allocation21], %s882
          %s884 = sshll.u32 [#allocation20], 4
          %s885 = int_to_ptr.vmem [resolvable:$true] %s884
          %890 = dma.hbm_to_vmem [thread:$0]  %s31, 512, %s885, [#allocation21], 128, 128, 8
        $region72: #{_lambda_.1} parent=11 // pred_fallthru
          _
        // Predicated region
        $region73: #{_lambda_.1} parent=11 // pred_check
          %p891 = pneg %p444
        $region74: #{_lambda_.1} parent=11 // pred_check_branch
          %893 = sbr.rel (%p891) target = $region76
        $region75: #{_lambda_.1} parent=11 // pred_region
          %s895 = ssub.s32 16, 16
          %896 = vsyncadd [#allocation21], %s895
          %s898 = sshll.u32 [#allocation22], 4
          %s899 = int_to_ptr.vmem [resolvable:$true] %s898
          %901 = dma.hbm_to_vmem [thread:$0]  %s33, 16, %s899, [#allocation21]
        $region76: #{_lambda_.1} parent=11 // pred_fallthru
          _
        // Predicated region
        $region77: #{_lambda_.1} parent=11 // pred_check
          %p902 = pneg %p465
        $region78: #{_lambda_.1} parent=11 // pred_check_branch
          %904 = sbr.rel (%p902) target = $region80
        $region79: #{_lambda_.1} parent=11 // pred_region
          %s906 = ssub.s32 512, 512
          %907 = vsyncadd [#allocation24], %s906
          %s908 = sshll.u32 [#allocation23], 4
          %s909 = int_to_ptr.vmem [resolvable:$true] %s908
          %914 = dma.hbm_to_vmem [thread:$0]  %s35, 512, %s909, [#allocation24], 128, 128, 8
        $region80: #{_lambda_.1} parent=11 // pred_fallthru
          _
        // Predicated region
        $region81: #{_lambda_.1} parent=11 // pred_check
          %p915 = pneg %p486
        $region82: #{_lambda_.1} parent=11 // pred_check_branch
          %917 = sbr.rel (%p915) target = $region84
        $region83: #{_lambda_.1} parent=11 // pred_region
          %s919 = ssub.s32 16, 16
          %920 = vsyncadd [#allocation24], %s919
          %s922 = sshll.u32 [#allocation25], 4
          %s923 = int_to_ptr.vmem [resolvable:$true] %s922
          %925 = dma.hbm_to_vmem [thread:$0]  %s37, 16, %s923, [#allocation24]
        $region84: #{_lambda_.1} parent=11 // pred_fallthru
          _
        // Predicated region
        $region85: #{_lambda_.1} parent=11 // pred_check
          %p926 = pneg %p507
        $region86: #{_lambda_.1} parent=11 // pred_check_branch
          %928 = sbr.rel (%p926) target = $region88
        $region87: #{_lambda_.1} parent=11 // pred_region
          %s930 = ssub.s32 256, 256
          %931 = vsyncadd [#allocation27], %s930
          %s932 = sshll.u32 [#allocation26], 4
          %s933 = int_to_ptr.vmem [resolvable:$true] %s932
          %938 = dma.hbm_to_vmem [thread:$0]  %s39, 256, %s933, [#allocation27], 128, 128, 8
        $region88: #{_lambda_.1} parent=11 // pred_fallthru
          _
        // Predicated region
        $region89: #{_lambda_.1} parent=11 // pred_check
          %p939 = pneg %p528
        $region90: #{_lambda_.1} parent=11 // pred_check_branch
          %941 = sbr.rel (%p939) target = $region92
        $region91: #{_lambda_.1} parent=11 // pred_region
          %s943 = ssub.s32 16, 16
          %944 = vsyncadd [#allocation27], %s943
          %s946 = sshll.u32 [#allocation28], 4
          %s947 = int_to_ptr.vmem [resolvable:$true] %s946
          %949 = dma.hbm_to_vmem [thread:$0]  %s41, 16, %s947, [#allocation27]
        $region92: #{_lambda_.1} parent=11 // pred_fallthru
          _
        // Predicated region
        $region93: #{_lambda_.1} parent=11 // pred_check
          %p950 = pneg %p549
        $region94: #{_lambda_.1} parent=11 // pred_check_branch
          %952 = sbr.rel (%p950) target = $region96
        $region95: #{_lambda_.1} parent=11 // pred_region
          %s954 = ssub.s32 512, 512
          %955 = vsyncadd [#allocation30], %s954
          %s956 = sshll.u32 [#allocation29], 4
          %s957 = int_to_ptr.vmem [resolvable:$true] %s956
          %962 = dma.hbm_to_vmem [thread:$0]  %s43, 512, %s957, [#allocation30], 128, 128, 8
        $region96: #{_lambda_.1} parent=11 // pred_fallthru
          _
        // Predicated region
        $region97: #{_lambda_.1} parent=11 // pred_check
          %p963 = pneg %p570
        $region98: #{_lambda_.1} parent=11 // pred_check_branch
          %965 = sbr.rel (%p963) target = $region100
        $region99: #{_lambda_.1} parent=11 // pred_region
          _
        $region100: #{_lambda_.1} parent=11 // pred_fallthru
          _
        // Predicated region
        $region101: #{_lambda_.1} parent=11 // pred_check
          %p966 = pneg %p591
        $region102: #{_lambda_.1} parent=11 // pred_check_branch
          %968 = sbr.rel (%p966) target = $region104
        $region103: #{_lambda_.1} parent=11 // pred_region
          %s970 = ssub.s32 16, 16
          %971 = vsyncadd [#allocation30], %s970
          %s973 = sshll.u32 [#allocation31], 4
          %s974 = int_to_ptr.vmem [resolvable:$true] %s973
          %976 = dma.hbm_to_vmem [thread:$0]  %s47, 16, %s974, [#allocation30]
        $region104: #{_lambda_.1} parent=11 // pred_fallthru
          _
        // Predicated region
        $region105: #{_lambda_.1} parent=11 // pred_check
          %p977 = pneg %p612
        $region106: #{_lambda_.1} parent=11 // pred_check_branch
          %979 = sbr.rel (%p977) target = $region108
        $region107: #{_lambda_.1} parent=11 // pred_region
          %s981 = ssub.s32 16, 16
          %982 = vsyncadd [#allocation33], %s981
          %s984 = sshll.u32 [#allocation32], 4
          %s985 = int_to_ptr.vmem [resolvable:$true] %s984
          %987 = dma.hbm_to_vmem [thread:$0]  %s49, 16, %s985, [#allocation33]
        $region108: #{_lambda_.1} parent=11 // pred_fallthru
          _
        // Predicated region
        $region109: #{_lambda_.1} parent=11 // pred_check
          %p988 = pneg %p633
        $region110: #{_lambda_.1} parent=11 // pred_check_branch
          %990 = sbr.rel (%p988) target = $region112
        $region111: #{_lambda_.1} parent=11 // pred_region
          _
        $region112: #{_lambda_.1} parent=11 // pred_fallthru
          _
        // Predicated region
        $region113: #{_lambda_.1} parent=11 // pred_check
          %p991 = pneg %p654
        $region114: #{_lambda_.1} parent=11 // pred_check_branch
          %993 = sbr.rel (%p991) target = $region116
        $region115: #{_lambda_.1} parent=11 // pred_region
          %s995 = ssub.s32 16, 16
          %996 = vsyncadd [#allocation33], %s995
          %s998 = sshll.u32 [#allocation34], 4
          %s999 = int_to_ptr.vmem [resolvable:$true] %s998
          %1001 = dma.hbm_to_vmem [thread:$0]  %s53, 16, %s999, [#allocation33]
        $region116: #{_lambda_.1} parent=11 // pred_fallthru
          _
        // Predicated region
        $region117: #{_lambda_.1} parent=11 // pred_check
          %p1002 = pneg %p675
        $region118: #{_lambda_.1} parent=11 // pred_check_branch
          %1004 = sbr.rel (%p1002) target = $region120
        $region119: #{_lambda_.1} parent=11 // pred_region
          _
        $region120: #{_lambda_.1} parent=11 // pred_fallthru
          _
        // Predicated region
        $region121: #{_lambda_.1} parent=11 // pred_check
          %p1005 = pneg %p696
        $region122: #{_lambda_.1} parent=11 // pred_check_branch
          %1007 = sbr.rel (%p1005) target = $region124
        $region123: #{_lambda_.1} parent=11 // pred_region
          _
        $region124: #{_lambda_.1} parent=11 // pred_fallthru
          _
        // Predicated region
        $region125: #{_lambda_.1} parent=11 // pred_check
          %p1008 = pneg %p717
        $region126: #{_lambda_.1} parent=11 // pred_check_branch
          %1010 = sbr.rel (%p1008) target = $region128
        $region127: #{_lambda_.1} parent=11 // pred_region
          _
        $region128: #{_lambda_.1} parent=11 // pred_fallthru
          _
      $region12: #{_lambda_.1} parent=5 // pred_fallthru
        _
      %p1011 = scmp.lt.s32.totalorder %s82, 2
      // Predicated region
      $region129: #{_lambda_.1} parent=5 // pred_check
        %p1012 = pneg %p1011
      $region130: #{_lambda_.1} parent=5 // pred_check_branch
        %1014 = sbr.rel (%p1012) target = $region132
      $region131: #{_lambda_.1} parent=5 // pred_region
        // Predicated region
        $region133: #{_lambda_.1} parent=131 // pred_check
          %p1015 = pneg %p102
        $region134: #{_lambda_.1} parent=131 // pred_check_branch
          %1017 = sbr.rel (%p1015) target = $region136
        $region135: #{_lambda_.1} parent=131 // pred_region
          %p1018 = scmp.lt.s32.totalorder %s82, 1
          %s1019 = scalar_select %p1018, %s82, 1
          %s1020 = smul.addr %s1019, 8
          %s1021 = smul.addr %s1020, 8
          %s1022 = scalar_lea.vmem %s1, %s1021
        $region136: #{_lambda_.1} parent=131 // pred_fallthru
          _
      $region132: #{_lambda_.1} parent=5 // pred_fallthru
        _
      %p1023 = scmp.le.s32.totalorder 1, %s82
      %p1024 = scmp.lt.s32.totalorder %s82, 3
      %p1025 = pnand %p1023, %p1024
      %p1026 = pneg %p1025
      // Predicated region
      $region137: #{_lambda_.1} parent=5 // pred_check
        _
      $region138: #{_lambda_.1} parent=5 // pred_check_branch
        %1028 = sbr.rel (%p1025) target = $region140
      $region139: #{_lambda_.1} parent=5 // pred_region
        %s1029 = ssub.s32 %s82, 1
        // Predicated region
        $region141: #{_lambda_.1} parent=139 // pred_check
          %p1030 = pneg %p129
        $region142: #{_lambda_.1} parent=139 // pred_check_branch
          %1032 = sbr.rel (%p1030) target = $region144
        $region143: #{_lambda_.1} parent=139 // pred_region
          %1033 = dma.done [#allocation6], 16
        $region144: #{_lambda_.1} parent=139 // pred_fallthru
          _
        // Predicated region
        $region145: #{_lambda_.1} parent=139 // pred_check
          %p1034 = pneg %p150
        $region146: #{_lambda_.1} parent=139 // pred_check_branch
          %1036 = sbr.rel (%p1034) target = $region148
        $region147: #{_lambda_.1} parent=139 // pred_region
          %1037 = dma.done [#allocation9], 16
        $region148: #{_lambda_.1} parent=139 // pred_fallthru
          _
        // Predicated region
        $region149: #{_lambda_.1} parent=139 // pred_check
          %p1038 = pneg %p171
        $region150: #{_lambda_.1} parent=139 // pred_check_branch
          %1040 = sbr.rel (%p1038) target = $region152
        $region151: #{_lambda_.1} parent=139 // pred_region
          %1041 = dma.done [#allocation9], 448
        $region152: #{_lambda_.1} parent=139 // pred_fallthru
          _
        // Predicated region
        $region153: #{_lambda_.1} parent=139 // pred_check
          %p1042 = pneg %p192
        $region154: #{_lambda_.1} parent=139 // pred_check_branch
          %1044 = sbr.rel (%p1042) target = $region156
        $region155: #{_lambda_.1} parent=139 // pred_region
          %1045 = dma.done [#allocation12], 16
        $region156: #{_lambda_.1} parent=139 // pred_fallthru
          _
        // Predicated region
        $region157: #{_lambda_.1} parent=139 // pred_check
          %p1046 = pneg %p276
        $region158: #{_lambda_.1} parent=139 // pred_check_branch
          %1048 = sbr.rel (%p1046) target = $region160
        $region159: #{_lambda_.1} parent=139 // pred_region
          %1049 = dma.done [#allocation12], 16
        $region160: #{_lambda_.1} parent=139 // pred_fallthru
          _
        // Predicated region
        $region161: #{_lambda_.1} parent=139 // pred_check
          %p1050 = pneg %p339
        $region162: #{_lambda_.1} parent=139 // pred_check_branch
          %1052 = sbr.rel (%p1050) target = $region164
        $region163: #{_lambda_.1} parent=139 // pred_region
          %1053 = dma.done [#allocation15], 1536
        $region164: #{_lambda_.1} parent=139 // pred_fallthru
          _
        // Predicated region
        $region165: #{_lambda_.1} parent=139 // pred_check
          %p1054 = pneg %p360
        $region166: #{_lambda_.1} parent=139 // pred_check_branch
          %1056 = sbr.rel (%p1054) target = $region168
        $region167: #{_lambda_.1} parent=139 // pred_region
          %1057 = dma.done [#allocation15], 16
        $region168: #{_lambda_.1} parent=139 // pred_fallthru
          _
        // Predicated region
        $region169: #{_lambda_.1} parent=139 // pred_check
          %p1058 = pneg %p381
        $region170: #{_lambda_.1} parent=139 // pred_check_branch
          %1060 = sbr.rel (%p1058) target = $region172
        $region171: #{_lambda_.1} parent=139 // pred_region
          %1061 = dma.done [#allocation18], 512
        $region172: #{_lambda_.1} parent=139 // pred_fallthru
          _
        // Predicated region
        $region173: #{_lambda_.1} parent=139 // pred_check
          %p1062 = pneg %p402
        $region174: #{_lambda_.1} parent=139 // pred_check_branch
          %1064 = sbr.rel (%p1062) target = $region176
        $region175: #{_lambda_.1} parent=139 // pred_region
          %1065 = dma.done [#allocation18], 16
        $region176: #{_lambda_.1} parent=139 // pred_fallthru
          _
        // Predicated region
        $region177: #{_lambda_.1} parent=139 // pred_check
          %p1066 = pneg %p423
        $region178: #{_lambda_.1} parent=139 // pred_check_branch
          %1068 = sbr.rel (%p1066) target = $region180
        $region179: #{_lambda_.1} parent=139 // pred_region
          %1069 = dma.done [#allocation21], 512
        $region180: #{_lambda_.1} parent=139 // pred_fallthru
          _
        // Predicated region
        $region181: #{_lambda_.1} parent=139 // pred_check
          %p1070 = pneg %p444
        $region182: #{_lambda_.1} parent=139 // pred_check_branch
          %1072 = sbr.rel (%p1070) target = $region184
        $region183: #{_lambda_.1} parent=139 // pred_region
          %1073 = dma.done [#allocation21], 16
        $region184: #{_lambda_.1} parent=139 // pred_fallthru
          _
        // Predicated region
        $region185: #{_lambda_.1} parent=139 // pred_check
          %p1074 = pneg %p465
        $region186: #{_lambda_.1} parent=139 // pred_check_branch
          %1076 = sbr.rel (%p1074) target = $region188
        $region187: #{_lambda_.1} parent=139 // pred_region
          %1077 = dma.done [#allocation24], 512
        $region188: #{_lambda_.1} parent=139 // pred_fallthru
          _
        // Predicated region
        $region189: #{_lambda_.1} parent=139 // pred_check
          %p1078 = pneg %p486
        $region190: #{_lambda_.1} parent=139 // pred_check_branch
          %1080 = sbr.rel (%p1078) target = $region192
        $region191: #{_lambda_.1} parent=139 // pred_region
          %1081 = dma.done [#allocation24], 16
        $region192: #{_lambda_.1} parent=139 // pred_fallthru
          _
        // Predicated region
        $region193: #{_lambda_.1} parent=139 // pred_check
          %p1082 = pneg %p507
        $region194: #{_lambda_.1} parent=139 // pred_check_branch
          %1084 = sbr.rel (%p1082) target = $region196
        $region195: #{_lambda_.1} parent=139 // pred_region
          %1085 = dma.done [#allocation27], 256
        $region196: #{_lambda_.1} parent=139 // pred_fallthru
          _
        // Predicated region
        $region197: #{_lambda_.1} parent=139 // pred_check
          %p1086 = pneg %p528
        $region198: #{_lambda_.1} parent=139 // pred_check_branch
          %1088 = sbr.rel (%p1086) target = $region200
        $region199: #{_lambda_.1} parent=139 // pred_region
          %1089 = dma.done [#allocation27], 16
        $region200: #{_lambda_.1} parent=139 // pred_fallthru
          _
        // Predicated region
        $region201: #{_lambda_.1} parent=139 // pred_check
          %p1090 = pneg %p549
        $region202: #{_lambda_.1} parent=139 // pred_check_branch
          %1092 = sbr.rel (%p1090) target = $region204
        $region203: #{_lambda_.1} parent=139 // pred_region
          %1093 = dma.done [#allocation30], 512
        $region204: #{_lambda_.1} parent=139 // pred_fallthru
          _
        // Predicated region
        $region205: #{_lambda_.1} parent=139 // pred_check
          %p1094 = pneg %p591
        $region206: #{_lambda_.1} parent=139 // pred_check_branch
          %1096 = sbr.rel (%p1094) target = $region208
        $region207: #{_lambda_.1} parent=139 // pred_region
          %1097 = dma.done [#allocation30], 16
        $region208: #{_lambda_.1} parent=139 // pred_fallthru
          _
        // Predicated region
        $region209: #{_lambda_.1} parent=139 // pred_check
          %p1098 = pneg %p612
        $region210: #{_lambda_.1} parent=139 // pred_check_branch
          %1100 = sbr.rel (%p1098) target = $region212
        $region211: #{_lambda_.1} parent=139 // pred_region
          %1101 = dma.done [#allocation33], 16
        $region212: #{_lambda_.1} parent=139 // pred_fallthru
          _
        // Predicated region
        $region213: #{_lambda_.1} parent=139 // pred_check
          %p1102 = pneg %p654
        $region214: #{_lambda_.1} parent=139 // pred_check_branch
          %1104 = sbr.rel (%p1102) target = $region216
        $region215: #{_lambda_.1} parent=139 // pred_region
          %1105 = dma.done [#allocation33], 16
        $region216: #{_lambda_.1} parent=139 // pred_fallthru
          _
        %p1106 = scmp.lt.s32.totalorder %s87, 1
        %s1107 = scalar_select %p1106, %s87, 1
        %s1108 = smul.addr %s1107, 8
        %s1109 = smul.addr %s1108, 8
        %s1110 = scalar_lea.vmem %s1, %s1109
        %p1111 = pneg %p108
        %p1112 = pneg %p105
        %p1113 = pneg %p129
        %p1114 = pneg %p126
        %p1115 = pneg %p150
        %p1116 = pneg %p147
        %p1117 = pneg %p171
        %p1118 = pneg %p168
        %p1119 = pneg %p192
        %p1120 = pneg %p189
        %p1121 = pneg %p213
        %p1122 = pneg %p210
        %p1123 = pneg %p234
        %p1124 = pneg %p231
        %p1125 = pneg %p255
        %p1126 = pneg %p252
        %p1127 = pneg %p276
        %p1128 = pneg %p273
        %p1129 = pneg %p297
        %p1130 = pneg %p294
        %p1131 = pneg %p318
        %p1132 = pneg %p315
        %p1133 = pneg %p339
        %p1134 = pneg %p336
        %p1135 = pneg %p360
        %p1136 = pneg %p357
        %p1137 = pneg %p381
        %p1138 = pneg %p378
        %p1139 = pneg %p402
        %p1140 = pneg %p399
        %p1141 = pneg %p423
        %p1142 = pneg %p420
        %p1143 = pneg %p444
        %p1144 = pneg %p441
        %p1145 = pneg %p465
        %p1146 = pneg %p462
        %p1147 = pneg %p486
        %p1148 = pneg %p483
        %p1149 = pneg %p507
        %p1150 = pneg %p504
        %p1151 = pneg %p528
        %p1152 = pneg %p525
        %p1153 = pneg %p549
        %p1154 = pneg %p546
        %p1155 = pneg %p570
        %p1156 = pneg %p567
        %p1157 = pneg %p591
        %p1158 = pneg %p588
        %p1159 = pneg %p612
        %p1160 = pneg %p609
        %p1161 = pneg %p633
        %p1162 = pneg %p630
        %p1163 = pneg %p654
        %p1164 = pneg %p651
        %p1165 = pneg %p675
        %p1166 = pneg %p672
        %p1167 = pneg %p696
        %p1168 = pneg %p693
        %p1169 = pneg %p717
        %p1170 = pneg %p714
        %p1171 = pneg %p743
        %p1172 = pneg %p740
        %s1173 = sand.u32 %s730, 1
        %s1174 = scalar_lea.sflag [#allocation7], %s1173
        %s1175 = sand.u32 %s730, 1
        %s1176 = scalar_lea.vmem [#allocation35], %s1175
        %p1177 = scmp.lt.s32.totalorder %s87, 1
        %s1178 = scalar_select %p1177, %s87, 1
        %s1179 = smul.addr %s1178, 8
        %s1180 = smul.addr %s1179, 8
        %s1181 = scalar_lea.vmem %s1, %s1180
        %v1182 = vld [vmem:[%s1181] sm:$0xff]
        %v1183 = vld [vmem:[%s1181 + $0x8] sm:$0xff]
        %v1184 = vld [vmem:[%s1181 + $0x10] sm:$0xff]
        %v1185 = vld [vmem:[%s1181 + $0x18] sm:$0xff]
        %v1186 = vld [vmem:[%s1181 + $0x20] sm:$0xff]
        %v1187 = vld [vmem:[%s1181 + $0x28] sm:$0xff]
        %v1188 = vld [vmem:[%s1181 + $0x30] sm:$0xff]
        %v1189 = vld [vmem:[%s1181 + $0x38] sm:$0xff]
        %v1190 = vld [vmem:[#allocation5] sm:$0x1]
        %v1192 = vlaneseq
        %v1193 = vshrl.u32 %v1192, 7
        %v1194 = vsub.s32 0, %v1193
        %v1195 = vrot.slane %v1190, %v1194
        %v1197 = vmul.f32 %v1182, %v1195
        %v1198 = vmul.f32 %v1183, %v1195
        %v1199 = vmul.f32 %v1184, %v1195
        %v1200 = vmul.f32 %v1185, %v1195
        %v1201 = vmul.f32 %v1186, %v1195
        %v1202 = vmul.f32 %v1187, %v1195
        %v1203 = vmul.f32 %v1188, %v1195
        %v1204 = vmul.f32 %v1189, %v1195
        %v1205 = vld [vmem:[#allocation8] sm:$0x1]
        %v1207 = vlaneseq
        %v1208 = vshrl.u32 %v1207, 7
        %v1209 = vsub.s32 0, %v1208
        %v1210 = vrot.slane %v1205, %v1209
        %v1212 = vadd.f32 %v1197, %v1210
        %v1213 = vadd.f32 %v1198, %v1210
        %v1214 = vadd.f32 %v1199, %v1210
        %v1215 = vadd.f32 %v1200, %v1210
        %v1216 = vadd.f32 %v1201, %v1210
        %v1217 = vadd.f32 %v1202, %v1210
        %v1218 = vadd.f32 %v1203, %v1210
        %v1219 = vadd.f32 %v1204, %v1210
        %vm1220 = vcmask 253952
        %1221 = vst.msk [vmem:[#allocation2] sm:$0x1] %vm1220, 0.0
        %1222 = vst.msk [vmem:[#allocation2 + $0x41] sm:$0x1] %vm1220, 0.0
        %vm1223 = vcmask 31744
        %1224 = vst.msk [vmem:[#allocation2 + $0x1] sm:$0xff] %vm1223, %v1212
        %1225 = vst.msk [vmem:[#allocation2 + $0x9] sm:$0xff] %vm1223, %v1213
        %1226 = vst.msk [vmem:[#allocation2 + $0x11] sm:$0xff] %vm1223, %v1214
        %1227 = vst.msk [vmem:[#allocation2 + $0x19] sm:$0xff] %vm1223, %v1215
        %1228 = vst.msk [vmem:[#allocation2 + $0x21] sm:$0xff] %vm1223, %v1216
        %1229 = vst.msk [vmem:[#allocation2 + $0x29] sm:$0xff] %vm1223, %v1217
        %1230 = vst.msk [vmem:[#allocation2 + $0x31] sm:$0xff] %vm1223, %v1218
        %1231 = vst.msk [vmem:[#allocation2 + $0x39] sm:$0xff] %vm1223, %v1219
        %v1232 = vld [vmem:[#allocation2] sm:$0xff]
        %v1233 = vld [vmem:[#allocation2 + $0x8] sm:$0xff]
        %v1234 = vld [vmem:[#allocation2 + $0x10] sm:$0xff]
        %v1235 = vld [vmem:[#allocation2 + $0x18] sm:$0xff]
        %v1236 = vld [vmem:[#allocation2 + $0x20] sm:$0xff]
        %v1237 = vld [vmem:[#allocation2 + $0x28] sm:$0xff]
        %v1238 = vld [vmem:[#allocation2 + $0x30] sm:$0xff]
        %v1239 = vld [vmem:[#allocation2 + $0x38] sm:$0xf]
        %v1240 = vld [vmem:[#allocation10] sm:$0xf]
        %v1241 = vld [vmem:[#allocation2 + $0x1] sm:$0xff]
        %v1242 = vld [vmem:[#allocation2 + $0x9] sm:$0xff]
        %v1243 = vld [vmem:[#allocation2 + $0x11] sm:$0xff]
        %v1244 = vld [vmem:[#allocation2 + $0x19] sm:$0xff]
        %v1245 = vld [vmem:[#allocation2 + $0x21] sm:$0xff]
        %v1246 = vld [vmem:[#allocation2 + $0x29] sm:$0xff]
        %v1247 = vld [vmem:[#allocation2 + $0x31] sm:$0xff]
        %v1248 = vld [vmem:[#allocation2 + $0x39] sm:$0xf]
        %s1249 = scalar_lea.vmem [#allocation10], 4
        %v1250 = vld [vmem:[%s1249] sm:$0xf]
        %v1252 = vsel %vm1223, %v1241, 0
        %v1255 = vsel %vm1223, %v1242, 0
        %v1258 = vsel %vm1223, %v1243, 0
        %v1261 = vsel %vm1223, %v1244, 0
        %v1264 = vsel %vm1223, %v1245, 0
        %v1267 = vsel %vm1223, %v1246, 0
        %v1270 = vsel %vm1223, %v1247, 0
        %v1273 = vsel %vm1223, %v1248, 0
        %vm1275 = vcmask 1043456
        %v1277 = vsel %vm1275, %v1250, 0
        %1279 = vmatprep.subr.mxu0 0.0
        %1280 = vmatpush1.msra.mxu0 0.0
        %1281 = vmatprep.subr.mxu0 0.0
        %1282 = vmatpush1.msra.mxu0 0.0
        %1283 = vmatprep.subr.mxu0 0.0
        %1284 = vmatpush1.msra.mxu0 0.0
        %1285 = vmatprep.subr.mxu0 0.0
        %1286 = vmatpush1.msra.mxu0 0.0
        %1287 = vmatprep.subr.mxu0 0.0
        %1288 = vmatpush1.msra.mxu0 0.0
        %1289 = vmatprep.subr.mxu0 0.0
        %1290 = vmatpush1.msra.mxu0 0.0
        %1291 = vmatprep.subr.mxu0 0.0
        %1292 = vmatpush1.msra.mxu0 0.0
        %1293 = vmatprep.subr.mxu0 0.0
        %1294 = vmatpush1.msra.mxu0 0.0
        %1295 = vmatprep.subr.mxu0 0.0
        %1296 = vmatpush1.msra.mxu0 0.0
        %1297 = vmatprep.subr.mxu0 0.0
        %1298 = vmatpush1.msra.mxu0 0.0
        %1299 = vmatprep.subr.mxu0 0.0
        %1300 = vmatpush1.msra.mxu0 0.0
        %1301 = vmatprep.subr.mxu0 0.0
        %1302 = vmatpush1.msra.mxu0 0.0
        %1303 = vmatprep.subr.mxu0 0.0
        %1304 = vmatpush1.msra.mxu0 0.0
        %1305 = vmatprep.subr.mxu0 0.0
        %1306 = vmatpush1.msra.mxu0 0.0
        %1307 = vmatprep.subr.mxu0 0.0
        %1308 = vmatpush1.msra.mxu0 0.0
        %1309 = vmatprep.subr.mxu0 0.0
        %1310 = vmatpush1.msra.mxu0 %v1277
        %1311 = vmatprep.subr.mxu0 0.0
        %1312 = vmatpush2.msra.mxu0 0.0
        %1313 = vmatprep.subr.mxu0 0.0
        %1314 = vmatpush2.msra.mxu0 0.0
        %1315 = vmatprep.subr.mxu0 0.0
        %1316 = vmatpush2.msra.mxu0 0.0
        %1317 = vmatprep.subr.mxu0 0.0
        %1318 = vmatpush2.msra.mxu0 0.0
        %1319 = vmatprep.subr.mxu0 0.0
        %1320 = vmatpush2.msra.mxu0 0.0
        %1321 = vmatprep.subr.mxu0 0.0
        %1322 = vmatpush2.msra.mxu0 0.0
        %1323 = vmatprep.subr.mxu0 0.0
        %1324 = vmatpush2.msra.mxu0 0.0
        %1325 = vmatprep.subr.mxu0 0.0
        %1326 = vmatpush2.msra.mxu0 0.0
        %1327 = vmatprep.subr.mxu0 0.0
        %1328 = vmatpush2.msra.mxu0 0.0
        %1329 = vmatprep.subr.mxu0 0.0
        %1330 = vmatpush2.msra.mxu0 0.0
        %1331 = vmatprep.subr.mxu0 0.0
        %1332 = vmatpush2.msra.mxu0 0.0
        %1333 = vmatprep.subr.mxu0 0.0
        %1334 = vmatpush2.msra.mxu0 0.0
        %1335 = vmatprep.subr.mxu0 0.0
        %1336 = vmatpush2.msra.mxu0 0.0
        %1337 = vmatprep.subr.mxu0 0.0
        %1338 = vmatpush2.msra.mxu0 0.0
        %1339 = vmatprep.subr.mxu0 0.0
        %1340 = vmatpush2.msra.mxu0 0.0
        %1341 = vmatprep.subr.mxu0 0.0
        %1342 = vmatpush2.msra.mxu0 0.0
        %1343 = vmatprep.mubr.f32.mxu0 0.0
        %1344 = vmatmul.mubr.f32.gmra.mxu0 %v1252
        %v1345 = vpop.f32.mrf.mxu0
        %v1346 = vadd.f32 0.0, %v1345
        %v1347 = vpop.f32.mrf.mxu0
        %1348 = vmatprep.mubr.f32.mxu0 0.0
        %1349 = vmatmul.mubr.f32.gmra.mxu0 %v1255
        %v1350 = vpop.f32.mrf.mxu0
        %v1351 = vadd.f32 0.0, %v1350
        %v1352 = vpop.f32.mrf.mxu0
        %1353 = vmatprep.mubr.f32.mxu0 0.0
        %1354 = vmatmul.mubr.f32.gmra.mxu0 %v1258
        %v1355 = vpop.f32.mrf.mxu0
        %v1356 = vadd.f32 0.0, %v1355
        %v1357 = vpop.f32.mrf.mxu0
        %1358 = vmatprep.mubr.f32.mxu0 0.0
        %1359 = vmatmul.mubr.f32.gmra.mxu0 %v1261
        %v1360 = vpop.f32.mrf.mxu0
        %v1361 = vadd.f32 0.0, %v1360
        %v1362 = vpop.f32.mrf.mxu0
        %1363 = vmatprep.mubr.f32.mxu0 0.0
        %1364 = vmatmul.mubr.f32.gmra.mxu0 %v1264
        %v1365 = vpop.f32.mrf.mxu0
        %v1366 = vadd.f32 0.0, %v1365
        %v1367 = vpop.f32.mrf.mxu0
        %1368 = vmatprep.mubr.f32.mxu0 0.0
        %1369 = vmatmul.mubr.f32.gmra.mxu0 %v1267
        %v1370 = vpop.f32.mrf.mxu0
        %v1371 = vadd.f32 0.0, %v1370
        %v1372 = vpop.f32.mrf.mxu0
        %1373 = vmatprep.mubr.f32.mxu0 0.0
        %1374 = vmatmul.mubr.f32.gmra.mxu0 %v1270
        %v1375 = vpop.f32.mrf.mxu0
        %v1376 = vadd.f32 0.0, %v1375
        %v1377 = vpop.f32.mrf.mxu0
        %1378 = vmatprep.mubr.f32.mxu0 0.0
        %1379 = vmatmul.mubr.f32.gmra.mxu0 %v1273
        %v1380 = vpop.f32.mrf.mxu0
        %v1381 = vadd.f32 0.0, %v1380
        %v1382 = vpop.f32.mrf.mxu0
        %1383 = vdwg.mxu0
        %v1385 = vsel %vm1223, %v1232, 0
        %v1388 = vsel %vm1223, %v1233, 0
        %v1391 = vsel %vm1223, %v1234, 0
        %v1394 = vsel %vm1223, %v1235, 0
        %v1397 = vsel %vm1223, %v1236, 0
        %v1400 = vsel %vm1223, %v1237, 0
        %v1403 = vsel %vm1223, %v1238, 0
        %v1406 = vsel %vm1223, %v1239, 0
        %v1409 = vsel %vm1275, %v1240, 0
        %1411 = vmatprep.subr.mxu0 0.0
        %1412 = vmatpush1.msra.mxu0 0.0
        %1413 = vmatprep.subr.mxu0 0.0
        %1414 = vmatpush1.msra.mxu0 0.0
        %1415 = vmatprep.subr.mxu0 0.0
        %1416 = vmatpush1.msra.mxu0 0.0
        %1417 = vmatprep.subr.mxu0 0.0
        %1418 = vmatpush1.msra.mxu0 0.0
        %1419 = vmatprep.subr.mxu0 0.0
        %1420 = vmatpush1.msra.mxu0 0.0
        %1421 = vmatprep.subr.mxu0 0.0
        %1422 = vmatpush1.msra.mxu0 0.0
        %1423 = vmatprep.subr.mxu0 0.0
        %1424 = vmatpush1.msra.mxu0 0.0
        %1425 = vmatprep.subr.mxu0 0.0
        %1426 = vmatpush1.msra.mxu0 0.0
        %1427 = vmatprep.subr.mxu0 0.0
        %1428 = vmatpush1.msra.mxu0 0.0
        %1429 = vmatprep.subr.mxu0 0.0
        %1430 = vmatpush1.msra.mxu0 0.0
        %1431 = vmatprep.subr.mxu0 0.0
        %1432 = vmatpush1.msra.mxu0 0.0
        %1433 = vmatprep.subr.mxu0 0.0
        %1434 = vmatpush1.msra.mxu0 0.0
        %1435 = vmatprep.subr.mxu0 0.0
        %1436 = vmatpush1.msra.mxu0 0.0
        %1437 = vmatprep.subr.mxu0 0.0
        %1438 = vmatpush1.msra.mxu0 0.0
        %1439 = vmatprep.subr.mxu0 0.0
        %1440 = vmatpush1.msra.mxu0 0.0
        %1441 = vmatprep.subr.mxu0 0.0
        %1442 = vmatpush1.msra.mxu0 %v1409
        %1443 = vmatprep.subr.mxu0 0.0
        %1444 = vmatpush2.msra.mxu0 0.0
        %1445 = vmatprep.subr.mxu0 0.0
        %1446 = vmatpush2.msra.mxu0 0.0
        %1447 = vmatprep.subr.mxu0 0.0
        %1448 = vmatpush2.msra.mxu0 0.0
        %1449 = vmatprep.subr.mxu0 0.0
        %1450 = vmatpush2.msra.mxu0 0.0
        %1451 = vmatprep.subr.mxu0 0.0
        %1452 = vmatpush2.msra.mxu0 0.0
        %1453 = vmatprep.subr.mxu0 0.0
        %1454 = vmatpush2.msra.mxu0 0.0
        %1455 = vmatprep.subr.mxu0 0.0
        %1456 = vmatpush2.msra.mxu0 0.0
        %1457 = vmatprep.subr.mxu0 0.0
        %1458 = vmatpush2.msra.mxu0 0.0
        %1459 = vmatprep.subr.mxu0 0.0
        %1460 = vmatpush2.msra.mxu0 0.0
        %1461 = vmatprep.subr.mxu0 0.0
        %1462 = vmatpush2.msra.mxu0 0.0
        %1463 = vmatprep.subr.mxu0 0.0
        %1464 = vmatpush2.msra.mxu0 0.0
        %1465 = vmatprep.subr.mxu0 0.0
        %1466 = vmatpush2.msra.mxu0 0.0
        %1467 = vmatprep.subr.mxu0 0.0
        %1468 = vmatpush2.msra.mxu0 0.0
        %1469 = vmatprep.subr.mxu0 0.0
        %1470 = vmatpush2.msra.mxu0 0.0
        %1471 = vmatprep.subr.mxu0 0.0
        %1472 = vmatpush2.msra.mxu0 0.0
        %1473 = vmatprep.subr.mxu0 0.0
        %1474 = vmatpush2.msra.mxu0 0.0
        %1475 = vmatprep.mubr.f32.mxu0 0.0
        %1476 = vmatmul.mubr.f32.gmra.mxu0 %v1385
        %v1477 = vpop.f32.mrf.mxu0
        %v1478 = vadd.f32 %v1346, %v1477
        %v1479 = vpop.f32.mrf.mxu0
        %1480 = vmatprep.mubr.f32.mxu0 0.0
        %1481 = vmatmul.mubr.f32.gmra.mxu0 %v1388
        %v1482 = vpop.f32.mrf.mxu0
        %v1483 = vadd.f32 %v1351, %v1482
        %v1484 = vpop.f32.mrf.mxu0
        %1485 = vmatprep.mubr.f32.mxu0 0.0
        %1486 = vmatmul.mubr.f32.gmra.mxu0 %v1391
        %v1487 = vpop.f32.mrf.mxu0
        %v1488 = vadd.f32 %v1356, %v1487
        %v1489 = vpop.f32.mrf.mxu0
        %1490 = vmatprep.mubr.f32.mxu0 0.0
        %1491 = vmatmul.mubr.f32.gmra.mxu0 %v1394
        %v1492 = vpop.f32.mrf.mxu0
        %v1493 = vadd.f32 %v1361, %v1492
        %v1494 = vpop.f32.mrf.mxu0
        %1495 = vmatprep.mubr.f32.mxu0 0.0
        %1496 = vmatmul.mubr.f32.gmra.mxu0 %v1397
        %v1497 = vpop.f32.mrf.mxu0
        %v1498 = vadd.f32 %v1366, %v1497
        %v1499 = vpop.f32.mrf.mxu0
        %1500 = vmatprep.mubr.f32.mxu0 0.0
        %1501 = vmatmul.mubr.f32.gmra.mxu0 %v1400
        %v1502 = vpop.f32.mrf.mxu0
        %v1503 = vadd.f32 %v1371, %v1502
        %v1504 = vpop.f32.mrf.mxu0
        %1505 = vmatprep.mubr.f32.mxu0 0.0
        %1506 = vmatmul.mubr.f32.gmra.mxu0 %v1403
        %v1507 = vpop.f32.mrf.mxu0
        %v1508 = vadd.f32 %v1376, %v1507
        %v1509 = vpop.f32.mrf.mxu0
        %1510 = vmatprep.mubr.f32.mxu0 0.0
        %1511 = vmatmul.mubr.f32.gmra.mxu0 %v1406
        %v1512 = vpop.f32.mrf.mxu0
        %v1513 = vadd.f32 %v1381, %v1512
        %v1514 = vpop.f32.mrf.mxu0
        %1515 = vdwg.mxu0
        %v1516 = vld [vmem:[#allocation2 + $0x2] sm:$0xff]
        %v1517 = vld [vmem:[#allocation2 + $0xa] sm:$0xff]
        %v1518 = vld [vmem:[#allocation2 + $0x12] sm:$0xff]
        %v1519 = vld [vmem:[#allocation2 + $0x1a] sm:$0xff]
        %v1520 = vld [vmem:[#allocation2 + $0x22] sm:$0xff]
        %v1521 = vld [vmem:[#allocation2 + $0x2a] sm:$0xff]
        %v1522 = vld [vmem:[#allocation2 + $0x32] sm:$0xff]
        %v1523 = vld [vmem:[#allocation2 + $0x3a] sm:$0xf]
        %s1524 = scalar_lea.vmem [#allocation10], 8
        %v1525 = vld [vmem:[%s1524] sm:$0xf]
        %v1527 = vsel %vm1223, %v1516, 0
        %v1530 = vsel %vm1223, %v1517, 0
        %v1533 = vsel %vm1223, %v1518, 0
        %v1536 = vsel %vm1223, %v1519, 0
        %v1539 = vsel %vm1223, %v1520, 0
        %v1542 = vsel %vm1223, %v1521, 0
        %v1545 = vsel %vm1223, %v1522, 0
        %v1548 = vsel %vm1223, %v1523, 0
        %v1551 = vsel %vm1275, %v1525, 0
        %1553 = vmatprep.subr.mxu0 0.0
        %1554 = vmatpush1.msra.mxu0 0.0
        %1555 = vmatprep.subr.mxu0 0.0
        %1556 = vmatpush1.msra.mxu0 0.0
        %1557 = vmatprep.subr.mxu0 0.0
        %1558 = vmatpush1.msra.mxu0 0.0
        %1559 = vmatprep.subr.mxu0 0.0
        %1560 = vmatpush1.msra.mxu0 0.0
        %1561 = vmatprep.subr.mxu0 0.0
        %1562 = vmatpush1.msra.mxu0 0.0
        %1563 = vmatprep.subr.mxu0 0.0
        %1564 = vmatpush1.msra.mxu0 0.0
        %1565 = vmatprep.subr.mxu0 0.0
        %1566 = vmatpush1.msra.mxu0 0.0
        %1567 = vmatprep.subr.mxu0 0.0
        %1568 = vmatpush1.msra.mxu0 0.0
        %1569 = vmatprep.subr.mxu0 0.0
        %1570 = vmatpush1.msra.mxu0 0.0
        %1571 = vmatprep.subr.mxu0 0.0
        %1572 = vmatpush1.msra.mxu0 0.0
        %1573 = vmatprep.subr.mxu0 0.0
        %1574 = vmatpush1.msra.mxu0 0.0
        %1575 = vmatprep.subr.mxu0 0.0
        %1576 = vmatpush1.msra.mxu0 0.0
        %1577 = vmatprep.subr.mxu0 0.0
        %1578 = vmatpush1.msra.mxu0 0.0
        %1579 = vmatprep.subr.mxu0 0.0
        %1580 = vmatpush1.msra.mxu0 0.0
        %1581 = vmatprep.subr.mxu0 0.0
        %1582 = vmatpush1.msra.mxu0 0.0
        %1583 = vmatprep.subr.mxu0 0.0
        %1584 = vmatpush1.msra.mxu0 %v1551
        %1585 = vmatprep.subr.mxu0 0.0
        %1586 = vmatpush2.msra.mxu0 0.0
        %1587 = vmatprep.subr.mxu0 0.0
        %1588 = vmatpush2.msra.mxu0 0.0
        %1589 = vmatprep.subr.mxu0 0.0
        %1590 = vmatpush2.msra.mxu0 0.0
        %1591 = vmatprep.subr.mxu0 0.0
        %1592 = vmatpush2.msra.mxu0 0.0
        %1593 = vmatprep.subr.mxu0 0.0
        %1594 = vmatpush2.msra.mxu0 0.0
        %1595 = vmatprep.subr.mxu0 0.0
        %1596 = vmatpush2.msra.mxu0 0.0
        %1597 = vmatprep.subr.mxu0 0.0
        %1598 = vmatpush2.msra.mxu0 0.0
        %1599 = vmatprep.subr.mxu0 0.0
        %1600 = vmatpush2.msra.mxu0 0.0
        %1601 = vmatprep.subr.mxu0 0.0
        %1602 = vmatpush2.msra.mxu0 0.0
        %1603 = vmatprep.subr.mxu0 0.0
        %1604 = vmatpush2.msra.mxu0 0.0
        %1605 = vmatprep.subr.mxu0 0.0
        %1606 = vmatpush2.msra.mxu0 0.0
        %1607 = vmatprep.subr.mxu0 0.0
        %1608 = vmatpush2.msra.mxu0 0.0
        %1609 = vmatprep.subr.mxu0 0.0
        %1610 = vmatpush2.msra.mxu0 0.0
        %1611 = vmatprep.subr.mxu0 0.0
        %1612 = vmatpush2.msra.mxu0 0.0
        %1613 = vmatprep.subr.mxu0 0.0
        %1614 = vmatpush2.msra.mxu0 0.0
        %1615 = vmatprep.subr.mxu0 0.0
        %1616 = vmatpush2.msra.mxu0 0.0
        %1617 = vmatprep.mubr.f32.mxu0 0.0
        %1618 = vmatmul.mubr.f32.gmra.mxu0 %v1527
        %v1619 = vpop.f32.mrf.mxu0
        %v1620 = vadd.f32 0.0, %v1619
        %v1621 = vpop.f32.mrf.mxu0
        %1622 = vmatprep.mubr.f32.mxu0 0.0
        %1623 = vmatmul.mubr.f32.gmra.mxu0 %v1530
        %v1624 = vpop.f32.mrf.mxu0
        %v1625 = vadd.f32 0.0, %v1624
        %v1626 = vpop.f32.mrf.mxu0
        %1627 = vmatprep.mubr.f32.mxu0 0.0
        %1628 = vmatmul.mubr.f32.gmra.mxu0 %v1533
        %v1629 = vpop.f32.mrf.mxu0
        %v1630 = vadd.f32 0.0, %v1629
        %v1631 = vpop.f32.mrf.mxu0
        %1632 = vmatprep.mubr.f32.mxu0 0.0
        %1633 = vmatmul.mubr.f32.gmra.mxu0 %v1536
        %v1634 = vpop.f32.mrf.mxu0
        %v1635 = vadd.f32 0.0, %v1634
        %v1636 = vpop.f32.mrf.mxu0
        %1637 = vmatprep.mubr.f32.mxu0 0.0
        %1638 = vmatmul.mubr.f32.gmra.mxu0 %v1539
        %v1639 = vpop.f32.mrf.mxu0
        %v1640 = vadd.f32 0.0, %v1639
        %v1641 = vpop.f32.mrf.mxu0
        %1642 = vmatprep.mubr.f32.mxu0 0.0
        %1643 = vmatmul.mubr.f32.gmra.mxu0 %v1542
        %v1644 = vpop.f32.mrf.mxu0
        %v1645 = vadd.f32 0.0, %v1644
        %v1646 = vpop.f32.mrf.mxu0
        %1647 = vmatprep.mubr.f32.mxu0 0.0
        %1648 = vmatmul.mubr.f32.gmra.mxu0 %v1545
        %v1649 = vpop.f32.mrf.mxu0
        %v1650 = vadd.f32 0.0, %v1649
        %v1651 = vpop.f32.mrf.mxu0
        %1652 = vmatprep.mubr.f32.mxu0 0.0
        %1653 = vmatmul.mubr.f32.gmra.mxu0 %v1548
        %v1654 = vpop.f32.mrf.mxu0
        %v1655 = vadd.f32 0.0, %v1654
        %v1656 = vpop.f32.mrf.mxu0
        %1657 = vdwg.mxu0
        %v1658 = vadd.f32 %v1478, %v1620
        %v1659 = vadd.f32 %v1483, %v1625
        %v1660 = vadd.f32 %v1488, %v1630
        %v1661 = vadd.f32 %v1493, %v1635
        %v1662 = vadd.f32 %v1498, %v1640
        %v1663 = vadd.f32 %v1503, %v1645
        %v1664 = vadd.f32 %v1508, %v1650
        %v1665 = vadd.f32 %v1513, %v1655
        %v1666 = vld [vmem:[#allocation2 + $0x3] sm:$0xff]
        %v1667 = vld [vmem:[#allocation2 + $0xb] sm:$0xff]
        %v1668 = vld [vmem:[#allocation2 + $0x13] sm:$0xff]
        %v1669 = vld [vmem:[#allocation2 + $0x1b] sm:$0xff]
        %v1670 = vld [vmem:[#allocation2 + $0x23] sm:$0xff]
        %v1671 = vld [vmem:[#allocation2 + $0x2b] sm:$0xff]
        %v1672 = vld [vmem:[#allocation2 + $0x33] sm:$0xff]
        %v1673 = vld [vmem:[#allocation2 + $0x3b] sm:$0xf]
        %s1674 = scalar_lea.vmem [#allocation10], 12
        %v1675 = vld [vmem:[%s1674] sm:$0xf]
        %v1677 = vsel %vm1223, %v1666, 0
        %v1680 = vsel %vm1223, %v1667, 0
        %v1683 = vsel %vm1223, %v1668, 0
        %v1686 = vsel %vm1223, %v1669, 0
        %v1689 = vsel %vm1223, %v1670, 0
        %v1692 = vsel %vm1223, %v1671, 0
        %v1695 = vsel %vm1223, %v1672, 0
        %v1698 = vsel %vm1223, %v1673, 0
        %v1701 = vsel %vm1275, %v1675, 0
        %1703 = vmatprep.subr.mxu0 0.0
        %1704 = vmatpush1.msra.mxu0 0.0
        %1705 = vmatprep.subr.mxu0 0.0
        %1706 = vmatpush1.msra.mxu0 0.0
        %1707 = vmatprep.subr.mxu0 0.0
        %1708 = vmatpush1.msra.mxu0 0.0
        %1709 = vmatprep.subr.mxu0 0.0
        %1710 = vmatpush1.msra.mxu0 0.0
        %1711 = vmatprep.subr.mxu0 0.0
        %1712 = vmatpush1.msra.mxu0 0.0
        %1713 = vmatprep.subr.mxu0 0.0
        %1714 = vmatpush1.msra.mxu0 0.0
        %1715 = vmatprep.subr.mxu0 0.0
        %1716 = vmatpush1.msra.mxu0 0.0
        %1717 = vmatprep.subr.mxu0 0.0
        %1718 = vmatpush1.msra.mxu0 0.0
        %1719 = vmatprep.subr.mxu0 0.0
        %1720 = vmatpush1.msra.mxu0 0.0
        %1721 = vmatprep.subr.mxu0 0.0
        %1722 = vmatpush1.msra.mxu0 0.0
        %1723 = vmatprep.subr.mxu0 0.0
        %1724 = vmatpush1.msra.mxu0 0.0
        %1725 = vmatprep.subr.mxu0 0.0
        %1726 = vmatpush1.msra.mxu0 0.0
        %1727 = vmatprep.subr.mxu0 0.0
        %1728 = vmatpush1.msra.mxu0 0.0
        %1729 = vmatprep.subr.mxu0 0.0
        %1730 = vmatpush1.msra.mxu0 0.0
        %1731 = vmatprep.subr.mxu0 0.0
        %1732 = vmatpush1.msra.mxu0 0.0
        %1733 = vmatprep.subr.mxu0 0.0
        %1734 = vmatpush1.msra.mxu0 %v1701
        %1735 = vmatprep.subr.mxu0 0.0
        %1736 = vmatpush2.msra.mxu0 0.0
        %1737 = vmatprep.subr.mxu0 0.0
        %1738 = vmatpush2.msra.mxu0 0.0
        %1739 = vmatprep.subr.mxu0 0.0
        %1740 = vmatpush2.msra.mxu0 0.0
        %1741 = vmatprep.subr.mxu0 0.0
        %1742 = vmatpush2.msra.mxu0 0.0
        %1743 = vmatprep.subr.mxu0 0.0
        %1744 = vmatpush2.msra.mxu0 0.0
        %1745 = vmatprep.subr.mxu0 0.0
        %1746 = vmatpush2.msra.mxu0 0.0
        %1747 = vmatprep.subr.mxu0 0.0
        %1748 = vmatpush2.msra.mxu0 0.0
        %1749 = vmatprep.subr.mxu0 0.0
        %1750 = vmatpush2.msra.mxu0 0.0
        %1751 = vmatprep.subr.mxu0 0.0
        %1752 = vmatpush2.msra.mxu0 0.0
        %1753 = vmatprep.subr.mxu0 0.0
        %1754 = vmatpush2.msra.mxu0 0.0
        %1755 = vmatprep.subr.mxu0 0.0
        %1756 = vmatpush2.msra.mxu0 0.0
        %1757 = vmatprep.subr.mxu0 0.0
        %1758 = vmatpush2.msra.mxu0 0.0
        %1759 = vmatprep.subr.mxu0 0.0
        %1760 = vmatpush2.msra.mxu0 0.0
        %1761 = vmatprep.subr.mxu0 0.0
        %1762 = vmatpush2.msra.mxu0 0.0
        %1763 = vmatprep.subr.mxu0 0.0
        %1764 = vmatpush2.msra.mxu0 0.0
        %1765 = vmatprep.subr.mxu0 0.0
        %1766 = vmatpush2.msra.mxu0 0.0
        %1767 = vmatprep.mubr.f32.mxu0 0.0
        %1768 = vmatmul.mubr.f32.gmra.mxu0 %v1677
        %v1769 = vpop.f32.mrf.mxu0
        %v1770 = vadd.f32 0.0, %v1769
        %v1771 = vpop.f32.mrf.mxu0
        %1772 = vmatprep.mubr.f32.mxu0 0.0
        %1773 = vmatmul.mubr.f32.gmra.mxu0 %v1680
        %v1774 = vpop.f32.mrf.mxu0
        %v1775 = vadd.f32 0.0, %v1774
        %v1776 = vpop.f32.mrf.mxu0
        %1777 = vmatprep.mubr.f32.mxu0 0.0
        %1778 = vmatmul.mubr.f32.gmra.mxu0 %v1683
        %v1779 = vpop.f32.mrf.mxu0
        %v1780 = vadd.f32 0.0, %v1779
        %v1781 = vpop.f32.mrf.mxu0
        %1782 = vmatprep.mubr.f32.mxu0 0.0
        %1783 = vmatmul.mubr.f32.gmra.mxu0 %v1686
        %v1784 = vpop.f32.mrf.mxu0
        %v1785 = vadd.f32 0.0, %v1784
        %v1786 = vpop.f32.mrf.mxu0
        %1787 = vmatprep.mubr.f32.mxu0 0.0
        %1788 = vmatmul.mubr.f32.gmra.mxu0 %v1689
        %v1789 = vpop.f32.mrf.mxu0
        %v1790 = vadd.f32 0.0, %v1789
        %v1791 = vpop.f32.mrf.mxu0
        %1792 = vmatprep.mubr.f32.mxu0 0.0
        %1793 = vmatmul.mubr.f32.gmra.mxu0 %v1692
        %v1794 = vpop.f32.mrf.mxu0
        %v1795 = vadd.f32 0.0, %v1794
        %v1796 = vpop.f32.mrf.mxu0
        %1797 = vmatprep.mubr.f32.mxu0 0.0
        %1798 = vmatmul.mubr.f32.gmra.mxu0 %v1695
        %v1799 = vpop.f32.mrf.mxu0
        %v1800 = vadd.f32 0.0, %v1799
        %v1801 = vpop.f32.mrf.mxu0
        %1802 = vmatprep.mubr.f32.mxu0 0.0
        %1803 = vmatmul.mubr.f32.gmra.mxu0 %v1698
        %v1804 = vpop.f32.mrf.mxu0
        %v1805 = vadd.f32 0.0, %v1804
        %v1806 = vpop.f32.mrf.mxu0
        %1807 = vdwg.mxu0
        %v1808 = vadd.f32 %v1658, %v1770
        %v1809 = vadd.f32 %v1659, %v1775
        %v1810 = vadd.f32 %v1660, %v1780
        %v1811 = vadd.f32 %v1661, %v1785
        %v1812 = vadd.f32 %v1662, %v1790
        %v1813 = vadd.f32 %v1663, %v1795
        %v1814 = vadd.f32 %v1664, %v1800
        %v1815 = vadd.f32 %v1665, %v1805
        %v1816 = vld [vmem:[#allocation2 + $0x4] sm:$0xff]
        %v1817 = vld [vmem:[#allocation2 + $0xc] sm:$0xff]
        %v1818 = vld [vmem:[#allocation2 + $0x14] sm:$0xff]
        %v1819 = vld [vmem:[#allocation2 + $0x1c] sm:$0xff]
        %v1820 = vld [vmem:[#allocation2 + $0x24] sm:$0xff]
        %v1821 = vld [vmem:[#allocation2 + $0x2c] sm:$0xff]
        %v1822 = vld [vmem:[#allocation2 + $0x34] sm:$0xff]
        %v1823 = vld [vmem:[#allocation2 + $0x3c] sm:$0xf]
        %s1824 = scalar_lea.vmem [#allocation10], 16
        %v1825 = vld [vmem:[%s1824] sm:$0xf]
        %v1827 = vsel %vm1223, %v1816, 0
        %v1830 = vsel %vm1223, %v1817, 0
        %v1833 = vsel %vm1223, %v1818, 0
        %v1836 = vsel %vm1223, %v1819, 0
        %v1839 = vsel %vm1223, %v1820, 0
        %v1842 = vsel %vm1223, %v1821, 0
        %v1845 = vsel %vm1223, %v1822, 0
        %v1848 = vsel %vm1223, %v1823, 0
        %v1851 = vsel %vm1275, %v1825, 0
        %1853 = vmatprep.subr.mxu0 0.0
        %1854 = vmatpush1.msra.mxu0 0.0
        %1855 = vmatprep.subr.mxu0 0.0
        %1856 = vmatpush1.msra.mxu0 0.0
        %1857 = vmatprep.subr.mxu0 0.0
        %1858 = vmatpush1.msra.mxu0 0.0
        %1859 = vmatprep.subr.mxu0 0.0
        %1860 = vmatpush1.msra.mxu0 0.0
        %1861 = vmatprep.subr.mxu0 0.0
        %1862 = vmatpush1.msra.mxu0 0.0
        %1863 = vmatprep.subr.mxu0 0.0
        %1864 = vmatpush1.msra.mxu0 0.0
        %1865 = vmatprep.subr.mxu0 0.0
        %1866 = vmatpush1.msra.mxu0 0.0
        %1867 = vmatprep.subr.mxu0 0.0
        %1868 = vmatpush1.msra.mxu0 0.0
        %1869 = vmatprep.subr.mxu0 0.0
        %1870 = vmatpush1.msra.mxu0 0.0
        %1871 = vmatprep.subr.mxu0 0.0
        %1872 = vmatpush1.msra.mxu0 0.0
        %1873 = vmatprep.subr.mxu0 0.0
        %1874 = vmatpush1.msra.mxu0 0.0
        %1875 = vmatprep.subr.mxu0 0.0
        %1876 = vmatpush1.msra.mxu0 0.0
        %1877 = vmatprep.subr.mxu0 0.0
        %1878 = vmatpush1.msra.mxu0 0.0
        %1879 = vmatprep.subr.mxu0 0.0
        %1880 = vmatpush1.msra.mxu0 0.0
        %1881 = vmatprep.subr.mxu0 0.0
        %1882 = vmatpush1.msra.mxu0 0.0
        %1883 = vmatprep.subr.mxu0 0.0
        %1884 = vmatpush1.msra.mxu0 %v1851
        %1885 = vmatprep.subr.mxu0 0.0
        %1886 = vmatpush2.msra.mxu0 0.0
        %1887 = vmatprep.subr.mxu0 0.0
        %1888 = vmatpush2.msra.mxu0 0.0
        %1889 = vmatprep.subr.mxu0 0.0
        %1890 = vmatpush2.msra.mxu0 0.0
        %1891 = vmatprep.subr.mxu0 0.0
        %1892 = vmatpush2.msra.mxu0 0.0
        %1893 = vmatprep.subr.mxu0 0.0
        %1894 = vmatpush2.msra.mxu0 0.0
        %1895 = vmatprep.subr.mxu0 0.0
        %1896 = vmatpush2.msra.mxu0 0.0
        %1897 = vmatprep.subr.mxu0 0.0
        %1898 = vmatpush2.msra.mxu0 0.0
        %1899 = vmatprep.subr.mxu0 0.0
        %1900 = vmatpush2.msra.mxu0 0.0
        %1901 = vmatprep.subr.mxu0 0.0
        %1902 = vmatpush2.msra.mxu0 0.0
        %1903 = vmatprep.subr.mxu0 0.0
        %1904 = vmatpush2.msra.mxu0 0.0
        %1905 = vmatprep.subr.mxu0 0.0
        %1906 = vmatpush2.msra.mxu0 0.0
        %1907 = vmatprep.subr.mxu0 0.0
        %1908 = vmatpush2.msra.mxu0 0.0
        %1909 = vmatprep.subr.mxu0 0.0
        %1910 = vmatpush2.msra.mxu0 0.0
        %1911 = vmatprep.subr.mxu0 0.0
        %1912 = vmatpush2.msra.mxu0 0.0
        %1913 = vmatprep.subr.mxu0 0.0
        %1914 = vmatpush2.msra.mxu0 0.0
        %1915 = vmatprep.subr.mxu0 0.0
        %1916 = vmatpush2.msra.mxu0 0.0
        %1917 = vmatprep.mubr.f32.mxu0 0.0
        %1918 = vmatmul.mubr.f32.gmra.mxu0 %v1827
        %v1919 = vpop.f32.mrf.mxu0
        %v1920 = vadd.f32 0.0, %v1919
        %v1921 = vpop.f32.mrf.mxu0
        %1922 = vmatprep.mubr.f32.mxu0 0.0
        %1923 = vmatmul.mubr.f32.gmra.mxu0 %v1830
        %v1924 = vpop.f32.mrf.mxu0
        %v1925 = vadd.f32 0.0, %v1924
        %v1926 = vpop.f32.mrf.mxu0
        %1927 = vmatprep.mubr.f32.mxu0 0.0
        %1928 = vmatmul.mubr.f32.gmra.mxu0 %v1833
        %v1929 = vpop.f32.mrf.mxu0
        %v1930 = vadd.f32 0.0, %v1929
        %v1931 = vpop.f32.mrf.mxu0
        %1932 = vmatprep.mubr.f32.mxu0 0.0
        %1933 = vmatmul.mubr.f32.gmra.mxu0 %v1836
        %v1934 = vpop.f32.mrf.mxu0
        %v1935 = vadd.f32 0.0, %v1934
        %v1936 = vpop.f32.mrf.mxu0
        %1937 = vmatprep.mubr.f32.mxu0 0.0
        %1938 = vmatmul.mubr.f32.gmra.mxu0 %v1839
        %v1939 = vpop.f32.mrf.mxu0
        %v1940 = vadd.f32 0.0, %v1939
        %v1941 = vpop.f32.mrf.mxu0
        %1942 = vmatprep.mubr.f32.mxu0 0.0
        %1943 = vmatmul.mubr.f32.gmra.mxu0 %v1842
        %v1944 = vpop.f32.mrf.mxu0
        %v1945 = vadd.f32 0.0, %v1944
        %v1946 = vpop.f32.mrf.mxu0
        %1947 = vmatprep.mubr.f32.mxu0 0.0
        %1948 = vmatmul.mubr.f32.gmra.mxu0 %v1845
        %v1949 = vpop.f32.mrf.mxu0
        %v1950 = vadd.f32 0.0, %v1949
        %v1951 = vpop.f32.mrf.mxu0
        %1952 = vmatprep.mubr.f32.mxu0 0.0
        %1953 = vmatmul.mubr.f32.gmra.mxu0 %v1848
        %v1954 = vpop.f32.mrf.mxu0
        %v1955 = vadd.f32 0.0, %v1954
        %v1956 = vpop.f32.mrf.mxu0
        %1957 = vdwg.mxu0
        %v1958 = vadd.f32 %v1808, %v1920
        %v1959 = vadd.f32 %v1809, %v1925
        %v1960 = vadd.f32 %v1810, %v1930
        %v1961 = vadd.f32 %v1811, %v1935
        %v1962 = vadd.f32 %v1812, %v1940
        %v1963 = vadd.f32 %v1813, %v1945
        %v1964 = vadd.f32 %v1814, %v1950
        %v1965 = vadd.f32 %v1815, %v1955
        %v1966 = vld [vmem:[#allocation2 + $0x5] sm:$0xff]
        %v1967 = vld [vmem:[#allocation2 + $0xd] sm:$0xff]
        %v1968 = vld [vmem:[#allocation2 + $0x15] sm:$0xff]
        %v1969 = vld [vmem:[#allocation2 + $0x1d] sm:$0xff]
        %v1970 = vld [vmem:[#allocation2 + $0x25] sm:$0xff]
        %v1971 = vld [vmem:[#allocation2 + $0x2d] sm:$0xff]
        %v1972 = vld [vmem:[#allocation2 + $0x35] sm:$0xff]
        %v1973 = vld [vmem:[#allocation2 + $0x3d] sm:$0xf]
        %s1974 = scalar_lea.vmem [#allocation10], 20
        %v1975 = vld [vmem:[%s1974] sm:$0xf]
        %v1977 = vsel %vm1223, %v1966, 0
        %v1980 = vsel %vm1223, %v1967, 0
        %v1983 = vsel %vm1223, %v1968, 0
        %v1986 = vsel %vm1223, %v1969, 0
        %v1989 = vsel %vm1223, %v1970, 0
        %v1992 = vsel %vm1223, %v1971, 0
        %v1995 = vsel %vm1223, %v1972, 0
        %v1998 = vsel %vm1223, %v1973, 0
        %v2001 = vsel %vm1275, %v1975, 0
        %2003 = vmatprep.subr.mxu0 0.0
        %2004 = vmatpush1.msra.mxu0 0.0
        %2005 = vmatprep.subr.mxu0 0.0
        %2006 = vmatpush1.msra.mxu0 0.0
        %2007 = vmatprep.subr.mxu0 0.0
        %2008 = vmatpush1.msra.mxu0 0.0
        %2009 = vmatprep.subr.mxu0 0.0
        %2010 = vmatpush1.msra.mxu0 0.0
        %2011 = vmatprep.subr.mxu0 0.0
        %2012 = vmatpush1.msra.mxu0 0.0
        %2013 = vmatprep.subr.mxu0 0.0
        %2014 = vmatpush1.msra.mxu0 0.0
        %2015 = vmatprep.subr.mxu0 0.0
        %2016 = vmatpush1.msra.mxu0 0.0
        %2017 = vmatprep.subr.mxu0 0.0
        %2018 = vmatpush1.msra.mxu0 0.0
        %2019 = vmatprep.subr.mxu0 0.0
        %2020 = vmatpush1.msra.mxu0 0.0
        %2021 = vmatprep.subr.mxu0 0.0
        %2022 = vmatpush1.msra.mxu0 0.0
        %2023 = vmatprep.subr.mxu0 0.0
        %2024 = vmatpush1.msra.mxu0 0.0
        %2025 = vmatprep.subr.mxu0 0.0
        %2026 = vmatpush1.msra.mxu0 0.0
        %2027 = vmatprep.subr.mxu0 0.0
        %2028 = vmatpush1.msra.mxu0 0.0
        %2029 = vmatprep.subr.mxu0 0.0
        %2030 = vmatpush1.msra.mxu0 0.0
        %2031 = vmatprep.subr.mxu0 0.0
        %2032 = vmatpush1.msra.mxu0 0.0
        %2033 = vmatprep.subr.mxu0 0.0
        %2034 = vmatpush1.msra.mxu0 %v2001
        %2035 = vmatprep.subr.mxu0 0.0
        %2036 = vmatpush2.msra.mxu0 0.0
        %2037 = vmatprep.subr.mxu0 0.0
        %2038 = vmatpush2.msra.mxu0 0.0
        %2039 = vmatprep.subr.mxu0 0.0
        %2040 = vmatpush2.msra.mxu0 0.0
        %2041 = vmatprep.subr.mxu0 0.0
        %2042 = vmatpush2.msra.mxu0 0.0
        %2043 = vmatprep.subr.mxu0 0.0
        %2044 = vmatpush2.msra.mxu0 0.0
        %2045 = vmatprep.subr.mxu0 0.0
        %2046 = vmatpush2.msra.mxu0 0.0
        %2047 = vmatprep.subr.mxu0 0.0
        %2048 = vmatpush2.msra.mxu0 0.0
        %2049 = vmatprep.subr.mxu0 0.0
        %2050 = vmatpush2.msra.mxu0 0.0
        %2051 = vmatprep.subr.mxu0 0.0
        %2052 = vmatpush2.msra.mxu0 0.0
        %2053 = vmatprep.subr.mxu0 0.0
        %2054 = vmatpush2.msra.mxu0 0.0
        %2055 = vmatprep.subr.mxu0 0.0
        %2056 = vmatpush2.msra.mxu0 0.0
        %2057 = vmatprep.subr.mxu0 0.0
        %2058 = vmatpush2.msra.mxu0 0.0
        %2059 = vmatprep.subr.mxu0 0.0
        %2060 = vmatpush2.msra.mxu0 0.0
        %2061 = vmatprep.subr.mxu0 0.0
        %2062 = vmatpush2.msra.mxu0 0.0
        %2063 = vmatprep.subr.mxu0 0.0
        %2064 = vmatpush2.msra.mxu0 0.0
        %2065 = vmatprep.subr.mxu0 0.0
        %2066 = vmatpush2.msra.mxu0 0.0
        %2067 = vmatprep.mubr.f32.mxu0 0.0
        %2068 = vmatmul.mubr.f32.gmra.mxu0 %v1977
        %v2069 = vpop.f32.mrf.mxu0
        %v2070 = vadd.f32 0.0, %v2069
        %v2071 = vpop.f32.mrf.mxu0
        %2072 = vmatprep.mubr.f32.mxu0 0.0
        %2073 = vmatmul.mubr.f32.gmra.mxu0 %v1980
        %v2074 = vpop.f32.mrf.mxu0
        %v2075 = vadd.f32 0.0, %v2074
        %v2076 = vpop.f32.mrf.mxu0
        %2077 = vmatprep.mubr.f32.mxu0 0.0
        %2078 = vmatmul.mubr.f32.gmra.mxu0 %v1983
        %v2079 = vpop.f32.mrf.mxu0
        %v2080 = vadd.f32 0.0, %v2079
        %v2081 = vpop.f32.mrf.mxu0
        %2082 = vmatprep.mubr.f32.mxu0 0.0
        %2083 = vmatmul.mubr.f32.gmra.mxu0 %v1986
        %v2084 = vpop.f32.mrf.mxu0
        %v2085 = vadd.f32 0.0, %v2084
        %v2086 = vpop.f32.mrf.mxu0
        %2087 = vmatprep.mubr.f32.mxu0 0.0
        %2088 = vmatmul.mubr.f32.gmra.mxu0 %v1989
        %v2089 = vpop.f32.mrf.mxu0
        %v2090 = vadd.f32 0.0, %v2089
        %v2091 = vpop.f32.mrf.mxu0
        %2092 = vmatprep.mubr.f32.mxu0 0.0
        %2093 = vmatmul.mubr.f32.gmra.mxu0 %v1992
        %v2094 = vpop.f32.mrf.mxu0
        %v2095 = vadd.f32 0.0, %v2094
        %v2096 = vpop.f32.mrf.mxu0
        %2097 = vmatprep.mubr.f32.mxu0 0.0
        %2098 = vmatmul.mubr.f32.gmra.mxu0 %v1995
        %v2099 = vpop.f32.mrf.mxu0
        %v2100 = vadd.f32 0.0, %v2099
        %v2101 = vpop.f32.mrf.mxu0
        %2102 = vmatprep.mubr.f32.mxu0 0.0
        %2103 = vmatmul.mubr.f32.gmra.mxu0 %v1998
        %v2104 = vpop.f32.mrf.mxu0
        %v2105 = vadd.f32 0.0, %v2104
        %v2106 = vpop.f32.mrf.mxu0
        %2107 = vdwg.mxu0
        %v2108 = vadd.f32 %v1958, %v2070
        %v2109 = vadd.f32 %v1959, %v2075
        %v2110 = vadd.f32 %v1960, %v2080
        %v2111 = vadd.f32 %v1961, %v2085
        %v2112 = vadd.f32 %v1962, %v2090
        %v2113 = vadd.f32 %v1963, %v2095
        %v2114 = vadd.f32 %v1964, %v2100
        %v2115 = vadd.f32 %v1965, %v2105
        %v2116 = vld [vmem:[#allocation2 + $0x6] sm:$0xff]
        %v2117 = vld [vmem:[#allocation2 + $0xe] sm:$0xff]
        %v2118 = vld [vmem:[#allocation2 + $0x16] sm:$0xff]
        %v2119 = vld [vmem:[#allocation2 + $0x1e] sm:$0xff]
        %v2120 = vld [vmem:[#allocation2 + $0x26] sm:$0xff]
        %v2121 = vld [vmem:[#allocation2 + $0x2e] sm:$0xff]
        %v2122 = vld [vmem:[#allocation2 + $0x36] sm:$0xff]
        %v2123 = vld [vmem:[#allocation2 + $0x3e] sm:$0xf]
        %s2124 = scalar_lea.vmem [#allocation10], 24
        %v2125 = vld [vmem:[%s2124] sm:$0xf]
        %v2127 = vsel %vm1223, %v2116, 0
        %v2130 = vsel %vm1223, %v2117, 0
        %v2133 = vsel %vm1223, %v2118, 0
        %v2136 = vsel %vm1223, %v2119, 0
        %v2139 = vsel %vm1223, %v2120, 0
        %v2142 = vsel %vm1223, %v2121, 0
        %v2145 = vsel %vm1223, %v2122, 0
        %v2148 = vsel %vm1223, %v2123, 0
        %v2151 = vsel %vm1275, %v2125, 0
        %2153 = vmatprep.subr.mxu0 0.0
        %2154 = vmatpush1.msra.mxu0 0.0
        %2155 = vmatprep.subr.mxu0 0.0
        %2156 = vmatpush1.msra.mxu0 0.0
        %2157 = vmatprep.subr.mxu0 0.0
        %2158 = vmatpush1.msra.mxu0 0.0
        %2159 = vmatprep.subr.mxu0 0.0
        %2160 = vmatpush1.msra.mxu0 0.0
        %2161 = vmatprep.subr.mxu0 0.0
        %2162 = vmatpush1.msra.mxu0 0.0
        %2163 = vmatprep.subr.mxu0 0.0
        %2164 = vmatpush1.msra.mxu0 0.0
        %2165 = vmatprep.subr.mxu0 0.0
        %2166 = vmatpush1.msra.mxu0 0.0
        %2167 = vmatprep.subr.mxu0 0.0
        %2168 = vmatpush1.msra.mxu0 0.0
        %2169 = vmatprep.subr.mxu0 0.0
        %2170 = vmatpush1.msra.mxu0 0.0
        %2171 = vmatprep.subr.mxu0 0.0
        %2172 = vmatpush1.msra.mxu0 0.0
        %2173 = vmatprep.subr.mxu0 0.0
        %2174 = vmatpush1.msra.mxu0 0.0
        %2175 = vmatprep.subr.mxu0 0.0
        %2176 = vmatpush1.msra.mxu0 0.0
        %2177 = vmatprep.subr.mxu0 0.0
        %2178 = vmatpush1.msra.mxu0 0.0
        %2179 = vmatprep.subr.mxu0 0.0
        %2180 = vmatpush1.msra.mxu0 0.0
        %2181 = vmatprep.subr.mxu0 0.0
        %2182 = vmatpush1.msra.mxu0 0.0
        %2183 = vmatprep.subr.mxu0 0.0
        %2184 = vmatpush1.msra.mxu0 %v2151
        %2185 = vmatprep.subr.mxu0 0.0
        %2186 = vmatpush2.msra.mxu0 0.0
        %2187 = vmatprep.subr.mxu0 0.0
        %2188 = vmatpush2.msra.mxu0 0.0
        %2189 = vmatprep.subr.mxu0 0.0
        %2190 = vmatpush2.msra.mxu0 0.0
        %2191 = vmatprep.subr.mxu0 0.0
        %2192 = vmatpush2.msra.mxu0 0.0
        %2193 = vmatprep.subr.mxu0 0.0
        %2194 = vmatpush2.msra.mxu0 0.0
        %2195 = vmatprep.subr.mxu0 0.0
        %2196 = vmatpush2.msra.mxu0 0.0
        %2197 = vmatprep.subr.mxu0 0.0
        %2198 = vmatpush2.msra.mxu0 0.0
        %2199 = vmatprep.subr.mxu0 0.0
        %2200 = vmatpush2.msra.mxu0 0.0
        %2201 = vmatprep.subr.mxu0 0.0
        %2202 = vmatpush2.msra.mxu0 0.0
        %2203 = vmatprep.subr.mxu0 0.0
        %2204 = vmatpush2.msra.mxu0 0.0
        %2205 = vmatprep.subr.mxu0 0.0
        %2206 = vmatpush2.msra.mxu0 0.0
        %2207 = vmatprep.subr.mxu0 0.0
        %2208 = vmatpush2.msra.mxu0 0.0
        %2209 = vmatprep.subr.mxu0 0.0
        %2210 = vmatpush2.msra.mxu0 0.0
        %2211 = vmatprep.subr.mxu0 0.0
        %2212 = vmatpush2.msra.mxu0 0.0
        %2213 = vmatprep.subr.mxu0 0.0
        %2214 = vmatpush2.msra.mxu0 0.0
        %2215 = vmatprep.subr.mxu0 0.0
        %2216 = vmatpush2.msra.mxu0 0.0
        %2217 = vmatprep.mubr.f32.mxu0 0.0
        %2218 = vmatmul.mubr.f32.gmra.mxu0 %v2127
        %v2219 = vpop.f32.mrf.mxu0
        %v2220 = vadd.f32 0.0, %v2219
        %v2221 = vpop.f32.mrf.mxu0
        %2222 = vmatprep.mubr.f32.mxu0 0.0
        %2223 = vmatmul.mubr.f32.gmra.mxu0 %v2130
        %v2224 = vpop.f32.mrf.mxu0
        %v2225 = vadd.f32 0.0, %v2224
        %v2226 = vpop.f32.mrf.mxu0
        %2227 = vmatprep.mubr.f32.mxu0 0.0
        %2228 = vmatmul.mubr.f32.gmra.mxu0 %v2133
        %v2229 = vpop.f32.mrf.mxu0
        %v2230 = vadd.f32 0.0, %v2229
        %v2231 = vpop.f32.mrf.mxu0
        %2232 = vmatprep.mubr.f32.mxu0 0.0
        %2233 = vmatmul.mubr.f32.gmra.mxu0 %v2136
        %v2234 = vpop.f32.mrf.mxu0
        %v2235 = vadd.f32 0.0, %v2234
        %v2236 = vpop.f32.mrf.mxu0
        %2237 = vmatprep.mubr.f32.mxu0 0.0
        %2238 = vmatmul.mubr.f32.gmra.mxu0 %v2139
        %v2239 = vpop.f32.mrf.mxu0
        %v2240 = vadd.f32 0.0, %v2239
        %v2241 = vpop.f32.mrf.mxu0
        %2242 = vmatprep.mubr.f32.mxu0 0.0
        %2243 = vmatmul.mubr.f32.gmra.mxu0 %v2142
        %v2244 = vpop.f32.mrf.mxu0
        %v2245 = vadd.f32 0.0, %v2244
        %v2246 = vpop.f32.mrf.mxu0
        %2247 = vmatprep.mubr.f32.mxu0 0.0
        %2248 = vmatmul.mubr.f32.gmra.mxu0 %v2145
        %v2249 = vpop.f32.mrf.mxu0
        %v2250 = vadd.f32 0.0, %v2249
        %v2251 = vpop.f32.mrf.mxu0
        %2252 = vmatprep.mubr.f32.mxu0 0.0
        %2253 = vmatmul.mubr.f32.gmra.mxu0 %v2148
        %v2254 = vpop.f32.mrf.mxu0
        %v2255 = vadd.f32 0.0, %v2254
        %v2256 = vpop.f32.mrf.mxu0
        %2257 = vdwg.mxu0
        %v2258 = vadd.f32 %v2108, %v2220
        %v2259 = vadd.f32 %v2109, %v2225
        %v2260 = vadd.f32 %v2110, %v2230
        %v2261 = vadd.f32 %v2111, %v2235
        %v2262 = vadd.f32 %v2112, %v2240
        %v2263 = vadd.f32 %v2113, %v2245
        %v2264 = vadd.f32 %v2114, %v2250
        %v2265 = vadd.f32 %v2115, %v2255
        %v2266 = vld [vmem:[#allocation11] sm:$0x1]
        %v2268 = vlaneseq
        %v2269 = vshrl.u32 %v2268, 7
        %v2270 = vsub.s32 0, %v2269
        %v2271 = vrot.slane %v2266, %v2270
        %v2273 = vadd.f32 %v2258, %v2271
        %v2274 = vadd.f32 %v2259, %v2271
        %v2275 = vadd.f32 %v2260, %v2271
        %v2276 = vadd.f32 %v2261, %v2271
        %v2277 = vadd.f32 %v2262, %v2271
        %v2278 = vadd.f32 %v2263, %v2271
        %v2279 = vadd.f32 %v2264, %v2271
        %v2280 = vadd.f32 %v2265, %v2271
        %v2281 = vmax.f32 %v2273, 0.0
        %v2282 = vmax.f32 %v2274, 0.0
        %v2283 = vmax.f32 %v2275, 0.0
        %v2284 = vmax.f32 %v2276, 0.0
        %v2285 = vmax.f32 %v2277, 0.0
        %v2286 = vmax.f32 %v2278, 0.0
        %v2287 = vmax.f32 %v2279, 0.0
        %v2288 = vmax.f32 %v2280, 0.0
        %vm2289 = vcmask 261120
        %2290 = vst.msk [vmem:[#allocation3] sm:$0xff] %vm2289, %v2281
        %2291 = vst.msk [vmem:[#allocation3 + $0x8] sm:$0xff] %vm2289, %v2282
        %2292 = vst.msk [vmem:[#allocation3 + $0x10] sm:$0xff] %vm2289, %v2283
        %2293 = vst.msk [vmem:[#allocation3 + $0x18] sm:$0xff] %vm2289, %v2284
        %2294 = vst.msk [vmem:[#allocation3 + $0x20] sm:$0xff] %vm2289, %v2285
        %2295 = vst.msk [vmem:[#allocation3 + $0x28] sm:$0xff] %vm2289, %v2286
        %2296 = vst.msk [vmem:[#allocation3 + $0x30] sm:$0xff] %vm2289, %v2287
        %vm2297 = vcmask 257024
        %2298 = vst.msk [vmem:[#allocation3 + $0x38] sm:$0xf] %vm2297, %v2288
        %v2299 = vld [vmem:[#allocation3] ss:$2 sm:$0xff]
        %s2300 = scalar_lea.vmem [#allocation3], 16
        %v2301 = vld [vmem:[%s2300] ss:$2 sm:$0xff]
        %s2302 = scalar_lea.vmem [#allocation3], 32
        %v2303 = vld [vmem:[%s2302] ss:$2 sm:$0xff]
        %s2304 = scalar_lea.vmem [#allocation3], 48
        %v2305 = vld [vmem:[%s2304] ss:$2 sm:$0x3f]
        %s2306 = scalar_lea.vmem [#allocation3], 1
        %v2307 = vld [vmem:[%s2306] ss:$2 sm:$0xff]
        %s2308 = scalar_lea.vmem [#allocation3], 17
        %v2309 = vld [vmem:[%s2308] ss:$2 sm:$0xff]
        %s2310 = scalar_lea.vmem [#allocation3], 33
        %v2311 = vld [vmem:[%s2310] ss:$2 sm:$0xff]
        %s2312 = scalar_lea.vmem [#allocation3], 49
        %v2313 = vld [vmem:[%s2312] ss:$2 sm:$0x3f]
        %v2314 = vmax.f32 %v2299, %v2307
        %v2315 = vmax.f32 %v2301, %v2309
        %v2316 = vmax.f32 %v2303, %v2311
        %v2317 = vmax.f32 %v2305, %v2313
        %v2318 = vld [vmem:[%s11] sm:$0x1]
        %v2320 = vlaneseq
        %v2321 = vshrl.u32 %v2320, 7
        %v2322 = vsub.s32 0, %v2321
        %v2323 = vrot.slane %v2318, %v2322
        %v2325 = vmul.f32 %v2314, %v2323
        %v2326 = vmul.f32 %v2315, %v2323
        %v2327 = vmul.f32 %v2316, %v2323
        %v2328 = vmul.f32 %v2317, %v2323
        %v2329 = vld [vmem:[%s13] sm:$0x1]
        %v2331 = vlaneseq
        %v2332 = vshrl.u32 %v2331, 7
        %v2333 = vsub.s32 0, %v2332
        %v2334 = vrot.slane %v2329, %v2333
        %v2336 = vadd.f32 %v2325, %v2334
        %v2337 = vadd.f32 %v2326, %v2334
        %v2338 = vadd.f32 %v2327, %v2334
        %v2339 = vadd.f32 %v2328, %v2334
        %2340 = vst.msk [vmem:[#allocation2] sm:$0x1] %vm1220, 0.0
        %2341 = vst.msk [vmem:[#allocation2 + $0x1f] sm:$0x1] %vm1220, 0.0
        %2342 = vst.msk [vmem:[#allocation2 + $0x1] sm:$0xff] %vm2289, %v2336
        %2343 = vst.msk [vmem:[#allocation2 + $0x9] sm:$0xff] %vm2289, %v2337
        %2344 = vst.msk [vmem:[#allocation2 + $0x11] sm:$0xff] %vm2289, %v2338
        %vm2345 = vcmask 259072
        %2346 = vst.msk [vmem:[#allocation2 + $0x19] sm:$0x3f] %vm2345, %v2339
        %v2347 = vld [vmem:[#allocation2] sm:$0xff]
        %v2348 = vld [vmem:[#allocation2 + $0x8] sm:$0xff]
        %v2349 = vld [vmem:[#allocation2 + $0x10] sm:$0xf]
        %v2350 = vld [vmem:[%s15] sm:$0xff]
        %v2351 = vld [vmem:[%s15 + $0x8] sm:$0xff]
        %v2352 = vld [vmem:[%s15 + $0x10] sm:$0xff]
        %v2353 = vld [vmem:[%s15 + $0x18] sm:$0xff]
        %v2354 = vld [vmem:[#allocation2 + $0x2] sm:$0xff]
        %v2355 = vld [vmem:[#allocation2 + $0xa] sm:$0xff]
        %v2356 = vld [vmem:[#allocation2 + $0x12] sm:$0xf]
        %s2357 = scalar_lea.vmem %s15, 32
        %v2358 = vld [vmem:[%s2357] sm:$0xff]
        %v2359 = vld [vmem:[%s2357 + $0x8] sm:$0xff]
        %v2360 = vld [vmem:[%s2357 + $0x10] sm:$0xff]
        %v2361 = vld [vmem:[%s2357 + $0x18] sm:$0xff]
        %v2363 = vsel %vm2289, %v2354, 0
        %v2366 = vsel %vm2289, %v2355, 0
        %v2369 = vsel %vm2289, %v2356, 0
        %2371 = vmatprep.subr.mxu0 0.0
        %2372 = vmatpush1.msra.mxu0 0.0
        %2373 = vmatprep.subr.mxu0 0.0
        %2374 = vmatpush1.msra.mxu0 0.0
        %2375 = vmatprep.subr.mxu0 0.0
        %2376 = vmatpush1.msra.mxu0 0.0
        %2377 = vmatprep.subr.mxu0 0.0
        %2378 = vmatpush1.msra.mxu0 0.0
        %2379 = vmatprep.subr.mxu0 0.0
        %2380 = vmatpush1.msra.mxu0 0.0
        %2381 = vmatprep.subr.mxu0 0.0
        %2382 = vmatpush1.msra.mxu0 0.0
        %2383 = vmatprep.subr.mxu0 0.0
        %2384 = vmatpush1.msra.mxu0 0.0
        %2385 = vmatprep.subr.mxu0 0.0
        %2386 = vmatpush1.msra.mxu0 0.0
        %2387 = vmatprep.subr.mxu0 0.0
        %2388 = vmatpush1.msra.mxu0 0.0
        %2389 = vmatprep.subr.mxu0 0.0
        %2390 = vmatpush1.msra.mxu0 0.0
        %2391 = vmatprep.subr.mxu0 0.0
        %2392 = vmatpush1.msra.mxu0 0.0
        %2393 = vmatprep.subr.mxu0 0.0
        %2394 = vmatpush1.msra.mxu0 0.0
        %2395 = vmatprep.subr.mxu0 0.0
        %2396 = vmatpush1.msra.mxu0 %v2361
        %2397 = vmatprep.subr.mxu0 0.0
        %2398 = vmatpush1.msra.mxu0 %v2360
        %2399 = vmatprep.subr.mxu0 0.0
        %2400 = vmatpush1.msra.mxu0 %v2359
        %2401 = vmatprep.subr.mxu0 0.0
        %2402 = vmatpush1.msra.mxu0 %v2358
        %2403 = vmatprep.subr.mxu0 0.0
        %2404 = vmatpush2.msra.mxu0 0.0
        %2405 = vmatprep.subr.mxu0 0.0
        %2406 = vmatpush2.msra.mxu0 0.0
        %2407 = vmatprep.subr.mxu0 0.0
        %2408 = vmatpush2.msra.mxu0 0.0
        %2409 = vmatprep.subr.mxu0 0.0
        %2410 = vmatpush2.msra.mxu0 0.0
        %2411 = vmatprep.subr.mxu0 0.0
        %2412 = vmatpush2.msra.mxu0 0.0
        %2413 = vmatprep.subr.mxu0 0.0
        %2414 = vmatpush2.msra.mxu0 0.0
        %2415 = vmatprep.subr.mxu0 0.0
        %2416 = vmatpush2.msra.mxu0 0.0
        %2417 = vmatprep.subr.mxu0 0.0
        %2418 = vmatpush2.msra.mxu0 0.0
        %2419 = vmatprep.subr.mxu0 0.0
        %2420 = vmatpush2.msra.mxu0 0.0
        %2421 = vmatprep.subr.mxu0 0.0
        %2422 = vmatpush2.msra.mxu0 0.0
        %2423 = vmatprep.subr.mxu0 0.0
        %2424 = vmatpush2.msra.mxu0 0.0
        %2425 = vmatprep.subr.mxu0 0.0
        %2426 = vmatpush2.msra.mxu0 0.0
        %2427 = vmatprep.subr.mxu0 0.0
        %2428 = vmatpush2.msra.mxu0 0.0
        %2429 = vmatprep.subr.mxu0 0.0
        %2430 = vmatpush2.msra.mxu0 0.0
        %2431 = vmatprep.subr.mxu0 0.0
        %2432 = vmatpush2.msra.mxu0 0.0
        %2433 = vmatprep.subr.mxu0 0.0
        %2434 = vmatpush2.msra.mxu0 0.0
        %2435 = vmatprep.mubr.f32.mxu0 0.0
        %2436 = vmatmul.mubr.f32.gmra.mxu0 %v2363
        %v2437 = vpop.f32.mrf.mxu0
        %v2438 = vadd.f32 0.0, %v2437
        %v2439 = vpop.f32.mrf.mxu0
        %2440 = vmatprep.mubr.f32.mxu0 0.0
        %2441 = vmatmul.mubr.f32.gmra.mxu0 %v2366
        %v2442 = vpop.f32.mrf.mxu0
        %v2443 = vadd.f32 0.0, %v2442
        %v2444 = vpop.f32.mrf.mxu0
        %2445 = vmatprep.mubr.f32.mxu0 0.0
        %2446 = vmatmul.mubr.f32.gmra.mxu0 %v2369
        %v2447 = vpop.f32.mrf.mxu0
        %v2448 = vadd.f32 0.0, %v2447
        %v2449 = vpop.f32.mrf.mxu0
        %2450 = vdwg.mxu0
        %v2452 = vsel %vm2289, %v2347, 0
        %v2455 = vsel %vm2289, %v2348, 0
        %v2458 = vsel %vm2289, %v2349, 0
        %2460 = vmatprep.subr.mxu0 0.0
        %2461 = vmatpush1.msra.mxu0 0.0
        %2462 = vmatprep.subr.mxu0 0.0
        %2463 = vmatpush1.msra.mxu0 0.0
        %2464 = vmatprep.subr.mxu0 0.0
        %2465 = vmatpush1.msra.mxu0 0.0
        %2466 = vmatprep.subr.mxu0 0.0
        %2467 = vmatpush1.msra.mxu0 0.0
        %2468 = vmatprep.subr.mxu0 0.0
        %2469 = vmatpush1.msra.mxu0 0.0
        %2470 = vmatprep.subr.mxu0 0.0
        %2471 = vmatpush1.msra.mxu0 0.0
        %2472 = vmatprep.subr.mxu0 0.0
        %2473 = vmatpush1.msra.mxu0 0.0
        %2474 = vmatprep.subr.mxu0 0.0
        %2475 = vmatpush1.msra.mxu0 0.0
        %2476 = vmatprep.subr.mxu0 0.0
        %2477 = vmatpush1.msra.mxu0 0.0
        %2478 = vmatprep.subr.mxu0 0.0
        %2479 = vmatpush1.msra.mxu0 0.0
        %2480 = vmatprep.subr.mxu0 0.0
        %2481 = vmatpush1.msra.mxu0 0.0
        %2482 = vmatprep.subr.mxu0 0.0
        %2483 = vmatpush1.msra.mxu0 0.0
        %2484 = vmatprep.subr.mxu0 0.0
        %2485 = vmatpush1.msra.mxu0 %v2353
        %2486 = vmatprep.subr.mxu0 0.0
        %2487 = vmatpush1.msra.mxu0 %v2352
        %2488 = vmatprep.subr.mxu0 0.0
        %2489 = vmatpush1.msra.mxu0 %v2351
        %2490 = vmatprep.subr.mxu0 0.0
        %2491 = vmatpush1.msra.mxu0 %v2350
        %2492 = vmatprep.subr.mxu0 0.0
        %2493 = vmatpush2.msra.mxu0 0.0
        %2494 = vmatprep.subr.mxu0 0.0
        %2495 = vmatpush2.msra.mxu0 0.0
        %2496 = vmatprep.subr.mxu0 0.0
        %2497 = vmatpush2.msra.mxu0 0.0
        %2498 = vmatprep.subr.mxu0 0.0
        %2499 = vmatpush2.msra.mxu0 0.0
        %2500 = vmatprep.subr.mxu0 0.0
        %2501 = vmatpush2.msra.mxu0 0.0
        %2502 = vmatprep.subr.mxu0 0.0
        %2503 = vmatpush2.msra.mxu0 0.0
        %2504 = vmatprep.subr.mxu0 0.0
        %2505 = vmatpush2.msra.mxu0 0.0
        %2506 = vmatprep.subr.mxu0 0.0
        %2507 = vmatpush2.msra.mxu0 0.0
        %2508 = vmatprep.subr.mxu0 0.0
        %2509 = vmatpush2.msra.mxu0 0.0
        %2510 = vmatprep.subr.mxu0 0.0
        %2511 = vmatpush2.msra.mxu0 0.0
        %2512 = vmatprep.subr.mxu0 0.0
        %2513 = vmatpush2.msra.mxu0 0.0
        %2514 = vmatprep.subr.mxu0 0.0
        %2515 = vmatpush2.msra.mxu0 0.0
        %2516 = vmatprep.subr.mxu0 0.0
        %2517 = vmatpush2.msra.mxu0 0.0
        %2518 = vmatprep.subr.mxu0 0.0
        %2519 = vmatpush2.msra.mxu0 0.0
        %2520 = vmatprep.subr.mxu0 0.0
        %2521 = vmatpush2.msra.mxu0 0.0
        %2522 = vmatprep.subr.mxu0 0.0
        %2523 = vmatpush2.msra.mxu0 0.0
        %2524 = vmatprep.mubr.f32.mxu0 0.0
        %2525 = vmatmul.mubr.f32.gmra.mxu0 %v2452
        %v2526 = vpop.f32.mrf.mxu0
        %v2527 = vadd.f32 %v2438, %v2526
        %v2528 = vpop.f32.mrf.mxu0
        %2529 = vmatprep.mubr.f32.mxu0 0.0
        %2530 = vmatmul.mubr.f32.gmra.mxu0 %v2455
        %v2531 = vpop.f32.mrf.mxu0
        %v2532 = vadd.f32 %v2443, %v2531
        %v2533 = vpop.f32.mrf.mxu0
        %2534 = vmatprep.mubr.f32.mxu0 0.0
        %2535 = vmatmul.mubr.f32.gmra.mxu0 %v2458
        %v2536 = vpop.f32.mrf.mxu0
        %v2537 = vadd.f32 %v2448, %v2536
        %v2538 = vpop.f32.mrf.mxu0
        %2539 = vdwg.mxu0
        %v2540 = vld [vmem:[#allocation2 + $0x4] sm:$0xff]
        %v2541 = vld [vmem:[#allocation2 + $0xc] sm:$0xff]
        %v2542 = vld [vmem:[#allocation2 + $0x14] sm:$0xf]
        %s2543 = scalar_lea.vmem %s15, 64
        %v2544 = vld [vmem:[%s2543] sm:$0xff]
        %v2545 = vld [vmem:[%s2543 + $0x8] sm:$0xff]
        %v2546 = vld [vmem:[%s2543 + $0x10] sm:$0xff]
        %v2547 = vld [vmem:[%s2543 + $0x18] sm:$0xff]
        %v2549 = vsel %vm2289, %v2540, 0
        %v2552 = vsel %vm2289, %v2541, 0
        %v2555 = vsel %vm2289, %v2542, 0
        %2557 = vmatprep.subr.mxu0 0.0
        %2558 = vmatpush1.msra.mxu0 0.0
        %2559 = vmatprep.subr.mxu0 0.0
        %2560 = vmatpush1.msra.mxu0 0.0
        %2561 = vmatprep.subr.mxu0 0.0
        %2562 = vmatpush1.msra.mxu0 0.0
        %2563 = vmatprep.subr.mxu0 0.0
        %2564 = vmatpush1.msra.mxu0 0.0
        %2565 = vmatprep.subr.mxu0 0.0
        %2566 = vmatpush1.msra.mxu0 0.0
        %2567 = vmatprep.subr.mxu0 0.0
        %2568 = vmatpush1.msra.mxu0 0.0
        %2569 = vmatprep.subr.mxu0 0.0
        %2570 = vmatpush1.msra.mxu0 0.0
        %2571 = vmatprep.subr.mxu0 0.0
        %2572 = vmatpush1.msra.mxu0 0.0
        %2573 = vmatprep.subr.mxu0 0.0
        %2574 = vmatpush1.msra.mxu0 0.0
        %2575 = vmatprep.subr.mxu0 0.0
        %2576 = vmatpush1.msra.mxu0 0.0
        %2577 = vmatprep.subr.mxu0 0.0
        %2578 = vmatpush1.msra.mxu0 0.0
        %2579 = vmatprep.subr.mxu0 0.0
        %2580 = vmatpush1.msra.mxu0 0.0
        %2581 = vmatprep.subr.mxu0 0.0
        %2582 = vmatpush1.msra.mxu0 %v2547
        %2583 = vmatprep.subr.mxu0 0.0
        %2584 = vmatpush1.msra.mxu0 %v2546
        %2585 = vmatprep.subr.mxu0 0.0
        %2586 = vmatpush1.msra.mxu0 %v2545
        %2587 = vmatprep.subr.mxu0 0.0
        %2588 = vmatpush1.msra.mxu0 %v2544
        %2589 = vmatprep.subr.mxu0 0.0
        %2590 = vmatpush2.msra.mxu0 0.0
        %2591 = vmatprep.subr.mxu0 0.0
        %2592 = vmatpush2.msra.mxu0 0.0
        %2593 = vmatprep.subr.mxu0 0.0
        %2594 = vmatpush2.msra.mxu0 0.0
        %2595 = vmatprep.subr.mxu0 0.0
        %2596 = vmatpush2.msra.mxu0 0.0
        %2597 = vmatprep.subr.mxu0 0.0
        %2598 = vmatpush2.msra.mxu0 0.0
        %2599 = vmatprep.subr.mxu0 0.0
        %2600 = vmatpush2.msra.mxu0 0.0
        %2601 = vmatprep.subr.mxu0 0.0
        %2602 = vmatpush2.msra.mxu0 0.0
        %2603 = vmatprep.subr.mxu0 0.0
        %2604 = vmatpush2.msra.mxu0 0.0
        %2605 = vmatprep.subr.mxu0 0.0
        %2606 = vmatpush2.msra.mxu0 0.0
        %2607 = vmatprep.subr.mxu0 0.0
        %2608 = vmatpush2.msra.mxu0 0.0
        %2609 = vmatprep.subr.mxu0 0.0
        %2610 = vmatpush2.msra.mxu0 0.0
        %2611 = vmatprep.subr.mxu0 0.0
        %2612 = vmatpush2.msra.mxu0 0.0
        %2613 = vmatprep.subr.mxu0 0.0
        %2614 = vmatpush2.msra.mxu0 0.0
        %2615 = vmatprep.subr.mxu0 0.0
        %2616 = vmatpush2.msra.mxu0 0.0
        %2617 = vmatprep.subr.mxu0 0.0
        %2618 = vmatpush2.msra.mxu0 0.0
        %2619 = vmatprep.subr.mxu0 0.0
        %2620 = vmatpush2.msra.mxu0 0.0
        %2621 = vmatprep.mubr.f32.mxu0 0.0
        %2622 = vmatmul.mubr.f32.gmra.mxu0 %v2549
        %v2623 = vpop.f32.mrf.mxu0
        %v2624 = vadd.f32 0.0, %v2623
        %v2625 = vpop.f32.mrf.mxu0
        %2626 = vmatprep.mubr.f32.mxu0 0.0
        %2627 = vmatmul.mubr.f32.gmra.mxu0 %v2552
        %v2628 = vpop.f32.mrf.mxu0
        %v2629 = vadd.f32 0.0, %v2628
        %v2630 = vpop.f32.mrf.mxu0
        %2631 = vmatprep.mubr.f32.mxu0 0.0
        %2632 = vmatmul.mubr.f32.gmra.mxu0 %v2555
        %v2633 = vpop.f32.mrf.mxu0
        %v2634 = vadd.f32 0.0, %v2633
        %v2635 = vpop.f32.mrf.mxu0
        %2636 = vdwg.mxu0
        %v2637 = vadd.f32 %v2527, %v2624
        %v2638 = vadd.f32 %v2532, %v2629
        %v2639 = vadd.f32 %v2537, %v2634
        %v2640 = vld [vmem:[#allocation2 + $0x6] sm:$0xff]
        %v2641 = vld [vmem:[#allocation2 + $0xe] sm:$0xff]
        %v2642 = vld [vmem:[#allocation2 + $0x16] sm:$0xf]
        %s2643 = scalar_lea.vmem %s15, 96
        %v2644 = vld [vmem:[%s2643] sm:$0xff]
        %v2645 = vld [vmem:[%s2643 + $0x8] sm:$0xff]
        %v2646 = vld [vmem:[%s2643 + $0x10] sm:$0xff]
        %v2647 = vld [vmem:[%s2643 + $0x18] sm:$0xff]
        %v2649 = vsel %vm2289, %v2640, 0
        %v2652 = vsel %vm2289, %v2641, 0
        %v2655 = vsel %vm2289, %v2642, 0
        %2657 = vmatprep.subr.mxu0 0.0
        %2658 = vmatpush1.msra.mxu0 0.0
        %2659 = vmatprep.subr.mxu0 0.0
        %2660 = vmatpush1.msra.mxu0 0.0
        %2661 = vmatprep.subr.mxu0 0.0
        %2662 = vmatpush1.msra.mxu0 0.0
        %2663 = vmatprep.subr.mxu0 0.0
        %2664 = vmatpush1.msra.mxu0 0.0
        %2665 = vmatprep.subr.mxu0 0.0
        %2666 = vmatpush1.msra.mxu0 0.0
        %2667 = vmatprep.subr.mxu0 0.0
        %2668 = vmatpush1.msra.mxu0 0.0
        %2669 = vmatprep.subr.mxu0 0.0
        %2670 = vmatpush1.msra.mxu0 0.0
        %2671 = vmatprep.subr.mxu0 0.0
        %2672 = vmatpush1.msra.mxu0 0.0
        %2673 = vmatprep.subr.mxu0 0.0
        %2674 = vmatpush1.msra.mxu0 0.0
        %2675 = vmatprep.subr.mxu0 0.0
        %2676 = vmatpush1.msra.mxu0 0.0
        %2677 = vmatprep.subr.mxu0 0.0
        %2678 = vmatpush1.msra.mxu0 0.0
        %2679 = vmatprep.subr.mxu0 0.0
        %2680 = vmatpush1.msra.mxu0 0.0
        %2681 = vmatprep.subr.mxu0 0.0
        %2682 = vmatpush1.msra.mxu0 %v2647
        %2683 = vmatprep.subr.mxu0 0.0
        %2684 = vmatpush1.msra.mxu0 %v2646
        %2685 = vmatprep.subr.mxu0 0.0
        %2686 = vmatpush1.msra.mxu0 %v2645
        %2687 = vmatprep.subr.mxu0 0.0
        %2688 = vmatpush1.msra.mxu0 %v2644
        %2689 = vmatprep.subr.mxu0 0.0
        %2690 = vmatpush2.msra.mxu0 0.0
        %2691 = vmatprep.subr.mxu0 0.0
        %2692 = vmatpush2.msra.mxu0 0.0
        %2693 = vmatprep.subr.mxu0 0.0
        %2694 = vmatpush2.msra.mxu0 0.0
        %2695 = vmatprep.subr.mxu0 0.0
        %2696 = vmatpush2.msra.mxu0 0.0
        %2697 = vmatprep.subr.mxu0 0.0
        %2698 = vmatpush2.msra.mxu0 0.0
        %2699 = vmatprep.subr.mxu0 0.0
        %2700 = vmatpush2.msra.mxu0 0.0
        %2701 = vmatprep.subr.mxu0 0.0
        %2702 = vmatpush2.msra.mxu0 0.0
        %2703 = vmatprep.subr.mxu0 0.0
        %2704 = vmatpush2.msra.mxu0 0.0
        %2705 = vmatprep.subr.mxu0 0.0
        %2706 = vmatpush2.msra.mxu0 0.0
        %2707 = vmatprep.subr.mxu0 0.0
        %2708 = vmatpush2.msra.mxu0 0.0
        %2709 = vmatprep.subr.mxu0 0.0
        %2710 = vmatpush2.msra.mxu0 0.0
        %2711 = vmatprep.subr.mxu0 0.0
        %2712 = vmatpush2.msra.mxu0 0.0
        %2713 = vmatprep.subr.mxu0 0.0
        %2714 = vmatpush2.msra.mxu0 0.0
        %2715 = vmatprep.subr.mxu0 0.0
        %2716 = vmatpush2.msra.mxu0 0.0
        %2717 = vmatprep.subr.mxu0 0.0
        %2718 = vmatpush2.msra.mxu0 0.0
        %2719 = vmatprep.subr.mxu0 0.0
        %2720 = vmatpush2.msra.mxu0 0.0
        %2721 = vmatprep.mubr.f32.mxu0 0.0
        %2722 = vmatmul.mubr.f32.gmra.mxu0 %v2649
        %v2723 = vpop.f32.mrf.mxu0
        %v2724 = vadd.f32 0.0, %v2723
        %v2725 = vpop.f32.mrf.mxu0
        %2726 = vmatprep.mubr.f32.mxu0 0.0
        %2727 = vmatmul.mubr.f32.gmra.mxu0 %v2652
        %v2728 = vpop.f32.mrf.mxu0
        %v2729 = vadd.f32 0.0, %v2728
        %v2730 = vpop.f32.mrf.mxu0
        %2731 = vmatprep.mubr.f32.mxu0 0.0
        %2732 = vmatmul.mubr.f32.gmra.mxu0 %v2655
        %v2733 = vpop.f32.mrf.mxu0
        %v2734 = vadd.f32 0.0, %v2733
        %v2735 = vpop.f32.mrf.mxu0
        %2736 = vdwg.mxu0
        %v2737 = vadd.f32 %v2637, %v2724
        %v2738 = vadd.f32 %v2638, %v2729
        %v2739 = vadd.f32 %v2639, %v2734
        %v2740 = vld [vmem:[#allocation2 + $0x8] sm:$0xff]
        %v2741 = vld [vmem:[#allocation2 + $0x10] sm:$0xff]
        %v2742 = vld [vmem:[#allocation2 + $0x18] sm:$0xf]
        %s2743 = scalar_lea.vmem %s15, 128
        %v2744 = vld [vmem:[%s2743] sm:$0xff]
        %v2745 = vld [vmem:[%s2743 + $0x8] sm:$0xff]
        %v2746 = vld [vmem:[%s2743 + $0x10] sm:$0xff]
        %v2747 = vld [vmem:[%s2743 + $0x18] sm:$0xff]
        %v2749 = vsel %vm2289, %v2740, 0
        %v2752 = vsel %vm2289, %v2741, 0
        %v2755 = vsel %vm2289, %v2742, 0
        %2757 = vmatprep.subr.mxu0 0.0
        %2758 = vmatpush1.msra.mxu0 0.0
        %2759 = vmatprep.subr.mxu0 0.0
        %2760 = vmatpush1.msra.mxu0 0.0
        %2761 = vmatprep.subr.mxu0 0.0
        %2762 = vmatpush1.msra.mxu0 0.0
        %2763 = vmatprep.subr.mxu0 0.0
        %2764 = vmatpush1.msra.mxu0 0.0
        %2765 = vmatprep.subr.mxu0 0.0
        %2766 = vmatpush1.msra.mxu0 0.0
        %2767 = vmatprep.subr.mxu0 0.0
        %2768 = vmatpush1.msra.mxu0 0.0
        %2769 = vmatprep.subr.mxu0 0.0
        %2770 = vmatpush1.msra.mxu0 0.0
        %2771 = vmatprep.subr.mxu0 0.0
        %2772 = vmatpush1.msra.mxu0 0.0
        %2773 = vmatprep.subr.mxu0 0.0
        %2774 = vmatpush1.msra.mxu0 0.0
        %2775 = vmatprep.subr.mxu0 0.0
        %2776 = vmatpush1.msra.mxu0 0.0
        %2777 = vmatprep.subr.mxu0 0.0
        %2778 = vmatpush1.msra.mxu0 0.0
        %2779 = vmatprep.subr.mxu0 0.0
        %2780 = vmatpush1.msra.mxu0 0.0
        %2781 = vmatprep.subr.mxu0 0.0
        %2782 = vmatpush1.msra.mxu0 %v2747
        %2783 = vmatprep.subr.mxu0 0.0
        %2784 = vmatpush1.msra.mxu0 %v2746
        %2785 = vmatprep.subr.mxu0 0.0
        %2786 = vmatpush1.msra.mxu0 %v2745
        %2787 = vmatprep.subr.mxu0 0.0
        %2788 = vmatpush1.msra.mxu0 %v2744
        %2789 = vmatprep.subr.mxu0 0.0
        %2790 = vmatpush2.msra.mxu0 0.0
        %2791 = vmatprep.subr.mxu0 0.0
        %2792 = vmatpush2.msra.mxu0 0.0
        %2793 = vmatprep.subr.mxu0 0.0
        %2794 = vmatpush2.msra.mxu0 0.0
        %2795 = vmatprep.subr.mxu0 0.0
        %2796 = vmatpush2.msra.mxu0 0.0
        %2797 = vmatprep.subr.mxu0 0.0
        %2798 = vmatpush2.msra.mxu0 0.0
        %2799 = vmatprep.subr.mxu0 0.0
        %2800 = vmatpush2.msra.mxu0 0.0
        %2801 = vmatprep.subr.mxu0 0.0
        %2802 = vmatpush2.msra.mxu0 0.0
        %2803 = vmatprep.subr.mxu0 0.0
        %2804 = vmatpush2.msra.mxu0 0.0
        %2805 = vmatprep.subr.mxu0 0.0
        %2806 = vmatpush2.msra.mxu0 0.0
        %2807 = vmatprep.subr.mxu0 0.0
        %2808 = vmatpush2.msra.mxu0 0.0
        %2809 = vmatprep.subr.mxu0 0.0
        %2810 = vmatpush2.msra.mxu0 0.0
        %2811 = vmatprep.subr.mxu0 0.0
        %2812 = vmatpush2.msra.mxu0 0.0
        %2813 = vmatprep.subr.mxu0 0.0
        %2814 = vmatpush2.msra.mxu0 0.0
        %2815 = vmatprep.subr.mxu0 0.0
        %2816 = vmatpush2.msra.mxu0 0.0
        %2817 = vmatprep.subr.mxu0 0.0
        %2818 = vmatpush2.msra.mxu0 0.0
        %2819 = vmatprep.subr.mxu0 0.0
        %2820 = vmatpush2.msra.mxu0 0.0
        %2821 = vmatprep.mubr.f32.mxu0 0.0
        %2822 = vmatmul.mubr.f32.gmra.mxu0 %v2749
        %v2823 = vpop.f32.mrf.mxu0
        %v2824 = vadd.f32 0.0, %v2823
        %v2825 = vpop.f32.mrf.mxu0
        %2826 = vmatprep.mubr.f32.mxu0 0.0
        %2827 = vmatmul.mubr.f32.gmra.mxu0 %v2752
        %v2828 = vpop.f32.mrf.mxu0
        %v2829 = vadd.f32 0.0, %v2828
        %v2830 = vpop.f32.mrf.mxu0
        %2831 = vmatprep.mubr.f32.mxu0 0.0
        %2832 = vmatmul.mubr.f32.gmra.mxu0 %v2755
        %v2833 = vpop.f32.mrf.mxu0
        %v2834 = vadd.f32 0.0, %v2833
        %v2835 = vpop.f32.mrf.mxu0
        %2836 = vdwg.mxu0
        %v2837 = vadd.f32 %v2737, %v2824
        %v2838 = vadd.f32 %v2738, %v2829
        %v2839 = vadd.f32 %v2739, %v2834
        %v2840 = vld [vmem:[#allocation2 + $0xa] sm:$0xff]
        %v2841 = vld [vmem:[#allocation2 + $0x12] sm:$0xff]
        %v2842 = vld [vmem:[#allocation2 + $0x1a] sm:$0xf]
        %s2843 = scalar_lea.vmem %s15, 160
        %v2844 = vld [vmem:[%s2843] sm:$0xff]
        %v2845 = vld [vmem:[%s2843 + $0x8] sm:$0xff]
        %v2846 = vld [vmem:[%s2843 + $0x10] sm:$0xff]
        %v2847 = vld [vmem:[%s2843 + $0x18] sm:$0xff]
        %v2849 = vsel %vm2289, %v2840, 0
        %v2852 = vsel %vm2289, %v2841, 0
        %v2855 = vsel %vm2289, %v2842, 0
        %2857 = vmatprep.subr.mxu0 0.0
        %2858 = vmatpush1.msra.mxu0 0.0
        %2859 = vmatprep.subr.mxu0 0.0
        %2860 = vmatpush1.msra.mxu0 0.0
        %2861 = vmatprep.subr.mxu0 0.0
        %2862 = vmatpush1.msra.mxu0 0.0
        %2863 = vmatprep.subr.mxu0 0.0
        %2864 = vmatpush1.msra.mxu0 0.0
        %2865 = vmatprep.subr.mxu0 0.0
        %2866 = vmatpush1.msra.mxu0 0.0
        %2867 = vmatprep.subr.mxu0 0.0
        %2868 = vmatpush1.msra.mxu0 0.0
        %2869 = vmatprep.subr.mxu0 0.0
        %2870 = vmatpush1.msra.mxu0 0.0
        %2871 = vmatprep.subr.mxu0 0.0
        %2872 = vmatpush1.msra.mxu0 0.0
        %2873 = vmatprep.subr.mxu0 0.0
        %2874 = vmatpush1.msra.mxu0 0.0
        %2875 = vmatprep.subr.mxu0 0.0
        %2876 = vmatpush1.msra.mxu0 0.0
        %2877 = vmatprep.subr.mxu0 0.0
        %2878 = vmatpush1.msra.mxu0 0.0
        %2879 = vmatprep.subr.mxu0 0.0
        %2880 = vmatpush1.msra.mxu0 0.0
        %2881 = vmatprep.subr.mxu0 0.0
        %2882 = vmatpush1.msra.mxu0 %v2847
        %2883 = vmatprep.subr.mxu0 0.0
        %2884 = vmatpush1.msra.mxu0 %v2846
        %2885 = vmatprep.subr.mxu0 0.0
        %2886 = vmatpush1.msra.mxu0 %v2845
        %2887 = vmatprep.subr.mxu0 0.0
        %2888 = vmatpush1.msra.mxu0 %v2844
        %2889 = vmatprep.subr.mxu0 0.0
        %2890 = vmatpush2.msra.mxu0 0.0
        %2891 = vmatprep.subr.mxu0 0.0
        %2892 = vmatpush2.msra.mxu0 0.0
        %2893 = vmatprep.subr.mxu0 0.0
        %2894 = vmatpush2.msra.mxu0 0.0
        %2895 = vmatprep.subr.mxu0 0.0
        %2896 = vmatpush2.msra.mxu0 0.0
        %2897 = vmatprep.subr.mxu0 0.0
        %2898 = vmatpush2.msra.mxu0 0.0
        %2899 = vmatprep.subr.mxu0 0.0
        %2900 = vmatpush2.msra.mxu0 0.0
        %2901 = vmatprep.subr.mxu0 0.0
        %2902 = vmatpush2.msra.mxu0 0.0
        %2903 = vmatprep.subr.mxu0 0.0
        %2904 = vmatpush2.msra.mxu0 0.0
        %2905 = vmatprep.subr.mxu0 0.0
        %2906 = vmatpush2.msra.mxu0 0.0
        %2907 = vmatprep.subr.mxu0 0.0
        %2908 = vmatpush2.msra.mxu0 0.0
        %2909 = vmatprep.subr.mxu0 0.0
        %2910 = vmatpush2.msra.mxu0 0.0
        %2911 = vmatprep.subr.mxu0 0.0
        %2912 = vmatpush2.msra.mxu0 0.0
        %2913 = vmatprep.subr.mxu0 0.0
        %2914 = vmatpush2.msra.mxu0 0.0
        %2915 = vmatprep.subr.mxu0 0.0
        %2916 = vmatpush2.msra.mxu0 0.0
        %2917 = vmatprep.subr.mxu0 0.0
        %2918 = vmatpush2.msra.mxu0 0.0
        %2919 = vmatprep.subr.mxu0 0.0
        %2920 = vmatpush2.msra.mxu0 0.0
        %2921 = vmatprep.mubr.f32.mxu0 0.0
        %2922 = vmatmul.mubr.f32.gmra.mxu0 %v2849
        %v2923 = vpop.f32.mrf.mxu0
        %v2924 = vadd.f32 0.0, %v2923
        %v2925 = vpop.f32.mrf.mxu0
        %2926 = vmatprep.mubr.f32.mxu0 0.0
        %2927 = vmatmul.mubr.f32.gmra.mxu0 %v2852
        %v2928 = vpop.f32.mrf.mxu0
        %v2929 = vadd.f32 0.0, %v2928
        %v2930 = vpop.f32.mrf.mxu0
        %2931 = vmatprep.mubr.f32.mxu0 0.0
        %2932 = vmatmul.mubr.f32.gmra.mxu0 %v2855
        %v2933 = vpop.f32.mrf.mxu0
        %v2934 = vadd.f32 0.0, %v2933
        %v2935 = vpop.f32.mrf.mxu0
        %2936 = vdwg.mxu0
        %v2937 = vadd.f32 %v2837, %v2924
        %v2938 = vadd.f32 %v2838, %v2929
        %v2939 = vadd.f32 %v2839, %v2934
        %v2940 = vld [vmem:[#allocation2 + $0xc] sm:$0xff]
        %v2941 = vld [vmem:[#allocation2 + $0x14] sm:$0xff]
        %v2942 = vld [vmem:[#allocation2 + $0x1c] sm:$0xf]
        %s2943 = scalar_lea.vmem %s15, 192
        %v2944 = vld [vmem:[%s2943] sm:$0xff]
        %v2945 = vld [vmem:[%s2943 + $0x8] sm:$0xff]
        %v2946 = vld [vmem:[%s2943 + $0x10] sm:$0xff]
        %v2947 = vld [vmem:[%s2943 + $0x18] sm:$0xff]
        %v2949 = vsel %vm2289, %v2940, 0
        %v2952 = vsel %vm2289, %v2941, 0
        %v2955 = vsel %vm2289, %v2942, 0
        %2957 = vmatprep.subr.mxu0 0.0
        %2958 = vmatpush1.msra.mxu0 0.0
        %2959 = vmatprep.subr.mxu0 0.0
        %2960 = vmatpush1.msra.mxu0 0.0
        %2961 = vmatprep.subr.mxu0 0.0
        %2962 = vmatpush1.msra.mxu0 0.0
        %2963 = vmatprep.subr.mxu0 0.0
        %2964 = vmatpush1.msra.mxu0 0.0
        %2965 = vmatprep.subr.mxu0 0.0
        %2966 = vmatpush1.msra.mxu0 0.0
        %2967 = vmatprep.subr.mxu0 0.0
        %2968 = vmatpush1.msra.mxu0 0.0
        %2969 = vmatprep.subr.mxu0 0.0
        %2970 = vmatpush1.msra.mxu0 0.0
        %2971 = vmatprep.subr.mxu0 0.0
        %2972 = vmatpush1.msra.mxu0 0.0
        %2973 = vmatprep.subr.mxu0 0.0
        %2974 = vmatpush1.msra.mxu0 0.0
        %2975 = vmatprep.subr.mxu0 0.0
        %2976 = vmatpush1.msra.mxu0 0.0
        %2977 = vmatprep.subr.mxu0 0.0
        %2978 = vmatpush1.msra.mxu0 0.0
        %2979 = vmatprep.subr.mxu0 0.0
        %2980 = vmatpush1.msra.mxu0 0.0
        %2981 = vmatprep.subr.mxu0 0.0
        %2982 = vmatpush1.msra.mxu0 %v2947
        %2983 = vmatprep.subr.mxu0 0.0
        %2984 = vmatpush1.msra.mxu0 %v2946
        %2985 = vmatprep.subr.mxu0 0.0
        %2986 = vmatpush1.msra.mxu0 %v2945
        %2987 = vmatprep.subr.mxu0 0.0
        %2988 = vmatpush1.msra.mxu0 %v2944
        %2989 = vmatprep.subr.mxu0 0.0
        %2990 = vmatpush2.msra.mxu0 0.0
        %2991 = vmatprep.subr.mxu0 0.0
        %2992 = vmatpush2.msra.mxu0 0.0
        %2993 = vmatprep.subr.mxu0 0.0
        %2994 = vmatpush2.msra.mxu0 0.0
        %2995 = vmatprep.subr.mxu0 0.0
        %2996 = vmatpush2.msra.mxu0 0.0
        %2997 = vmatprep.subr.mxu0 0.0
        %2998 = vmatpush2.msra.mxu0 0.0
        %2999 = vmatprep.subr.mxu0 0.0
        %3000 = vmatpush2.msra.mxu0 0.0
        %3001 = vmatprep.subr.mxu0 0.0
        %3002 = vmatpush2.msra.mxu0 0.0
        %3003 = vmatprep.subr.mxu0 0.0
        %3004 = vmatpush2.msra.mxu0 0.0
        %3005 = vmatprep.subr.mxu0 0.0
        %3006 = vmatpush2.msra.mxu0 0.0
        %3007 = vmatprep.subr.mxu0 0.0
        %3008 = vmatpush2.msra.mxu0 0.0
        %3009 = vmatprep.subr.mxu0 0.0
        %3010 = vmatpush2.msra.mxu0 0.0
        %3011 = vmatprep.subr.mxu0 0.0
        %3012 = vmatpush2.msra.mxu0 0.0
        %3013 = vmatprep.subr.mxu0 0.0
        %3014 = vmatpush2.msra.mxu0 0.0
        %3015 = vmatprep.subr.mxu0 0.0
        %3016 = vmatpush2.msra.mxu0 0.0
        %3017 = vmatprep.subr.mxu0 0.0
        %3018 = vmatpush2.msra.mxu0 0.0
        %3019 = vmatprep.subr.mxu0 0.0
        %3020 = vmatpush2.msra.mxu0 0.0
        %3021 = vmatprep.mubr.f32.mxu0 0.0
        %3022 = vmatmul.mubr.f32.gmra.mxu0 %v2949
        %v3023 = vpop.f32.mrf.mxu0
        %v3024 = vadd.f32 0.0, %v3023
        %v3025 = vpop.f32.mrf.mxu0
        %3026 = vmatprep.mubr.f32.mxu0 0.0
        %3027 = vmatmul.mubr.f32.gmra.mxu0 %v2952
        %v3028 = vpop.f32.mrf.mxu0
        %v3029 = vadd.f32 0.0, %v3028
        %v3030 = vpop.f32.mrf.mxu0
        %3031 = vmatprep.mubr.f32.mxu0 0.0
        %3032 = vmatmul.mubr.f32.gmra.mxu0 %v2955
        %v3033 = vpop.f32.mrf.mxu0
        %v3034 = vadd.f32 0.0, %v3033
        %v3035 = vpop.f32.mrf.mxu0
        %3036 = vdwg.mxu0
        %v3037 = vadd.f32 %v2937, %v3024
        %v3038 = vadd.f32 %v2938, %v3029
        %v3039 = vadd.f32 %v2939, %v3034
        %v3040 = vld [vmem:[#allocation13] sm:$0x1]
        %v3042 = vlaneseq
        %v3043 = vshrl.u32 %v3042, 7
        %v3044 = vsub.s32 0, %v3043
        %v3045 = vrot.slane %v3040, %v3044
        %v3047 = vadd.f32 %v3037, %v3045
        %v3048 = vadd.f32 %v3038, %v3045
        %v3049 = vadd.f32 %v3039, %v3045
        %v3050 = vmax.f32 %v3047, 0.0
        %v3051 = vmax.f32 %v3048, 0.0
        %v3052 = vmax.f32 %v3049, 0.0
        %3053 = vst.msk [vmem:[#allocation3] sm:$0xff] %vm2289, %v3050
        %3054 = vst.msk [vmem:[#allocation3 + $0x8] sm:$0xff] %vm2289, %v3051
        %3055 = vst.msk [vmem:[#allocation3 + $0x10] sm:$0xf] %vm2297, %v3052
        %v3056 = vld [vmem:[#allocation3] ss:$2 sm:$0xff]
        %v3057 = vld [vmem:[%s2300] ss:$2 sm:$0x3]
        %v3058 = vld [vmem:[%s2306] ss:$2 sm:$0xff]
        %v3059 = vld [vmem:[%s2308] ss:$2 sm:$0x3]
        %v3060 = vmax.f32 %v3056, %v3058
        %v3061 = vmax.f32 %v3057, %v3059
        %v3062 = vld [vmem:[%s19] sm:$0x1]
        %v3064 = vlaneseq
        %v3065 = vshrl.u32 %v3064, 7
        %v3066 = vsub.s32 0, %v3065
        %v3067 = vrot.slane %v3062, %v3066
        %v3069 = vmul.f32 %v3060, %v3067
        %v3070 = vmul.f32 %v3061, %v3067
        %v3071 = vld [vmem:[%s21] sm:$0x1]
        %v3073 = vlaneseq
        %v3074 = vshrl.u32 %v3073, 7
        %v3075 = vsub.s32 0, %v3074
        %v3076 = vrot.slane %v3071, %v3075
        %v3078 = vadd.f32 %v3069, %v3076
        %v3079 = vadd.f32 %v3070, %v3076
        %3080 = vst.msk [vmem:[#allocation2] sm:$0x1] %vm1220, 0.0
        %3081 = vst.msk [vmem:[#allocation2 + $0xb] sm:$0x1] %vm1220, 0.0
        %3082 = vst.msk [vmem:[#allocation2 + $0x1] sm:$0xff] %vm2289, %v3078
        %vm3083 = vcmask 254976
        %3084 = vst.msk [vmem:[#allocation2 + $0x9] sm:$0x3] %vm3083, %v3079
        %v3085 = vld [vmem:[#allocation2] sm:$0xf]
        %v3086 = vld [vmem:[#allocation14] sm:$0xff]
        %v3087 = vld [vmem:[#allocation14 + $0x8] sm:$0xff]
        %v3088 = vld [vmem:[#allocation14 + $0x10] sm:$0xff]
        %v3089 = vld [vmem:[#allocation14 + $0x18] sm:$0xff]
        %v3090 = vld [vmem:[#allocation2 + $0x4] sm:$0xf]
        %s3091 = scalar_lea.vmem [#allocation14], 32
        %v3092 = vld [vmem:[%s3091] sm:$0xff]
        %v3093 = vld [vmem:[%s3091 + $0x8] sm:$0xff]
        %v3094 = vld [vmem:[%s3091 + $0x10] sm:$0xff]
        %v3095 = vld [vmem:[%s3091 + $0x18] sm:$0xff]
        %v3097 = vsel %vm2289, %v3090, 0
        %3099 = vmatprep.subr.mxu0 0.0
        %3100 = vmatpush1.msra.mxu0 0.0
        %3101 = vmatprep.subr.mxu0 0.0
        %3102 = vmatpush1.msra.mxu0 0.0
        %3103 = vmatprep.subr.mxu0 0.0
        %3104 = vmatpush1.msra.mxu0 0.0
        %3105 = vmatprep.subr.mxu0 0.0
        %3106 = vmatpush1.msra.mxu0 0.0
        %3107 = vmatprep.subr.mxu0 0.0
        %3108 = vmatpush1.msra.mxu0 0.0
        %3109 = vmatprep.subr.mxu0 0.0
        %3110 = vmatpush1.msra.mxu0 0.0
        %3111 = vmatprep.subr.mxu0 0.0
        %3112 = vmatpush1.msra.mxu0 0.0
        %3113 = vmatprep.subr.mxu0 0.0
        %3114 = vmatpush1.msra.mxu0 0.0
        %3115 = vmatprep.subr.mxu0 0.0
        %3116 = vmatpush1.msra.mxu0 0.0
        %3117 = vmatprep.subr.mxu0 0.0
        %3118 = vmatpush1.msra.mxu0 0.0
        %3119 = vmatprep.subr.mxu0 0.0
        %3120 = vmatpush1.msra.mxu0 0.0
        %3121 = vmatprep.subr.mxu0 0.0
        %3122 = vmatpush1.msra.mxu0 0.0
        %3123 = vmatprep.subr.mxu0 0.0
        %3124 = vmatpush1.msra.mxu0 %v3095
        %3125 = vmatprep.subr.mxu0 0.0
        %3126 = vmatpush1.msra.mxu0 %v3094
        %3127 = vmatprep.subr.mxu0 0.0
        %3128 = vmatpush1.msra.mxu0 %v3093
        %3129 = vmatprep.subr.mxu0 0.0
        %3130 = vmatpush1.msra.mxu0 %v3092
        %3131 = vmatprep.subr.mxu0 0.0
        %3132 = vmatpush2.msra.mxu0 0.0
        %3133 = vmatprep.subr.mxu0 0.0
        %3134 = vmatpush2.msra.mxu0 0.0
        %3135 = vmatprep.subr.mxu0 0.0
        %3136 = vmatpush2.msra.mxu0 0.0
        %3137 = vmatprep.subr.mxu0 0.0
        %3138 = vmatpush2.msra.mxu0 0.0
        %3139 = vmatprep.subr.mxu0 0.0
        %3140 = vmatpush2.msra.mxu0 0.0
        %3141 = vmatprep.subr.mxu0 0.0
        %3142 = vmatpush2.msra.mxu0 0.0
        %3143 = vmatprep.subr.mxu0 0.0
        %3144 = vmatpush2.msra.mxu0 0.0
        %3145 = vmatprep.subr.mxu0 0.0
        %3146 = vmatpush2.msra.mxu0 0.0
        %3147 = vmatprep.subr.mxu0 0.0
        %3148 = vmatpush2.msra.mxu0 0.0
        %3149 = vmatprep.subr.mxu0 0.0
        %3150 = vmatpush2.msra.mxu0 0.0
        %3151 = vmatprep.subr.mxu0 0.0
        %3152 = vmatpush2.msra.mxu0 0.0
        %3153 = vmatprep.subr.mxu0 0.0
        %3154 = vmatpush2.msra.mxu0 0.0
        %3155 = vmatprep.subr.mxu0 0.0
        %3156 = vmatpush2.msra.mxu0 0.0
        %3157 = vmatprep.subr.mxu0 0.0
        %3158 = vmatpush2.msra.mxu0 0.0
        %3159 = vmatprep.subr.mxu0 0.0
        %3160 = vmatpush2.msra.mxu0 0.0
        %3161 = vmatprep.subr.mxu0 0.0
        %3162 = vmatpush2.msra.mxu0 0.0
        %3163 = vmatprep.mubr.f32.mxu0 0.0
        %3164 = vmatmul.mubr.f32.gmra.mxu0 %v3097
        %v3165 = vpop.f32.mrf.mxu0
        %v3166 = vadd.f32 0.0, %v3165
        %v3167 = vpop.f32.mrf.mxu0
        %3168 = vdwg.mxu0
        %v3170 = vsel %vm2289, %v3085, 0
        %3172 = vmatprep.subr.mxu0 0.0
        %3173 = vmatpush1.msra.mxu0 0.0
        %3174 = vmatprep.subr.mxu0 0.0
        %3175 = vmatpush1.msra.mxu0 0.0
        %3176 = vmatprep.subr.mxu0 0.0
        %3177 = vmatpush1.msra.mxu0 0.0
        %3178 = vmatprep.subr.mxu0 0.0
        %3179 = vmatpush1.msra.mxu0 0.0
        %3180 = vmatprep.subr.mxu0 0.0
        %3181 = vmatpush1.msra.mxu0 0.0
        %3182 = vmatprep.subr.mxu0 0.0
        %3183 = vmatpush1.msra.mxu0 0.0
        %3184 = vmatprep.subr.mxu0 0.0
        %3185 = vmatpush1.msra.mxu0 0.0
        %3186 = vmatprep.subr.mxu0 0.0
        %3187 = vmatpush1.msra.mxu0 0.0
        %3188 = vmatprep.subr.mxu0 0.0
        %3189 = vmatpush1.msra.mxu0 0.0
        %3190 = vmatprep.subr.mxu0 0.0
        %3191 = vmatpush1.msra.mxu0 0.0
        %3192 = vmatprep.subr.mxu0 0.0
        %3193 = vmatpush1.msra.mxu0 0.0
        %3194 = vmatprep.subr.mxu0 0.0
        %3195 = vmatpush1.msra.mxu0 0.0
        %3196 = vmatprep.subr.mxu0 0.0
        %3197 = vmatpush1.msra.mxu0 %v3089
        %3198 = vmatprep.subr.mxu0 0.0
        %3199 = vmatpush1.msra.mxu0 %v3088
        %3200 = vmatprep.subr.mxu0 0.0
        %3201 = vmatpush1.msra.mxu0 %v3087
        %3202 = vmatprep.subr.mxu0 0.0
        %3203 = vmatpush1.msra.mxu0 %v3086
        %3204 = vmatprep.subr.mxu0 0.0
        %3205 = vmatpush2.msra.mxu0 0.0
        %3206 = vmatprep.subr.mxu0 0.0
        %3207 = vmatpush2.msra.mxu0 0.0
        %3208 = vmatprep.subr.mxu0 0.0
        %3209 = vmatpush2.msra.mxu0 0.0
        %3210 = vmatprep.subr.mxu0 0.0
        %3211 = vmatpush2.msra.mxu0 0.0
        %3212 = vmatprep.subr.mxu0 0.0
        %3213 = vmatpush2.msra.mxu0 0.0
        %3214 = vmatprep.subr.mxu0 0.0
        %3215 = vmatpush2.msra.mxu0 0.0
        %3216 = vmatprep.subr.mxu0 0.0
        %3217 = vmatpush2.msra.mxu0 0.0
        %3218 = vmatprep.subr.mxu0 0.0
        %3219 = vmatpush2.msra.mxu0 0.0
        %3220 = vmatprep.subr.mxu0 0.0
        %3221 = vmatpush2.msra.mxu0 0.0
        %3222 = vmatprep.subr.mxu0 0.0
        %3223 = vmatpush2.msra.mxu0 0.0
        %3224 = vmatprep.subr.mxu0 0.0
        %3225 = vmatpush2.msra.mxu0 0.0
        %3226 = vmatprep.subr.mxu0 0.0
        %3227 = vmatpush2.msra.mxu0 0.0
        %3228 = vmatprep.subr.mxu0 0.0
        %3229 = vmatpush2.msra.mxu0 0.0
        %3230 = vmatprep.subr.mxu0 0.0
        %3231 = vmatpush2.msra.mxu0 0.0
        %3232 = vmatprep.subr.mxu0 0.0
        %3233 = vmatpush2.msra.mxu0 0.0
        %3234 = vmatprep.subr.mxu0 0.0
        %3235 = vmatpush2.msra.mxu0 0.0
        %3236 = vmatprep.mubr.f32.mxu0 0.0
        %3237 = vmatmul.mubr.f32.gmra.mxu0 %v3170
        %v3238 = vpop.f32.mrf.mxu0
        %v3239 = vadd.f32 %v3166, %v3238
        %v3240 = vpop.f32.mrf.mxu0
        %3241 = vdwg.mxu0
        %v3242 = vld [vmem:[#allocation2 + $0x8] sm:$0xf]
        %s3243 = scalar_lea.vmem [#allocation14], 64
        %v3244 = vld [vmem:[%s3243] sm:$0xff]
        %v3245 = vld [vmem:[%s3243 + $0x8] sm:$0xff]
        %v3246 = vld [vmem:[%s3243 + $0x10] sm:$0xff]
        %v3247 = vld [vmem:[%s3243 + $0x18] sm:$0xff]
        %v3249 = vsel %vm2289, %v3242, 0
        %3251 = vmatprep.subr.mxu0 0.0
        %3252 = vmatpush1.msra.mxu0 0.0
        %3253 = vmatprep.subr.mxu0 0.0
        %3254 = vmatpush1.msra.mxu0 0.0
        %3255 = vmatprep.subr.mxu0 0.0
        %3256 = vmatpush1.msra.mxu0 0.0
        %3257 = vmatprep.subr.mxu0 0.0
        %3258 = vmatpush1.msra.mxu0 0.0
        %3259 = vmatprep.subr.mxu0 0.0
        %3260 = vmatpush1.msra.mxu0 0.0
        %3261 = vmatprep.subr.mxu0 0.0
        %3262 = vmatpush1.msra.mxu0 0.0
        %3263 = vmatprep.subr.mxu0 0.0
        %3264 = vmatpush1.msra.mxu0 0.0
        %3265 = vmatprep.subr.mxu0 0.0
        %3266 = vmatpush1.msra.mxu0 0.0
        %3267 = vmatprep.subr.mxu0 0.0
        %3268 = vmatpush1.msra.mxu0 0.0
        %3269 = vmatprep.subr.mxu0 0.0
        %3270 = vmatpush1.msra.mxu0 0.0
        %3271 = vmatprep.subr.mxu0 0.0
        %3272 = vmatpush1.msra.mxu0 0.0
        %3273 = vmatprep.subr.mxu0 0.0
        %3274 = vmatpush1.msra.mxu0 0.0
        %3275 = vmatprep.subr.mxu0 0.0
        %3276 = vmatpush1.msra.mxu0 %v3247
        %3277 = vmatprep.subr.mxu0 0.0
        %3278 = vmatpush1.msra.mxu0 %v3246
        %3279 = vmatprep.subr.mxu0 0.0
        %3280 = vmatpush1.msra.mxu0 %v3245
        %3281 = vmatprep.subr.mxu0 0.0
        %3282 = vmatpush1.msra.mxu0 %v3244
        %3283 = vmatprep.subr.mxu0 0.0
        %3284 = vmatpush2.msra.mxu0 0.0
        %3285 = vmatprep.subr.mxu0 0.0
        %3286 = vmatpush2.msra.mxu0 0.0
        %3287 = vmatprep.subr.mxu0 0.0
        %3288 = vmatpush2.msra.mxu0 0.0
        %3289 = vmatprep.subr.mxu0 0.0
        %3290 = vmatpush2.msra.mxu0 0.0
        %3291 = vmatprep.subr.mxu0 0.0
        %3292 = vmatpush2.msra.mxu0 0.0
        %3293 = vmatprep.subr.mxu0 0.0
        %3294 = vmatpush2.msra.mxu0 0.0
        %3295 = vmatprep.subr.mxu0 0.0
        %3296 = vmatpush2.msra.mxu0 0.0
        %3297 = vmatprep.subr.mxu0 0.0
        %3298 = vmatpush2.msra.mxu0 0.0
        %3299 = vmatprep.subr.mxu0 0.0
        %3300 = vmatpush2.msra.mxu0 0.0
        %3301 = vmatprep.subr.mxu0 0.0
        %3302 = vmatpush2.msra.mxu0 0.0
        %3303 = vmatprep.subr.mxu0 0.0
        %3304 = vmatpush2.msra.mxu0 0.0
        %3305 = vmatprep.subr.mxu0 0.0
        %3306 = vmatpush2.msra.mxu0 0.0
        %3307 = vmatprep.subr.mxu0 0.0
        %3308 = vmatpush2.msra.mxu0 0.0
        %3309 = vmatprep.subr.mxu0 0.0
        %3310 = vmatpush2.msra.mxu0 0.0
        %3311 = vmatprep.subr.mxu0 0.0
        %3312 = vmatpush2.msra.mxu0 0.0
        %3313 = vmatprep.subr.mxu0 0.0
        %3314 = vmatpush2.msra.mxu0 0.0
        %3315 = vmatprep.mubr.f32.mxu0 0.0
        %3316 = vmatmul.mubr.f32.gmra.mxu0 %v3249
        %v3317 = vpop.f32.mrf.mxu0
        %v3318 = vadd.f32 0.0, %v3317
        %v3319 = vpop.f32.mrf.mxu0
        %3320 = vdwg.mxu0
        %v3321 = vadd.f32 %v3239, %v3318
        %v3322 = vld [vmem:[#allocation16] sm:$0x1]
        %v3324 = vlaneseq
        %v3325 = vshrl.u32 %v3324, 7
        %v3326 = vsub.s32 0, %v3325
        %v3327 = vrot.slane %v3322, %v3326
        %v3329 = vadd.f32 %v3321, %v3327
        %v3330 = vmax.f32 %v3329, 0.0
        %3331 = vst.msk [vmem:[#allocation3] sm:$0xf] %vm2297, %v3330
        %v3332 = vld [vmem:[#allocation3] ss:$2 sm:$0x3]
        %v3333 = vld [vmem:[%s2306] ss:$2 sm:$0x3]
        %v3334 = vmax.f32 %v3332, %v3333
        %v3335 = vld [vmem:[#allocation17] sm:$0xff]
        %v3336 = vld [vmem:[#allocation17 + $0x8] sm:$0xff]
        %v3337 = vld [vmem:[#allocation17 + $0x10] sm:$0xff]
        %v3338 = vld [vmem:[#allocation17 + $0x18] sm:$0xff]
        %v3339 = vld [vmem:[#allocation19] sm:$0x1]
        %v3341 = vlaneseq
        %v3342 = vshrl.u32 %v3341, 7
        %v3343 = vsub.s32 0, %v3342
        %v3344 = vrot.slane %v3339, %v3343
        %v3347 = vsel %vm2289, %v3334, 0
        %3349 = vmatprep.subr.mxu0 0.0
        %3350 = vmatpush1.msra.mxu0 0.0
        %3351 = vmatprep.subr.mxu0 0.0
        %3352 = vmatpush1.msra.mxu0 0.0
        %3353 = vmatprep.subr.mxu0 0.0
        %3354 = vmatpush1.msra.mxu0 0.0
        %3355 = vmatprep.subr.mxu0 0.0
        %3356 = vmatpush1.msra.mxu0 0.0
        %3357 = vmatprep.subr.mxu0 0.0
        %3358 = vmatpush1.msra.mxu0 0.0
        %3359 = vmatprep.subr.mxu0 0.0
        %3360 = vmatpush1.msra.mxu0 0.0
        %3361 = vmatprep.subr.mxu0 0.0
        %3362 = vmatpush1.msra.mxu0 0.0
        %3363 = vmatprep.subr.mxu0 0.0
        %3364 = vmatpush1.msra.mxu0 0.0
        %3365 = vmatprep.subr.mxu0 0.0
        %3366 = vmatpush1.msra.mxu0 0.0
        %3367 = vmatprep.subr.mxu0 0.0
        %3368 = vmatpush1.msra.mxu0 0.0
        %3369 = vmatprep.subr.mxu0 0.0
        %3370 = vmatpush1.msra.mxu0 0.0
        %3371 = vmatprep.subr.mxu0 0.0
        %3372 = vmatpush1.msra.mxu0 0.0
        %3373 = vmatprep.subr.mxu0 0.0
        %3374 = vmatpush1.msra.mxu0 %v3338
        %3375 = vmatprep.subr.mxu0 0.0
        %3376 = vmatpush1.msra.mxu0 %v3337
        %3377 = vmatprep.subr.mxu0 0.0
        %3378 = vmatpush1.msra.mxu0 %v3336
        %3379 = vmatprep.subr.mxu0 0.0
        %3380 = vmatpush1.msra.mxu0 %v3335
        %3381 = vmatprep.subr.mxu0 0.0
        %3382 = vmatpush2.msra.mxu0 0.0
        %3383 = vmatprep.subr.mxu0 0.0
        %3384 = vmatpush2.msra.mxu0 0.0
        %3385 = vmatprep.subr.mxu0 0.0
        %3386 = vmatpush2.msra.mxu0 0.0
        %3387 = vmatprep.subr.mxu0 0.0
        %3388 = vmatpush2.msra.mxu0 0.0
        %3389 = vmatprep.subr.mxu0 0.0
        %3390 = vmatpush2.msra.mxu0 0.0
        %3391 = vmatprep.subr.mxu0 0.0
        %3392 = vmatpush2.msra.mxu0 0.0
        %3393 = vmatprep.subr.mxu0 0.0
        %3394 = vmatpush2.msra.mxu0 0.0
        %3395 = vmatprep.subr.mxu0 0.0
        %3396 = vmatpush2.msra.mxu0 0.0
        %3397 = vmatprep.subr.mxu0 0.0
        %3398 = vmatpush2.msra.mxu0 0.0
        %3399 = vmatprep.subr.mxu0 0.0
        %3400 = vmatpush2.msra.mxu0 0.0
        %3401 = vmatprep.subr.mxu0 0.0
        %3402 = vmatpush2.msra.mxu0 0.0
        %3403 = vmatprep.subr.mxu0 0.0
        %3404 = vmatpush2.msra.mxu0 0.0
        %3405 = vmatprep.subr.mxu0 0.0
        %3406 = vmatpush2.msra.mxu0 0.0
        %3407 = vmatprep.subr.mxu0 0.0
        %3408 = vmatpush2.msra.mxu0 0.0
        %3409 = vmatprep.subr.mxu0 0.0
        %3410 = vmatpush2.msra.mxu0 0.0
        %3411 = vmatprep.subr.mxu0 0.0
        %3412 = vmatpush2.msra.mxu0 0.0
        %3413 = vmatprep.mubr.f32.mxu0 0.0
        %3414 = vmatmul.mubr.f32.gmra.mxu0 %v3347
        %v3415 = vpop.f32.mrf.mxu0
        %v3416 = vadd.f32 %v3344, %v3415
        %v3417 = vpop.f32.mrf.mxu0
        %3418 = vdwg.mxu0
        %v3419 = vld [vmem:[#allocation20] sm:$0xff]
        %v3420 = vld [vmem:[#allocation20 + $0x8] sm:$0xff]
        %v3421 = vld [vmem:[#allocation20 + $0x10] sm:$0xff]
        %v3422 = vld [vmem:[#allocation20 + $0x18] sm:$0xff]
        %v3423 = vld [vmem:[#allocation22] sm:$0x1]
        %v3425 = vlaneseq
        %v3426 = vshrl.u32 %v3425, 7
        %v3427 = vsub.s32 0, %v3426
        %v3428 = vrot.slane %v3423, %v3427
        %3430 = vmatprep.subr.mxu0 0.0
        %3431 = vmatpush1.msra.mxu0 0.0
        %3432 = vmatprep.subr.mxu0 0.0
        %3433 = vmatpush1.msra.mxu0 0.0
        %3434 = vmatprep.subr.mxu0 0.0
        %3435 = vmatpush1.msra.mxu0 0.0
        %3436 = vmatprep.subr.mxu0 0.0
        %3437 = vmatpush1.msra.mxu0 0.0
        %3438 = vmatprep.subr.mxu0 0.0
        %3439 = vmatpush1.msra.mxu0 0.0
        %3440 = vmatprep.subr.mxu0 0.0
        %3441 = vmatpush1.msra.mxu0 0.0
        %3442 = vmatprep.subr.mxu0 0.0
        %3443 = vmatpush1.msra.mxu0 0.0
        %3444 = vmatprep.subr.mxu0 0.0
        %3445 = vmatpush1.msra.mxu0 0.0
        %3446 = vmatprep.subr.mxu0 0.0
        %3447 = vmatpush1.msra.mxu0 0.0
        %3448 = vmatprep.subr.mxu0 0.0
        %3449 = vmatpush1.msra.mxu0 0.0
        %3450 = vmatprep.subr.mxu0 0.0
        %3451 = vmatpush1.msra.mxu0 0.0
        %3452 = vmatprep.subr.mxu0 0.0
        %3453 = vmatpush1.msra.mxu0 0.0
        %3454 = vmatprep.subr.mxu0 0.0
        %3455 = vmatpush1.msra.mxu0 %v3422
        %3456 = vmatprep.subr.mxu0 0.0
        %3457 = vmatpush1.msra.mxu0 %v3421
        %3458 = vmatprep.subr.mxu0 0.0
        %3459 = vmatpush1.msra.mxu0 %v3420
        %3460 = vmatprep.subr.mxu0 0.0
        %3461 = vmatpush1.msra.mxu0 %v3419
        %3462 = vmatprep.subr.mxu0 0.0
        %3463 = vmatpush2.msra.mxu0 0.0
        %3464 = vmatprep.subr.mxu0 0.0
        %3465 = vmatpush2.msra.mxu0 0.0
        %3466 = vmatprep.subr.mxu0 0.0
        %3467 = vmatpush2.msra.mxu0 0.0
        %3468 = vmatprep.subr.mxu0 0.0
        %3469 = vmatpush2.msra.mxu0 0.0
        %3470 = vmatprep.subr.mxu0 0.0
        %3471 = vmatpush2.msra.mxu0 0.0
        %3472 = vmatprep.subr.mxu0 0.0
        %3473 = vmatpush2.msra.mxu0 0.0
        %3474 = vmatprep.subr.mxu0 0.0
        %3475 = vmatpush2.msra.mxu0 0.0
        %3476 = vmatprep.subr.mxu0 0.0
        %3477 = vmatpush2.msra.mxu0 0.0
        %3478 = vmatprep.subr.mxu0 0.0
        %3479 = vmatpush2.msra.mxu0 0.0
        %3480 = vmatprep.subr.mxu0 0.0
        %3481 = vmatpush2.msra.mxu0 0.0
        %3482 = vmatprep.subr.mxu0 0.0
        %3483 = vmatpush2.msra.mxu0 0.0
        %3484 = vmatprep.subr.mxu0 0.0
        %3485 = vmatpush2.msra.mxu0 0.0
        %3486 = vmatprep.subr.mxu0 0.0
        %3487 = vmatpush2.msra.mxu0 0.0
        %3488 = vmatprep.subr.mxu0 0.0
        %3489 = vmatpush2.msra.mxu0 0.0
        %3490 = vmatprep.subr.mxu0 0.0
        %3491 = vmatpush2.msra.mxu0 0.0
        %3492 = vmatprep.subr.mxu0 0.0
        %3493 = vmatpush2.msra.mxu0 0.0
        %3494 = vmatprep.mubr.f32.mxu0 0.0
        %3495 = vmatmul.mubr.f32.gmra.mxu0 %v3347
        %v3496 = vpop.f32.mrf.mxu0
        %v3497 = vadd.f32 %v3428, %v3496
        %v3498 = vpop.f32.mrf.mxu0
        %3499 = vdwg.mxu0
        %v3500 = vld [vmem:[#allocation23] sm:$0xff]
        %v3501 = vld [vmem:[#allocation23 + $0x8] sm:$0xff]
        %v3502 = vld [vmem:[#allocation23 + $0x10] sm:$0xff]
        %v3503 = vld [vmem:[#allocation23 + $0x18] sm:$0xff]
        %v3504 = vld [vmem:[#allocation25] sm:$0x1]
        %v3506 = vlaneseq
        %v3507 = vshrl.u32 %v3506, 7
        %v3508 = vsub.s32 0, %v3507
        %v3509 = vrot.slane %v3504, %v3508
        %3511 = vmatprep.subr.mxu0 0.0
        %3512 = vmatpush1.msra.mxu0 0.0
        %3513 = vmatprep.subr.mxu0 0.0
        %3514 = vmatpush1.msra.mxu0 0.0
        %3515 = vmatprep.subr.mxu0 0.0
        %3516 = vmatpush1.msra.mxu0 0.0
        %3517 = vmatprep.subr.mxu0 0.0
        %3518 = vmatpush1.msra.mxu0 0.0
        %3519 = vmatprep.subr.mxu0 0.0
        %3520 = vmatpush1.msra.mxu0 0.0
        %3521 = vmatprep.subr.mxu0 0.0
        %3522 = vmatpush1.msra.mxu0 0.0
        %3523 = vmatprep.subr.mxu0 0.0
        %3524 = vmatpush1.msra.mxu0 0.0
        %3525 = vmatprep.subr.mxu0 0.0
        %3526 = vmatpush1.msra.mxu0 0.0
        %3527 = vmatprep.subr.mxu0 0.0
        %3528 = vmatpush1.msra.mxu0 0.0
        %3529 = vmatprep.subr.mxu0 0.0
        %3530 = vmatpush1.msra.mxu0 0.0
        %3531 = vmatprep.subr.mxu0 0.0
        %3532 = vmatpush1.msra.mxu0 0.0
        %3533 = vmatprep.subr.mxu0 0.0
        %3534 = vmatpush1.msra.mxu0 0.0
        %3535 = vmatprep.subr.mxu0 0.0
        %3536 = vmatpush1.msra.mxu0 %v3503
        %3537 = vmatprep.subr.mxu0 0.0
        %3538 = vmatpush1.msra.mxu0 %v3502
        %3539 = vmatprep.subr.mxu0 0.0
        %3540 = vmatpush1.msra.mxu0 %v3501
        %3541 = vmatprep.subr.mxu0 0.0
        %3542 = vmatpush1.msra.mxu0 %v3500
        %3543 = vmatprep.subr.mxu0 0.0
        %3544 = vmatpush2.msra.mxu0 0.0
        %3545 = vmatprep.subr.mxu0 0.0
        %3546 = vmatpush2.msra.mxu0 0.0
        %3547 = vmatprep.subr.mxu0 0.0
        %3548 = vmatpush2.msra.mxu0 0.0
        %3549 = vmatprep.subr.mxu0 0.0
        %3550 = vmatpush2.msra.mxu0 0.0
        %3551 = vmatprep.subr.mxu0 0.0
        %3552 = vmatpush2.msra.mxu0 0.0
        %3553 = vmatprep.subr.mxu0 0.0
        %3554 = vmatpush2.msra.mxu0 0.0
        %3555 = vmatprep.subr.mxu0 0.0
        %3556 = vmatpush2.msra.mxu0 0.0
        %3557 = vmatprep.subr.mxu0 0.0
        %3558 = vmatpush2.msra.mxu0 0.0
        %3559 = vmatprep.subr.mxu0 0.0
        %3560 = vmatpush2.msra.mxu0 0.0
        %3561 = vmatprep.subr.mxu0 0.0
        %3562 = vmatpush2.msra.mxu0 0.0
        %3563 = vmatprep.subr.mxu0 0.0
        %3564 = vmatpush2.msra.mxu0 0.0
        %3565 = vmatprep.subr.mxu0 0.0
        %3566 = vmatpush2.msra.mxu0 0.0
        %3567 = vmatprep.subr.mxu0 0.0
        %3568 = vmatpush2.msra.mxu0 0.0
        %3569 = vmatprep.subr.mxu0 0.0
        %3570 = vmatpush2.msra.mxu0 0.0
        %3571 = vmatprep.subr.mxu0 0.0
        %3572 = vmatpush2.msra.mxu0 0.0
        %3573 = vmatprep.subr.mxu0 0.0
        %3574 = vmatpush2.msra.mxu0 0.0
        %3575 = vmatprep.mubr.f32.mxu0 0.0
        %3576 = vmatmul.mubr.f32.gmra.mxu0 %v3347
        %v3577 = vpop.f32.mrf.mxu0
        %v3578 = vadd.f32 %v3509, %v3577
        %v3579 = vpop.f32.mrf.mxu0
        %3580 = vdwg.mxu0
        %vm3581 = vcmask 130048
        %v3583 = vsel %vm3581, %v3416, 0
        %v3586 = vsel %vm3581, %v3497, 0
        %3588 = vmatprep.subr.mxu0 0.0
        %3589 = vmatpush1.xpose.msra.mxu0 0.0
        %3590 = vmatprep.subr.mxu0 0.0
        %3591 = vmatpush1.xpose.msra.mxu0 0.0
        %3592 = vmatprep.subr.mxu0 0.0
        %3593 = vmatpush1.xpose.msra.mxu0 0.0
        %3594 = vmatprep.subr.mxu0 0.0
        %3595 = vmatpush1.xpose.msra.mxu0 0.0
        %3596 = vmatprep.subr.mxu0 0.0
        %3597 = vmatpush1.xpose.msra.mxu0 0.0
        %3598 = vmatprep.subr.mxu0 0.0
        %3599 = vmatpush1.xpose.msra.mxu0 0.0
        %3600 = vmatprep.subr.mxu0 0.0
        %3601 = vmatpush1.xpose.msra.mxu0 0.0
        %3602 = vmatprep.subr.mxu0 0.0
        %3603 = vmatpush1.xpose.msra.mxu0 0.0
        %3604 = vmatprep.subr.mxu0 0.0
        %3605 = vmatpush1.xpose.msra.mxu0 0.0
        %3606 = vmatprep.subr.mxu0 0.0
        %3607 = vmatpush1.xpose.msra.mxu0 0.0
        %3608 = vmatprep.subr.mxu0 0.0
        %3609 = vmatpush1.xpose.msra.mxu0 0.0
        %3610 = vmatprep.subr.mxu0 0.0
        %3611 = vmatpush1.xpose.msra.mxu0 0.0
        %3612 = vmatprep.subr.mxu0 0.0
        %3613 = vmatpush1.xpose.msra.mxu0 0.0
        %3614 = vmatprep.subr.mxu0 0.0
        %3615 = vmatpush1.xpose.msra.mxu0 0.0
        %3616 = vmatprep.subr.mxu0 0.0
        %3617 = vmatpush1.xpose.msra.mxu0 0.0
        %3618 = vmatprep.subr.mxu0 0.0
        %3619 = vmatpush1.xpose.msra.mxu0 %v3586
        %3620 = vmatprep.subr.mxu0 0.0
        %3621 = vmatpush2.xpose.msra.mxu0 0.0
        %3622 = vmatprep.subr.mxu0 0.0
        %3623 = vmatpush2.xpose.msra.mxu0 0.0
        %3624 = vmatprep.subr.mxu0 0.0
        %3625 = vmatpush2.xpose.msra.mxu0 0.0
        %3626 = vmatprep.subr.mxu0 0.0
        %3627 = vmatpush2.xpose.msra.mxu0 0.0
        %3628 = vmatprep.subr.mxu0 0.0
        %3629 = vmatpush2.xpose.msra.mxu0 0.0
        %3630 = vmatprep.subr.mxu0 0.0
        %3631 = vmatpush2.xpose.msra.mxu0 0.0
        %3632 = vmatprep.subr.mxu0 0.0
        %3633 = vmatpush2.xpose.msra.mxu0 0.0
        %3634 = vmatprep.subr.mxu0 0.0
        %3635 = vmatpush2.xpose.msra.mxu0 0.0
        %3636 = vmatprep.subr.mxu0 0.0
        %3637 = vmatpush2.xpose.msra.mxu0 0.0
        %3638 = vmatprep.subr.mxu0 0.0
        %3639 = vmatpush2.xpose.msra.mxu0 0.0
        %3640 = vmatprep.subr.mxu0 0.0
        %3641 = vmatpush2.xpose.msra.mxu0 0.0
        %3642 = vmatprep.subr.mxu0 0.0
        %3643 = vmatpush2.xpose.msra.mxu0 0.0
        %3644 = vmatprep.subr.mxu0 0.0
        %3645 = vmatpush2.xpose.msra.mxu0 0.0
        %3646 = vmatprep.subr.mxu0 0.0
        %3647 = vmatpush2.xpose.msra.mxu0 0.0
        %3648 = vmatprep.subr.mxu0 0.0
        %3649 = vmatpush2.xpose.msra.mxu0 0.0
        %3650 = vmatprep.subr.mxu0 0.0
        %3651 = vmatpush2.xpose.msra.mxu0 0.0
        %3652 = vmatprep.mubr.f32.mxu0 0.0
        %3653 = vmatmul.mubr.f32.gmra.mxu0 %v3583
        %v3654 = vpop.f32.mrf.mxu0
        %v3655 = vadd.f32 0.0, %v3654
        %v3656 = vpop.f32.mrf.mxu0
        %3657 = vdwg.mxu0
        %vm3658 = vcmask 9216
        %v3659 = vsel %vm3658, %v3655, -inf
        %3660 = vmax.xlane.f32.xlu0 %v3659
        %v3661 = vpop.xlane.xlu0 %3660
        %v3662 = vsub.f32 %v3655, %v3661
        %v3663 = vmul.f32 %v3662, 1.442695
        %v3664 = vpow.pop %v3663
        %v3665 = vsel %vm3658, %v3664, 0.0
        %3666 = vadd.xlane.f32.xlu0 %v3665
        %v3667 = vpop.xlane.xlu0 %3666
        %v3668 = vrcp.pop %v3667
        %v3669 = vmul.f32 %v3664, %v3668
        %vm3670 = vcmask 15360
        %v3672 = vsel %vm3670, %v3669, 0
        %vm3674 = vcmask 1041408
        %v3676 = vsel %vm3674, %v3578, 0
        %3678 = vmatprep.subr.mxu0 0.0
        %3679 = vmatpush1.msra.mxu0 0.0
        %3680 = vmatprep.subr.mxu0 0.0
        %3681 = vmatpush1.msra.mxu0 0.0
        %3682 = vmatprep.subr.mxu0 0.0
        %3683 = vmatpush1.msra.mxu0 0.0
        %3684 = vmatprep.subr.mxu0 0.0
        %3685 = vmatpush1.msra.mxu0 0.0
        %3686 = vmatprep.subr.mxu0 0.0
        %3687 = vmatpush1.msra.mxu0 0.0
        %3688 = vmatprep.subr.mxu0 0.0
        %3689 = vmatpush1.msra.mxu0 0.0
        %3690 = vmatprep.subr.mxu0 0.0
        %3691 = vmatpush1.msra.mxu0 0.0
        %3692 = vmatprep.subr.mxu0 0.0
        %3693 = vmatpush1.msra.mxu0 0.0
        %3694 = vmatprep.subr.mxu0 0.0
        %3695 = vmatpush1.msra.mxu0 0.0
        %3696 = vmatprep.subr.mxu0 0.0
        %3697 = vmatpush1.msra.mxu0 0.0
        %3698 = vmatprep.subr.mxu0 0.0
        %3699 = vmatpush1.msra.mxu0 0.0
        %3700 = vmatprep.subr.mxu0 0.0
        %3701 = vmatpush1.msra.mxu0 0.0
        %3702 = vmatprep.subr.mxu0 0.0
        %3703 = vmatpush1.msra.mxu0 0.0
        %3704 = vmatprep.subr.mxu0 0.0
        %3705 = vmatpush1.msra.mxu0 0.0
        %3706 = vmatprep.subr.mxu0 0.0
        %3707 = vmatpush1.msra.mxu0 0.0
        %3708 = vmatprep.subr.mxu0 0.0
        %3709 = vmatpush1.msra.mxu0 %v3676
        %3710 = vmatprep.subr.mxu0 0.0
        %3711 = vmatpush2.msra.mxu0 0.0
        %3712 = vmatprep.subr.mxu0 0.0
        %3713 = vmatpush2.msra.mxu0 0.0
        %3714 = vmatprep.subr.mxu0 0.0
        %3715 = vmatpush2.msra.mxu0 0.0
        %3716 = vmatprep.subr.mxu0 0.0
        %3717 = vmatpush2.msra.mxu0 0.0
        %3718 = vmatprep.subr.mxu0 0.0
        %3719 = vmatpush2.msra.mxu0 0.0
        %3720 = vmatprep.subr.mxu0 0.0
        %3721 = vmatpush2.msra.mxu0 0.0
        %3722 = vmatprep.subr.mxu0 0.0
        %3723 = vmatpush2.msra.mxu0 0.0
        %3724 = vmatprep.subr.mxu0 0.0
        %3725 = vmatpush2.msra.mxu0 0.0
        %3726 = vmatprep.subr.mxu0 0.0
        %3727 = vmatpush2.msra.mxu0 0.0
        %3728 = vmatprep.subr.mxu0 0.0
        %3729 = vmatpush2.msra.mxu0 0.0
        %3730 = vmatprep.subr.mxu0 0.0
        %3731 = vmatpush2.msra.mxu0 0.0
        %3732 = vmatprep.subr.mxu0 0.0
        %3733 = vmatpush2.msra.mxu0 0.0
        %3734 = vmatprep.subr.mxu0 0.0
        %3735 = vmatpush2.msra.mxu0 0.0
        %3736 = vmatprep.subr.mxu0 0.0
        %3737 = vmatpush2.msra.mxu0 0.0
        %3738 = vmatprep.subr.mxu0 0.0
        %3739 = vmatpush2.msra.mxu0 0.0
        %3740 = vmatprep.subr.mxu0 0.0
        %3741 = vmatpush2.msra.mxu0 0.0
        %3742 = vmatprep.mubr.f32.mxu0 0.0
        %3743 = vmatmul.mubr.f32.gmra.mxu0 %v3672
        %v3744 = vpop.f32.mrf.mxu0
        %v3745 = vadd.f32 0.0, %v3744
        %v3746 = vpop.f32.mrf.mxu0
        %3747 = vdwg.mxu0
        %v3748 = vld [vmem:[#allocation26] sm:$0xff]
        %v3749 = vld [vmem:[#allocation26 + $0x8] sm:$0xff]
        %v3750 = vld [vmem:[#allocation28] sm:$0x1]
        %v3752 = vlaneseq
        %v3753 = vshrl.u32 %v3752, 7
        %v3754 = vsub.s32 0, %v3753
        %v3755 = vrot.slane %v3750, %v3754
        %v3758 = vsel %vm3581, %v3745, 0
        %3760 = vmatprep.subr.mxu0 0.0
        %3761 = vmatpush1.msra.mxu0 0.0
        %3762 = vmatprep.subr.mxu0 0.0
        %3763 = vmatpush1.msra.mxu0 0.0
        %3764 = vmatprep.subr.mxu0 0.0
        %3765 = vmatpush1.msra.mxu0 0.0
        %3766 = vmatprep.subr.mxu0 0.0
        %3767 = vmatpush1.msra.mxu0 0.0
        %3768 = vmatprep.subr.mxu0 0.0
        %3769 = vmatpush1.msra.mxu0 0.0
        %3770 = vmatprep.subr.mxu0 0.0
        %3771 = vmatpush1.msra.mxu0 0.0
        %3772 = vmatprep.subr.mxu0 0.0
        %3773 = vmatpush1.msra.mxu0 0.0
        %3774 = vmatprep.subr.mxu0 0.0
        %3775 = vmatpush1.msra.mxu0 0.0
        %3776 = vmatprep.subr.mxu0 0.0
        %3777 = vmatpush1.msra.mxu0 0.0
        %3778 = vmatprep.subr.mxu0 0.0
        %3779 = vmatpush1.msra.mxu0 0.0
        %3780 = vmatprep.subr.mxu0 0.0
        %3781 = vmatpush1.msra.mxu0 0.0
        %3782 = vmatprep.subr.mxu0 0.0
        %3783 = vmatpush1.msra.mxu0 0.0
        %3784 = vmatprep.subr.mxu0 0.0
        %3785 = vmatpush1.msra.mxu0 0.0
        %3786 = vmatprep.subr.mxu0 0.0
        %3787 = vmatpush1.msra.mxu0 0.0
        %3788 = vmatprep.subr.mxu0 0.0
        %3789 = vmatpush1.msra.mxu0 %v3749
        %3790 = vmatprep.subr.mxu0 0.0
        %3791 = vmatpush1.msra.mxu0 %v3748
        %3792 = vmatprep.subr.mxu0 0.0
        %3793 = vmatpush2.msra.mxu0 0.0
        %3794 = vmatprep.subr.mxu0 0.0
        %3795 = vmatpush2.msra.mxu0 0.0
        %3796 = vmatprep.subr.mxu0 0.0
        %3797 = vmatpush2.msra.mxu0 0.0
        %3798 = vmatprep.subr.mxu0 0.0
        %3799 = vmatpush2.msra.mxu0 0.0
        %3800 = vmatprep.subr.mxu0 0.0
        %3801 = vmatpush2.msra.mxu0 0.0
        %3802 = vmatprep.subr.mxu0 0.0
        %3803 = vmatpush2.msra.mxu0 0.0
        %3804 = vmatprep.subr.mxu0 0.0
        %3805 = vmatpush2.msra.mxu0 0.0
        %3806 = vmatprep.subr.mxu0 0.0
        %3807 = vmatpush2.msra.mxu0 0.0
        %3808 = vmatprep.subr.mxu0 0.0
        %3809 = vmatpush2.msra.mxu0 0.0
        %3810 = vmatprep.subr.mxu0 0.0
        %3811 = vmatpush2.msra.mxu0 0.0
        %3812 = vmatprep.subr.mxu0 0.0
        %3813 = vmatpush2.msra.mxu0 0.0
        %3814 = vmatprep.subr.mxu0 0.0
        %3815 = vmatpush2.msra.mxu0 0.0
        %3816 = vmatprep.subr.mxu0 0.0
        %3817 = vmatpush2.msra.mxu0 0.0
        %3818 = vmatprep.subr.mxu0 0.0
        %3819 = vmatpush2.msra.mxu0 0.0
        %3820 = vmatprep.subr.mxu0 0.0
        %3821 = vmatpush2.msra.mxu0 0.0
        %3822 = vmatprep.subr.mxu0 0.0
        %3823 = vmatpush2.msra.mxu0 0.0
        %3824 = vmatprep.mubr.f32.mxu0 0.0
        %3825 = vmatmul.mubr.f32.gmra.mxu0 %v3758
        %v3826 = vpop.f32.mrf.mxu0
        %v3827 = vadd.f32 %v3755, %v3826
        %v3828 = vpop.f32.mrf.mxu0
        %3829 = vdwg.mxu0
        %v3830 = vadd.f32 %v3827, %v3334
        %v3831 = vld [vmem:[#allocation29] sm:$0xff]
        %v3832 = vld [vmem:[#allocation29 + $0x8] sm:$0xff]
        %v3833 = vld [vmem:[#allocation29 + $0x10] sm:$0xff]
        %v3834 = vld [vmem:[#allocation29 + $0x18] sm:$0xff]
        %v3835 = vld [vmem:[#allocation31] sm:$0x1]
        %v3837 = vlaneseq
        %v3838 = vshrl.u32 %v3837, 7
        %v3839 = vsub.s32 0, %v3838
        %v3840 = vrot.slane %v3835, %v3839
        %v3843 = vsel %vm2289, %v3830, 0
        %3845 = vmatprep.subr.mxu0 0.0
        %3846 = vmatpush1.msra.mxu0 0.0
        %3847 = vmatprep.subr.mxu0 0.0
        %3848 = vmatpush1.msra.mxu0 0.0
        %3849 = vmatprep.subr.mxu0 0.0
        %3850 = vmatpush1.msra.mxu0 0.0
        %3851 = vmatprep.subr.mxu0 0.0
        %3852 = vmatpush1.msra.mxu0 0.0
        %3853 = vmatprep.subr.mxu0 0.0
        %3854 = vmatpush1.msra.mxu0 0.0
        %3855 = vmatprep.subr.mxu0 0.0
        %3856 = vmatpush1.msra.mxu0 0.0
        %3857 = vmatprep.subr.mxu0 0.0
        %3858 = vmatpush1.msra.mxu0 0.0
        %3859 = vmatprep.subr.mxu0 0.0
        %3860 = vmatpush1.msra.mxu0 0.0
        %3861 = vmatprep.subr.mxu0 0.0
        %3862 = vmatpush1.msra.mxu0 0.0
        %3863 = vmatprep.subr.mxu0 0.0
        %3864 = vmatpush1.msra.mxu0 0.0
        %3865 = vmatprep.subr.mxu0 0.0
        %3866 = vmatpush1.msra.mxu0 0.0
        %3867 = vmatprep.subr.mxu0 0.0
        %3868 = vmatpush1.msra.mxu0 0.0
        %3869 = vmatprep.subr.mxu0 0.0
        %3870 = vmatpush1.msra.mxu0 %v3834
        %3871 = vmatprep.subr.mxu0 0.0
        %3872 = vmatpush1.msra.mxu0 %v3833
        %3873 = vmatprep.subr.mxu0 0.0
        %3874 = vmatpush1.msra.mxu0 %v3832
        %3875 = vmatprep.subr.mxu0 0.0
        %3876 = vmatpush1.msra.mxu0 %v3831
        %3877 = vmatprep.subr.mxu0 0.0
        %3878 = vmatpush2.msra.mxu0 0.0
        %3879 = vmatprep.subr.mxu0 0.0
        %3880 = vmatpush2.msra.mxu0 0.0
        %3881 = vmatprep.subr.mxu0 0.0
        %3882 = vmatpush2.msra.mxu0 0.0
        %3883 = vmatprep.subr.mxu0 0.0
        %3884 = vmatpush2.msra.mxu0 0.0
        %3885 = vmatprep.subr.mxu0 0.0
        %3886 = vmatpush2.msra.mxu0 0.0
        %3887 = vmatprep.subr.mxu0 0.0
        %3888 = vmatpush2.msra.mxu0 0.0
        %3889 = vmatprep.subr.mxu0 0.0
        %3890 = vmatpush2.msra.mxu0 0.0
        %3891 = vmatprep.subr.mxu0 0.0
        %3892 = vmatpush2.msra.mxu0 0.0
        %3893 = vmatprep.subr.mxu0 0.0
        %3894 = vmatpush2.msra.mxu0 0.0
        %3895 = vmatprep.subr.mxu0 0.0
        %3896 = vmatpush2.msra.mxu0 0.0
        %3897 = vmatprep.subr.mxu0 0.0
        %3898 = vmatpush2.msra.mxu0 0.0
        %3899 = vmatprep.subr.mxu0 0.0
        %3900 = vmatpush2.msra.mxu0 0.0
        %3901 = vmatprep.subr.mxu0 0.0
        %3902 = vmatpush2.msra.mxu0 0.0
        %3903 = vmatprep.subr.mxu0 0.0
        %3904 = vmatpush2.msra.mxu0 0.0
        %3905 = vmatprep.subr.mxu0 0.0
        %3906 = vmatpush2.msra.mxu0 0.0
        %3907 = vmatprep.subr.mxu0 0.0
        %3908 = vmatpush2.msra.mxu0 0.0
        %3909 = vmatprep.mubr.f32.mxu0 0.0
        %3910 = vmatmul.mubr.f32.gmra.mxu0 %v3843
        %v3911 = vpop.f32.mrf.mxu0
        %v3912 = vadd.f32 %v3840, %v3911
        %v3913 = vpop.f32.mrf.mxu0
        %3914 = vdwg.mxu0
        %v3915 = vld [vmem:[#allocation32] sm:$0x1]
        %v3916 = vld [vmem:[%s45] sm:$0xff]
        %v3917 = vld [vmem:[%s45 + $0x8] sm:$0xff]
        %v3918 = vld [vmem:[%s45 + $0x10] sm:$0xff]
        %v3919 = vld [vmem:[%s45 + $0x18] sm:$0xff]
        %v3921 = vsel %vm2289, 0.0, 0
        %3923 = vmatprep.subr.mxu0 0.0
        %3924 = vmatpush1.msra.mxu0 0.0
        %3925 = vmatprep.subr.mxu0 0.0
        %3926 = vmatpush1.msra.mxu0 0.0
        %3927 = vmatprep.subr.mxu0 0.0
        %3928 = vmatpush1.msra.mxu0 0.0
        %3929 = vmatprep.subr.mxu0 0.0
        %3930 = vmatpush1.msra.mxu0 0.0
        %3931 = vmatprep.subr.mxu0 0.0
        %3932 = vmatpush1.msra.mxu0 0.0
        %3933 = vmatprep.subr.mxu0 0.0
        %3934 = vmatpush1.msra.mxu0 0.0
        %3935 = vmatprep.subr.mxu0 0.0
        %3936 = vmatpush1.msra.mxu0 0.0
        %3937 = vmatprep.subr.mxu0 0.0
        %3938 = vmatpush1.msra.mxu0 0.0
        %3939 = vmatprep.subr.mxu0 0.0
        %3940 = vmatpush1.msra.mxu0 0.0
        %3941 = vmatprep.subr.mxu0 0.0
        %3942 = vmatpush1.msra.mxu0 0.0
        %3943 = vmatprep.subr.mxu0 0.0
        %3944 = vmatpush1.msra.mxu0 0.0
        %3945 = vmatprep.subr.mxu0 0.0
        %3946 = vmatpush1.msra.mxu0 0.0
        %3947 = vmatprep.subr.mxu0 0.0
        %3948 = vmatpush1.msra.mxu0 %v3919
        %3949 = vmatprep.subr.mxu0 0.0
        %3950 = vmatpush1.msra.mxu0 %v3918
        %3951 = vmatprep.subr.mxu0 0.0
        %3952 = vmatpush1.msra.mxu0 %v3917
        %3953 = vmatprep.subr.mxu0 0.0
        %3954 = vmatpush1.msra.mxu0 %v3916
        %3955 = vmatprep.subr.mxu0 0.0
        %3956 = vmatpush2.msra.mxu0 0.0
        %3957 = vmatprep.subr.mxu0 0.0
        %3958 = vmatpush2.msra.mxu0 0.0
        %3959 = vmatprep.subr.mxu0 0.0
        %3960 = vmatpush2.msra.mxu0 0.0
        %3961 = vmatprep.subr.mxu0 0.0
        %3962 = vmatpush2.msra.mxu0 0.0
        %3963 = vmatprep.subr.mxu0 0.0
        %3964 = vmatpush2.msra.mxu0 0.0
        %3965 = vmatprep.subr.mxu0 0.0
        %3966 = vmatpush2.msra.mxu0 0.0
        %3967 = vmatprep.subr.mxu0 0.0
        %3968 = vmatpush2.msra.mxu0 0.0
        %3969 = vmatprep.subr.mxu0 0.0
        %3970 = vmatpush2.msra.mxu0 0.0
        %3971 = vmatprep.subr.mxu0 0.0
        %3972 = vmatpush2.msra.mxu0 0.0
        %3973 = vmatprep.subr.mxu0 0.0
        %3974 = vmatpush2.msra.mxu0 0.0
        %3975 = vmatprep.subr.mxu0 0.0
        %3976 = vmatpush2.msra.mxu0 0.0
        %3977 = vmatprep.subr.mxu0 0.0
        %3978 = vmatpush2.msra.mxu0 0.0
        %3979 = vmatprep.subr.mxu0 0.0
        %3980 = vmatpush2.msra.mxu0 0.0
        %3981 = vmatprep.subr.mxu0 0.0
        %3982 = vmatpush2.msra.mxu0 0.0
        %3983 = vmatprep.subr.mxu0 0.0
        %3984 = vmatpush2.msra.mxu0 0.0
        %3985 = vmatprep.subr.mxu0 0.0
        %3986 = vmatpush2.msra.mxu0 0.0
        %3987 = vmatprep.mubr.f32.mxu0 0.0
        %3988 = vmatmul.mubr.f32.gmra.mxu0 %v3921
        %v3989 = vpop.f32.mrf.mxu0
        %v3990 = vadd.f32 %v3915, %v3989
        %v3991 = vpop.f32.mrf.mxu0
        %3992 = vdwg.mxu0
        %v3993 = vadd.f32 %v3912, %v3990
        %v3994 = vxor.u32 %v3993, 2147483648
        %v3995 = vmul.f32 %v3994, 1.442695
        %v3996 = vpow.pop %v3995
        %v3997 = vadd.f32 %v3996, 1.0
        %v3998 = vrcp.pop %v3997
        %v3999 = vmul.f32 1.0, %v3998
        %4001 = vrot.lane.b32.xlu0 %v3990, 64
        %v4002 = vpop.permute.xlu0 %4001
        %v4004 = vmul.f32 %v3999, %v4002
        %4006 = vrot.lane.b32.xlu0 %v4004, 64
        %v4007 = vpop.permute.xlu0 %4006
        %v4009 = vadd.f32 %v3912, %v4007
        %v4010 = vtanh.pop %v4009
        %v4011 = vsub.f32 1.0, %v3999
        %4013 = vrot.lane.b32.xlu0 %v4010, 96
        %v4014 = vpop.permute.xlu0 %4013
        %v4016 = vmul.f32 %v4011, %v4014
        %v4017 = vmul.f32 %v3999, 0.0
        %v4018 = vadd.f32 %v4016, %v4017
        %4020 = vrot.lane.b32.xlu0 %v4018, 96
        %v4021 = vpop.permute.xlu0 %4020
        %v4022 = vsel %vm2289, %v4021, 0
        %4024 = vmatprep.subr.mxu0 0.0
        %4025 = vmatpush1.msra.mxu0 0.0
        %4026 = vmatprep.subr.mxu0 0.0
        %4027 = vmatpush1.msra.mxu0 0.0
        %4028 = vmatprep.subr.mxu0 0.0
        %4029 = vmatpush1.msra.mxu0 0.0
        %4030 = vmatprep.subr.mxu0 0.0
        %4031 = vmatpush1.msra.mxu0 0.0
        %4032 = vmatprep.subr.mxu0 0.0
        %4033 = vmatpush1.msra.mxu0 0.0
        %4034 = vmatprep.subr.mxu0 0.0
        %4035 = vmatpush1.msra.mxu0 0.0
        %4036 = vmatprep.subr.mxu0 0.0
        %4037 = vmatpush1.msra.mxu0 0.0
        %4038 = vmatprep.subr.mxu0 0.0
        %4039 = vmatpush1.msra.mxu0 0.0
        %4040 = vmatprep.subr.mxu0 0.0
        %4041 = vmatpush1.msra.mxu0 0.0
        %4042 = vmatprep.subr.mxu0 0.0
        %4043 = vmatpush1.msra.mxu0 0.0
        %4044 = vmatprep.subr.mxu0 0.0
        %4045 = vmatpush1.msra.mxu0 0.0
        %4046 = vmatprep.subr.mxu0 0.0
        %4047 = vmatpush1.msra.mxu0 0.0
        %4048 = vmatprep.subr.mxu0 0.0
        %4049 = vmatpush1.msra.mxu0 %v3919
        %4050 = vmatprep.subr.mxu0 0.0
        %4051 = vmatpush1.msra.mxu0 %v3918
        %4052 = vmatprep.subr.mxu0 0.0
        %4053 = vmatpush1.msra.mxu0 %v3917
        %4054 = vmatprep.subr.mxu0 0.0
        %4055 = vmatpush1.msra.mxu0 %v3916
        %4056 = vmatprep.subr.mxu0 0.0
        %4057 = vmatpush2.msra.mxu0 0.0
        %4058 = vmatprep.subr.mxu0 0.0
        %4059 = vmatpush2.msra.mxu0 0.0
        %4060 = vmatprep.subr.mxu0 0.0
        %4061 = vmatpush2.msra.mxu0 0.0
        %4062 = vmatprep.subr.mxu0 0.0
        %4063 = vmatpush2.msra.mxu0 0.0
        %4064 = vmatprep.subr.mxu0 0.0
        %4065 = vmatpush2.msra.mxu0 0.0
        %4066 = vmatprep.subr.mxu0 0.0
        %4067 = vmatpush2.msra.mxu0 0.0
        %4068 = vmatprep.subr.mxu0 0.0
        %4069 = vmatpush2.msra.mxu0 0.0
        %4070 = vmatprep.subr.mxu0 0.0
        %4071 = vmatpush2.msra.mxu0 0.0
        %4072 = vmatprep.subr.mxu0 0.0
        %4073 = vmatpush2.msra.mxu0 0.0
        %4074 = vmatprep.subr.mxu0 0.0
        %4075 = vmatpush2.msra.mxu0 0.0
        %4076 = vmatprep.subr.mxu0 0.0
        %4077 = vmatpush2.msra.mxu0 0.0
        %4078 = vmatprep.subr.mxu0 0.0
        %4079 = vmatpush2.msra.mxu0 0.0
        %4080 = vmatprep.subr.mxu0 0.0
        %4081 = vmatpush2.msra.mxu0 0.0
        %4082 = vmatprep.subr.mxu0 0.0
        %4083 = vmatpush2.msra.mxu0 0.0
        %4084 = vmatprep.subr.mxu0 0.0
        %4085 = vmatpush2.msra.mxu0 0.0
        %4086 = vmatprep.subr.mxu0 0.0
        %4087 = vmatpush2.msra.mxu0 0.0
        %4088 = vmatprep.mubr.f32.mxu0 0.0
        %4089 = vmatmul.mubr.f32.gmra.mxu0 %v4022
        %v4090 = vpop.f32.mrf.mxu0
        %v4091 = vadd.f32 %v3915, %v4090
        %v4092 = vpop.f32.mrf.mxu0
        %4093 = vdwg.mxu0
        %v4095 = vrot.slane %v4091, 7
        %v4097 = vadd.f32 %v3912, %v4095
        %v4098 = vxor.u32 %v4097, 2147483648
        %v4099 = vmul.f32 %v4098, 1.442695
        %v4100 = vpow.pop %v4099
        %v4101 = vadd.f32 %v4100, 1.0
        %v4102 = vrcp.pop %v4101
        %v4103 = vmul.f32 1.0, %v4102
        %4104 = vrot.lane.b32.xlu0 %v4095, 64
        %v4105 = vpop.permute.xlu0 %4104
        %v4107 = vmul.f32 %v4103, %v4105
        %4109 = vrot.lane.b32.xlu0 %v4107, 64
        %v4110 = vpop.permute.xlu0 %4109
        %v4112 = vadd.f32 %v3912, %v4110
        %v4113 = vtanh.pop %v4112
        %v4114 = vsub.f32 1.0, %v4103
        %4116 = vrot.lane.b32.xlu0 %v4113, 96
        %v4117 = vpop.permute.xlu0 %4116
        %v4119 = vmul.f32 %v4114, %v4117
        %v4120 = vrot.slane %v4018, 7
        %v4122 = vmul.f32 %v4103, %v4120
        %v4123 = vadd.f32 %v4119, %v4122
        %v4124 = vld [vmem:[%s51] sm:$0xff]
        %v4125 = vld [vmem:[%s51 + $0x8] sm:$0xff]
        %v4126 = vld [vmem:[%s51 + $0x10] sm:$0xff]
        %v4127 = vld [vmem:[%s51 + $0x18] sm:$0xff]
        %v4128 = vld [vmem:[#allocation34] sm:$0x1]
        %v4130 = vrot.slane %v4123, 1
        %4131 = vrot.lane.b32.xlu0 %v4130, 96
        %v4132 = vpop.permute.xlu0 %4131
        %v4133 = vsel %vm2289, %v4132, 0
        %4135 = vmatprep.subr.mxu0 0.0
        %4136 = vmatpush1.msra.mxu0 0.0
        %4137 = vmatprep.subr.mxu0 0.0
        %4138 = vmatpush1.msra.mxu0 0.0
        %4139 = vmatprep.subr.mxu0 0.0
        %4140 = vmatpush1.msra.mxu0 0.0
        %4141 = vmatprep.subr.mxu0 0.0
        %4142 = vmatpush1.msra.mxu0 0.0
        %4143 = vmatprep.subr.mxu0 0.0
        %4144 = vmatpush1.msra.mxu0 0.0
        %4145 = vmatprep.subr.mxu0 0.0
        %4146 = vmatpush1.msra.mxu0 0.0
        %4147 = vmatprep.subr.mxu0 0.0
        %4148 = vmatpush1.msra.mxu0 0.0
        %4149 = vmatprep.subr.mxu0 0.0
        %4150 = vmatpush1.msra.mxu0 0.0
        %4151 = vmatprep.subr.mxu0 0.0
        %4152 = vmatpush1.msra.mxu0 0.0
        %4153 = vmatprep.subr.mxu0 0.0
        %4154 = vmatpush1.msra.mxu0 0.0
        %4155 = vmatprep.subr.mxu0 0.0
        %4156 = vmatpush1.msra.mxu0 0.0
        %4157 = vmatprep.subr.mxu0 0.0
        %4158 = vmatpush1.msra.mxu0 0.0
        %4159 = vmatprep.subr.mxu0 0.0
        %4160 = vmatpush1.msra.mxu0 %v4127
        %4161 = vmatprep.subr.mxu0 0.0
        %4162 = vmatpush1.msra.mxu0 %v4126
        %4163 = vmatprep.subr.mxu0 0.0
        %4164 = vmatpush1.msra.mxu0 %v4125
        %4165 = vmatprep.subr.mxu0 0.0
        %4166 = vmatpush1.msra.mxu0 %v4124
        %4167 = vmatprep.subr.mxu0 0.0
        %4168 = vmatpush2.msra.mxu0 0.0
        %4169 = vmatprep.subr.mxu0 0.0
        %4170 = vmatpush2.msra.mxu0 0.0
        %4171 = vmatprep.subr.mxu0 0.0
        %4172 = vmatpush2.msra.mxu0 0.0
        %4173 = vmatprep.subr.mxu0 0.0
        %4174 = vmatpush2.msra.mxu0 0.0
        %4175 = vmatprep.subr.mxu0 0.0
        %4176 = vmatpush2.msra.mxu0 0.0
        %4177 = vmatprep.subr.mxu0 0.0
        %4178 = vmatpush2.msra.mxu0 0.0
        %4179 = vmatprep.subr.mxu0 0.0
        %4180 = vmatpush2.msra.mxu0 0.0
        %4181 = vmatprep.subr.mxu0 0.0
        %4182 = vmatpush2.msra.mxu0 0.0
        %4183 = vmatprep.subr.mxu0 0.0
        %4184 = vmatpush2.msra.mxu0 0.0
        %4185 = vmatprep.subr.mxu0 0.0
        %4186 = vmatpush2.msra.mxu0 0.0
        %4187 = vmatprep.subr.mxu0 0.0
        %4188 = vmatpush2.msra.mxu0 0.0
        %4189 = vmatprep.subr.mxu0 0.0
        %4190 = vmatpush2.msra.mxu0 0.0
        %4191 = vmatprep.subr.mxu0 0.0
        %4192 = vmatpush2.msra.mxu0 0.0
        %4193 = vmatprep.subr.mxu0 0.0
        %4194 = vmatpush2.msra.mxu0 0.0
        %4195 = vmatprep.subr.mxu0 0.0
        %4196 = vmatpush2.msra.mxu0 0.0
        %4197 = vmatprep.subr.mxu0 0.0
        %4198 = vmatpush2.msra.mxu0 0.0
        %4199 = vmatprep.mubr.f32.mxu0 0.0
        %4200 = vmatmul.mubr.f32.gmra.mxu0 %v4133
        %v4201 = vpop.f32.mrf.mxu0
        %v4202 = vadd.f32 %v4128, %v4201
        %v4203 = vpop.f32.mrf.mxu0
        %4204 = vdwg.mxu0
        %v4205 = vmax.f32 %v4202, 0.0
        %v4206 = vld [vmem:[%s55] sm:$0xff]
        %v4207 = vld [vmem:[%s55 + $0x8] sm:$0xff]
        %v4208 = vld [vmem:[%s55 + $0x10] sm:$0xff]
        %v4209 = vld [vmem:[%s55 + $0x18] sm:$0xff]
        %v4210 = vld [vmem:[%s57] sm:$0x1]
        %v4212 = vsel %vm2289, %v4205, 0
        %4214 = vmatprep.subr.mxu0 0.0
        %4215 = vmatpush1.msra.mxu0 0.0
        %4216 = vmatprep.subr.mxu0 0.0
        %4217 = vmatpush1.msra.mxu0 0.0
        %4218 = vmatprep.subr.mxu0 0.0
        %4219 = vmatpush1.msra.mxu0 0.0
        %4220 = vmatprep.subr.mxu0 0.0
        %4221 = vmatpush1.msra.mxu0 0.0
        %4222 = vmatprep.subr.mxu0 0.0
        %4223 = vmatpush1.msra.mxu0 0.0
        %4224 = vmatprep.subr.mxu0 0.0
        %4225 = vmatpush1.msra.mxu0 0.0
        %4226 = vmatprep.subr.mxu0 0.0
        %4227 = vmatpush1.msra.mxu0 0.0
        %4228 = vmatprep.subr.mxu0 0.0
        %4229 = vmatpush1.msra.mxu0 0.0
        %4230 = vmatprep.subr.mxu0 0.0
        %4231 = vmatpush1.msra.mxu0 0.0
        %4232 = vmatprep.subr.mxu0 0.0
        %4233 = vmatpush1.msra.mxu0 0.0
        %4234 = vmatprep.subr.mxu0 0.0
        %4235 = vmatpush1.msra.mxu0 0.0
        %4236 = vmatprep.subr.mxu0 0.0
        %4237 = vmatpush1.msra.mxu0 0.0
        %4238 = vmatprep.subr.mxu0 0.0
        %4239 = vmatpush1.msra.mxu0 %v4209
        %4240 = vmatprep.subr.mxu0 0.0
        %4241 = vmatpush1.msra.mxu0 %v4208
        %4242 = vmatprep.subr.mxu0 0.0
        %4243 = vmatpush1.msra.mxu0 %v4207
        %4244 = vmatprep.subr.mxu0 0.0
        %4245 = vmatpush1.msra.mxu0 %v4206
        %4246 = vmatprep.subr.mxu0 0.0
        %4247 = vmatpush2.msra.mxu0 0.0
        %4248 = vmatprep.subr.mxu0 0.0
        %4249 = vmatpush2.msra.mxu0 0.0
        %4250 = vmatprep.subr.mxu0 0.0
        %4251 = vmatpush2.msra.mxu0 0.0
        %4252 = vmatprep.subr.mxu0 0.0
        %4253 = vmatpush2.msra.mxu0 0.0
        %4254 = vmatprep.subr.mxu0 0.0
        %4255 = vmatpush2.msra.mxu0 0.0
        %4256 = vmatprep.subr.mxu0 0.0
        %4257 = vmatpush2.msra.mxu0 0.0
        %4258 = vmatprep.subr.mxu0 0.0
        %4259 = vmatpush2.msra.mxu0 0.0
        %4260 = vmatprep.subr.mxu0 0.0
        %4261 = vmatpush2.msra.mxu0 0.0
        %4262 = vmatprep.subr.mxu0 0.0
        %4263 = vmatpush2.msra.mxu0 0.0
        %4264 = vmatprep.subr.mxu0 0.0
        %4265 = vmatpush2.msra.mxu0 0.0
        %4266 = vmatprep.subr.mxu0 0.0
        %4267 = vmatpush2.msra.mxu0 0.0
        %4268 = vmatprep.subr.mxu0 0.0
        %4269 = vmatpush2.msra.mxu0 0.0
        %4270 = vmatprep.subr.mxu0 0.0
        %4271 = vmatpush2.msra.mxu0 0.0
        %4272 = vmatprep.subr.mxu0 0.0
        %4273 = vmatpush2.msra.mxu0 0.0
        %4274 = vmatprep.subr.mxu0 0.0
        %4275 = vmatpush2.msra.mxu0 0.0
        %4276 = vmatprep.subr.mxu0 0.0
        %4277 = vmatpush2.msra.mxu0 0.0
        %4278 = vmatprep.mubr.f32.mxu0 0.0
        %4279 = vmatmul.mubr.f32.gmra.mxu0 %v4212
        %v4280 = vpop.f32.mrf.mxu0
        %v4281 = vadd.f32 %v4210, %v4280
        %v4282 = vpop.f32.mrf.mxu0
        %4283 = vdwg.mxu0
        %v4284 = vld [vmem:[#allocation4] sm:$0x1]
        %4286 = vset.pattern.permute.xlu0 0
        %4287 = vperm.xlu0 %4286, %v4284
        %v4288 = vpop.permute.xlu0 %4287
        %v4290 = vlaneseq
        %v4291 = vshrl.u32 %v4290, 7
        %v4292 = vsub.s32 0, %v4291
        %v4293 = vrot.slane %v4288, %v4292
        %v4294 = vmul.f32 %v4281, %v4293
        %4295 = vst [vmem:[%s1176] sm:$0x1] %v4294
        %s4296 = sand.u32 %s730, 1
        %s4297 = scalar_lea.sflag [#allocation7], %s4296
        %s4298 = sand.u32 %s730, 1
        %s4299 = scalar_lea.vmem [#allocation35], %s4298
        // Predicated region
        $region217: #{_lambda_.1} parent=139 // pred_check
          %p4300 = pneg %p740
        $region218: #{_lambda_.1} parent=139 // pred_check_branch
          %4302 = sbr.rel (%p4300) target = $region220
        $region219: #{_lambda_.1} parent=139 // pred_region
          %s4304 = ssub.s32 16, 16
          %4305 = vsyncadd %s4297, %s4304
          %s4306 = smul.addr %s87, 16
          %s4307 = scalar_lea.hbm %s61, %s4306
          %s4309 = sshll.u32 %s4299, 4
          %s4310 = int_to_ptr.vmem [resolvable:$true] %s4309
          %4312 = dma.vmem_to_hbm [thread:$0]  %s4310, 16, %s4307, %s4297
        $region220: #{_lambda_.1} parent=139 // pred_fallthru
          _
      $region140: #{_lambda_.1} parent=5 // pred_fallthru
        _
      %p4313 = scmp.le.s32.totalorder 2, %s82
      // Predicated region
      $region221: #{_lambda_.1} parent=5 // pred_check
        %p4314 = pneg %p4313
      $region222: #{_lambda_.1} parent=5 // pred_check_branch
        %4316 = sbr.rel (%p4314) target = $region224
      $region223: #{_lambda_.1} parent=5 // pred_region
        %s4317 = ssub.s32 %s82, 2
        // Predicated region
        $region225: #{_lambda_.1} parent=223 // pred_check
          %p4318 = pneg %p746
        $region226: #{_lambda_.1} parent=223 // pred_check_branch
          %4320 = sbr.rel (%p4318) target = $region228
        $region227: #{_lambda_.1} parent=223 // pred_region
          %s4321 = sand.u32 %s731, 1
          %s4322 = scalar_lea.sflag [#allocation7], %s4321
          %s4323 = sand.u32 %s731, 1
          %s4324 = scalar_lea.vmem [#allocation35], %s4323
          %4325 = dma.done %s4322, 16
        $region228: #{_lambda_.1} parent=223 // pred_fallthru
          _
      $region224: #{_lambda_.1} parent=5 // pred_fallthru
        _
    $region6: #{_lambda_.1} parent=1 // loop_footer
      %s86 = sadd.s32 1, %s82
    $region7: #{_lambda_.1} parent=1 // loop_footer_branch
      %81 = sbr.rel target = $region3
    $region8: #{_lambda_.1} parent=1 // loop_exit
      _
    %4326 = vsyncpa [#allocation6], 1
    %s4327 = scalar_lea.sflag [#allocation6], 1
    %4328 = vsyncpa %s4327, 1
    %4329 = vsyncpa [#allocation9], 1
    %4330 = vsyncpa [#allocation12], 1
    %4331 = vsyncpa [#allocation15], 1
    %4332 = vsyncpa [#allocation18], 1
    %4333 = vsyncpa [#allocation21], 1
    %4334 = vsyncpa [#allocation24], 1
    %4335 = vsyncpa [#allocation27], 1
    %4336 = vsyncpa [#allocation30], 1
    %4337 = vsyncpa [#allocation33], 1
    %4338 = vsyncpa [#allocation7], 1
    %s4339 = scalar_lea.sflag [#allocation7], 1
    %4340 = vsyncpa %s4339, 1

</llo_original>
